<compile_context>
chip_gen: v6e
topology: v6e:2x2x1
jax: 0.10.0
libtpu: 0.0.40
codegen_flags: <defaults>
</compile_context>

<pallas_src>
import jax
import jax.numpy as jnp
from jax.experimental import pallas as pl
from jax.experimental.pallas import tpu as pltpu

OUTPUT_NUM = 5


def _conv_pool_relu(x, w_flat, b, k):
    """Batched valid conv (stride 1) + bias via ONE im2col matmul, then
    2x2 max-pool (stride 2, floor) and relu.

    x: (Bb, H, W, Cin) f32; w_flat: (k*k*Cin, Cout) bf16; b: (1, Cout) f32.
    Returns (Bb, Hp, Wp, Cout) f32.  Runs inside the kernel.
    """
    Bb, H, W, Cin = x.shape
    Cout = w_flat.shape[-1]
    Ho, Wo = H - k + 1, W - k + 1

    # im2col: concatenate the k*k shifted windows along the channel (lane)
    # axis so the whole conv stage is a single MXU contraction with
    # K = k*k*Cin (27 / 144 / 128).  Order matches w.reshape(k*k*Cin, Cout).
    patches = jnp.concatenate(
        [x[:, kh:kh + Ho, kw:kw + Wo, :] for kh in range(k) for kw in range(k)],
        axis=-1)                                           # (Bb, Ho, Wo, k*k*Cin)
    patches = patches.reshape(Bb * Ho * Wo, k * k * Cin)
    acc = jnp.dot(patches.astype(jnp.bfloat16), w_flat,
                  preferred_element_type=jnp.float32) + b  # (Bb*Ho*Wo, Cout) f32

    # max_pool2d(kernel=2, stride=2), floor semantics; then relu (all f32/VPU).
    Hp, Wp = Ho // 2, Wo // 2
    if Ho != 2 * Hp or Wo != 2 * Wp:          # floor crop (not hit for 18x18 input)
        acc = acc.reshape(Bb, Ho, Wo, Cout)[:, :2 * Hp, :2 * Wp, :]
    y = acc.reshape(Bb * Hp, 2, Wp, 2, Cout)  # last (lane) dim unchanged
    y = jnp.maximum(y[:, 0], y[:, 1])         # pool over rows -> (Bb*Hp, Wp, 2, Cout)
    y = jnp.maximum(y[:, :, 0], y[:, :, 1])   # pool over cols -> (Bb*Hp, Wp, Cout)
    return jnp.maximum(y, 0.0).reshape(Bb, Hp, Wp, Cout)


def net_kernel(x_ref, w1_ref, b1_ref, w2_ref, b2_ref, w3_ref, b3_ref,
               fw1_ref, fb1_ref, fw2_ref, fb2_ref, out_ref):
    Bb = x_ref.shape[0]

    x = x_ref[...]                                          # (Bb, 18, 18, 3) NHWC
    x = _conv_pool_relu(x, w1_ref[...], b1_ref[...], 3)     # (Bb, 8, 8, 16)
    x = _conv_pool_relu(x, w2_ref[...], b2_ref[...], 3)     # (Bb, 3, 3, 32)
    x = _conv_pool_relu(x, w3_ref[...], b3_ref[...], 2)     # (Bb, 1, 1, 64)

    feat = x.reshape(Bb, 64)                                # x.view(B, -1)
    h = jnp.dot(feat.astype(jnp.bfloat16), fw1_ref[...],
                preferred_element_type=jnp.float32) + fb1_ref[...]
    h = jnp.maximum(h, 0.0)                                 # relu(fc1)
    # TODO(synk): F.dropout (p=0.5) is identity in eval mode; training-mode dropout not implemented.
    logits = jnp.dot(h.astype(jnp.bfloat16), fw2_ref[...],
                     preferred_element_type=jnp.float32) + fb2_ref[...]

    # log_softmax along dim=1, whole (Bb, 5) block, single dense store.
    m = jnp.max(logits, axis=-1, keepdims=True)
    lse = m + jnp.log(jnp.sum(jnp.exp(logits - m), axis=-1, keepdims=True))
    out_ref[...] = logits - lse


def net_forward(x_nhwc, params):
    """Forward pass.  Expects NHWC input (NCHW->NHWC belongs to the data pipeline)."""
    x = x_nhwc.astype(jnp.float32)
    B, H, W, C = x.shape

    # Pre-flatten conv weights to (k*k*Cin, Cout) and pre-cast all matmul
    # weights to bf16 once here (MXU-native path); biases stay f32.
    def flat_bf16(w):
        return w.reshape(-1, w.shape[-1]).astype(jnp.bfloat16)

    w1, w2, w3 = flat_bf16(params["w1"]), flat_bf16(params["w2"]), flat_bf16(params["w3"])
    fw1 = params["fw1"].astype(jnp.bfloat16)
    fw2 = params["fw2"].astype(jnp.bfloat16)
    b1, b2, b3 = params["b1"], params["b2"], params["b3"]
    fb1, fb2 = params["fb1"], params["fb2"]

    # Batch tiling: whole batch per program for small B; for larger 8-divisible
    # batches, shard over a parallel grid axis (uses both TensorCores on v7x
    # and bounds per-block VMEM).
    if B > 8 and B % 8 == 0:
        bb = 8
    else:
        bb = B

    whole = pl.BlockSpec(memory_space=pltpu.MemorySpace.VMEM)  # weights: untiled, VMEM-resident
    return pl.pallas_call(
        net_kernel,
        out_shape=jax.ShapeDtypeStruct((B, OUTPUT_NUM), jnp.float32),
        grid=(B // bb,),
        in_specs=[pl.BlockSpec((bb, H, W, C), lambda b: (b, 0, 0, 0))] + [whole] * 10,
        out_specs=pl.BlockSpec((bb, OUTPUT_NUM), lambda b: (b, 0)),
        compiler_params=pltpu.CompilerParams(dimension_semantics=("parallel",)),
    )(x, w1, b1, w2, b2, w3, b3, fw1, fb1, fw2, fb2)


def init_params(key):
    """Deterministic PyTorch-style uniform(-1/sqrt(fan_in), 1/sqrt(fan_in)) init.

    Conv weights are HWIO (kh, kw, cin, cout); Linear weights are (in, out).
    """
    ks = jax.random.split(key, 10)

    def u(k, shape, fan_in):
        bound = 1.0 / float(fan_in) ** 0.5
        return jax.random.uniform(k, shape, jnp.float32, -bound, bound)

    return dict(
        w1=u(ks[0], (3, 3, 3, 16), 3 * 3 * 3),    b1=u(ks[1], (1, 16), 3 * 3 * 3),
        w2=u(ks[2], (3, 3, 16, 32), 3 * 3 * 16),  b2=u(ks[3], (1, 32), 3 * 3 * 16),
        w3=u(ks[4], (2, 2, 32, 64), 2 * 2 * 32),  b3=u(ks[5], (1, 64), 2 * 2 * 32),
        fw1=u(ks[6], (64, 16), 64),               fb1=u(ks[7], (1, 16), 64),
        fw2=u(ks[8], (16, OUTPUT_NUM), 16),       fb2=u(ks[9], (1, OUTPUT_NUM), 16),
    )


if __name__ == "__main__":
    key = jax.random.PRNGKey(0)
    pkey, xkey = jax.random.split(key)
    params = init_params(pkey)

    # NCHW input like the PyTorch module: (batch=2, channels=3, 18, 18).
    # The NCHW->NHWC permutation is done once here (host data pipeline), so the
    # kernel is the only consumer of the NHWC tensor.
    x_nchw = jax.random.normal(xkey, (2, 3, 18, 18), jnp.float32)
    x_nhwc = jnp.transpose(x_nchw, (0, 2, 3, 1))

    out = jax.block_until_ready(net_forward(x_nhwc, params))

    assert out.shape == (2, OUTPUT_NUM), out.shape
    assert bool(jnp.all(jnp.isfinite(out)))
    # rows of exp(log_softmax) must sum to 1
    assert bool(jnp.allclose(jnp.sum(jnp.exp(out), axis=-1), 1.0, atol=1e-3))
    print("KERNEL_OK")
</pallas_src>

<mosaic_0001>
module attributes {stable_mosaic.version = 11 : i64} {
  func.func @net_kernel(%arg0: i32, %arg1: memref<2x18x18x3xf32, #tpu.memory_space<vmem>>, %arg2: memref<27x16xbf16, #tpu.memory_space<vmem>>, %arg3: memref<1x16xf32, #tpu.memory_space<vmem>>, %arg4: memref<144x32xbf16, #tpu.memory_space<vmem>>, %arg5: memref<1x32xf32, #tpu.memory_space<vmem>>, %arg6: memref<128x64xbf16, #tpu.memory_space<vmem>>, %arg7: memref<1x64xf32, #tpu.memory_space<vmem>>, %arg8: memref<64x16xbf16, #tpu.memory_space<vmem>>, %arg9: memref<1x16xf32, #tpu.memory_space<vmem>>, %arg10: memref<16x5xbf16, #tpu.memory_space<vmem>>, %arg11: memref<1x5xf32, #tpu.memory_space<vmem>>, %arg12: memref<2x5xf32, #tpu.memory_space<vmem>>) attributes {dimension_semantics = [#tpu.dimension_semantics<parallel>], iteration_bounds = array<i64: 1>, scalar_prefetch = 0 : i64, scratch_operands = 0 : i64, tpu.core_type = #tpu.core_type<tc>, window_params = [{transform_indices = @transform_0, window_bounds = array<i64: 2, 18, 18, 3>}, {pipeline_mode = #tpu.pipeline_mode<synchronous>, transform_indices = @transform_1, window_bounds = array<i64: 27, 16>}, {pipeline_mode = #tpu.pipeline_mode<synchronous>, transform_indices = @transform_2, window_bounds = array<i64: 1, 16>}, {pipeline_mode = #tpu.pipeline_mode<synchronous>, transform_indices = @transform_3, window_bounds = array<i64: 144, 32>}, {pipeline_mode = #tpu.pipeline_mode<synchronous>, transform_indices = @transform_4, window_bounds = array<i64: 1, 32>}, {pipeline_mode = #tpu.pipeline_mode<synchronous>, transform_indices = @transform_5, window_bounds = array<i64: 128, 64>}, {pipeline_mode = #tpu.pipeline_mode<synchronous>, transform_indices = @transform_6, window_bounds = array<i64: 1, 64>}, {pipeline_mode = #tpu.pipeline_mode<synchronous>, transform_indices = @transform_7, window_bounds = array<i64: 64, 16>}, {pipeline_mode = #tpu.pipeline_mode<synchronous>, transform_indices = @transform_8, window_bounds = array<i64: 1, 16>}, {pipeline_mode = #tpu.pipeline_mode<synchronous>, transform_indices = @transform_9, window_bounds = array<i64: 16, 5>}, {pipeline_mode = #tpu.pipeline_mode<synchronous>, transform_indices = @transform_10, window_bounds = array<i64: 1, 5>}, {transform_indices = @transform_11, window_bounds = array<i64: 2, 5>}]} {
    %c0 = arith.constant 0 : index
    %c0_0 = arith.constant 0 : index
    %c0_1 = arith.constant 0 : index
    %c0_2 = arith.constant 0 : index
    %0 = vector.load %arg1[%c0, %c0_0, %c0_1, %c0_2] : memref<2x18x18x3xf32, #tpu.memory_space<vmem>>, vector<2x18x18x3xf32>
    %c0_3 = arith.constant 0 : index
    %c0_4 = arith.constant 0 : index
    %1 = vector.load %arg2[%c0_3, %c0_4] : memref<27x16xbf16, #tpu.memory_space<vmem>>, vector<27x16xbf16>
    %c0_5 = arith.constant 0 : index
    %c0_6 = arith.constant 0 : index
    %2 = vector.load %arg3[%c0_5, %c0_6] : memref<1x16xf32, #tpu.memory_space<vmem>>, vector<1x16xf32>
    %3 = vector.extract_strided_slice %0 {offsets = [0, 0, 0, 0], sizes = [2, 16, 16, 3], strides = [1, 1, 1, 1]} : vector<2x18x18x3xf32> to vector<2x16x16x3xf32>
    %4 = vector.extract_strided_slice %0 {offsets = [0, 0, 1, 0], sizes = [2, 16, 16, 3], strides = [1, 1, 1, 1]} : vector<2x18x18x3xf32> to vector<2x16x16x3xf32>
    %5 = vector.extract_strided_slice %0 {offsets = [0, 0, 2, 0], sizes = [2, 16, 16, 3], strides = [1, 1, 1, 1]} : vector<2x18x18x3xf32> to vector<2x16x16x3xf32>
    %6 = vector.extract_strided_slice %0 {offsets = [0, 1, 0, 0], sizes = [2, 16, 16, 3], strides = [1, 1, 1, 1]} : vector<2x18x18x3xf32> to vector<2x16x16x3xf32>
    %7 = vector.extract_strided_slice %0 {offsets = [0, 1, 1, 0], sizes = [2, 16, 16, 3], strides = [1, 1, 1, 1]} : vector<2x18x18x3xf32> to vector<2x16x16x3xf32>
    %8 = vector.extract_strided_slice %0 {offsets = [0, 1, 2, 0], sizes = [2, 16, 16, 3], strides = [1, 1, 1, 1]} : vector<2x18x18x3xf32> to vector<2x16x16x3xf32>
    %9 = vector.extract_strided_slice %0 {offsets = [0, 2, 0, 0], sizes = [2, 16, 16, 3], strides = [1, 1, 1, 1]} : vector<2x18x18x3xf32> to vector<2x16x16x3xf32>
    %10 = vector.extract_strided_slice %0 {offsets = [0, 2, 1, 0], sizes = [2, 16, 16, 3], strides = [1, 1, 1, 1]} : vector<2x18x18x3xf32> to vector<2x16x16x3xf32>
    %11 = vector.extract_strided_slice %0 {offsets = [0, 2, 2, 0], sizes = [2, 16, 16, 3], strides = [1, 1, 1, 1]} : vector<2x18x18x3xf32> to vector<2x16x16x3xf32>
    %12 = tpu.concatenate %3, %4, %5, %6, %7, %8, %9, %10, %11 in 3 : vector<2x16x16x3xf32>, vector<2x16x16x3xf32>, vector<2x16x16x3xf32>, vector<2x16x16x3xf32>, vector<2x16x16x3xf32>, vector<2x16x16x3xf32>, vector<2x16x16x3xf32>, vector<2x16x16x3xf32>, vector<2x16x16x3xf32> -> vector<2x16x16x27xf32>
    %13 = vector.shape_cast %12 : vector<2x16x16x27xf32> to vector<512x27xf32>
    %14 = arith.truncf %13 : vector<512x27xf32> to vector<512x27xbf16>
    %cst = arith.constant dense<0.000000e+00> : vector<512x16xf32>
    %15 = tpu.matmul %14, %1, %cst {dimension_numbers = #tpu.dot_dimension_numbers<[1], [0], [0], [1], [0, 0, 1, 1], [], []>} : vector<512x27xbf16>, vector<27x16xbf16>, vector<512x16xf32> -> vector<512x16xf32>
    %16 = vector.broadcast %2 : vector<1x16xf32> to vector<512x16xf32>
    %17 = arith.addf %15, %16 : vector<512x16xf32>
    %18 = vector.shape_cast %17 : vector<512x16xf32> to vector<16x2x8x2x16xf32>
    %19 = vector.extract_strided_slice %18 {offsets = [0, 0, 0, 0, 0], sizes = [16, 1, 8, 2, 16], strides = [1, 1, 1, 1, 1]} : vector<16x2x8x2x16xf32> to vector<16x1x8x2x16xf32>
    %20 = vector.shape_cast %19 : vector<16x1x8x2x16xf32> to vector<16x8x2x16xf32>
    %21 = vector.extract_strided_slice %18 {offsets = [0, 1, 0, 0, 0], sizes = [16, 1, 8, 2, 16], strides = [1, 1, 1, 1, 1]} : vector<16x2x8x2x16xf32> to vector<16x1x8x2x16xf32>
    %22 = vector.shape_cast %21 : vector<16x1x8x2x16xf32> to vector<16x8x2x16xf32>
    %23 = arith.maximumf %20, %22 : vector<16x8x2x16xf32>
    %24 = vector.extract_strided_slice %23 {offsets = [0, 0, 0, 0], sizes = [16, 8, 1, 16], strides = [1, 1, 1, 1]} : vector<16x8x2x16xf32> to vector<16x8x1x16xf32>
    %25 = vector.shape_cast %24 : vector<16x8x1x16xf32> to vector<16x8x16xf32>
    %26 = vector.extract_strided_slice %23 {offsets = [0, 0, 1, 0], sizes = [16, 8, 1, 16], strides = [1, 1, 1, 1]} : vector<16x8x2x16xf32> to vector<16x8x1x16xf32>
    %27 = vector.shape_cast %26 : vector<16x8x1x16xf32> to vector<16x8x16xf32>
    %28 = arith.maximumf %25, %27 : vector<16x8x16xf32>
    %cst_7 = arith.constant 0.000000e+00 : f32
    %29 = vector.broadcast %cst_7 : f32 to vector<16x8x16xf32>
    %30 = arith.maximumf %28, %29 : vector<16x8x16xf32>
    %31 = vector.shape_cast %30 : vector<16x8x16xf32> to vector<2x8x8x16xf32>
    %c0_8 = arith.constant 0 : index
    %c0_9 = arith.constant 0 : index
    %32 = vector.load %arg4[%c0_8, %c0_9] : memref<144x32xbf16, #tpu.memory_space<vmem>>, vector<144x32xbf16>
    %c0_10 = arith.constant 0 : index
    %c0_11 = arith.constant 0 : index
    %33 = vector.load %arg5[%c0_10, %c0_11] : memref<1x32xf32, #tpu.memory_space<vmem>>, vector<1x32xf32>
    %34 = vector.extract_strided_slice %31 {offsets = [0, 0, 0, 0], sizes = [2, 6, 6, 16], strides = [1, 1, 1, 1]} : vector<2x8x8x16xf32> to vector<2x6x6x16xf32>
    %35 = vector.extract_strided_slice %31 {offsets = [0, 0, 1, 0], sizes = [2, 6, 6, 16], strides = [1, 1, 1, 1]} : vector<2x8x8x16xf32> to vector<2x6x6x16xf32>
    %36 = vector.extract_strided_slice %31 {offsets = [0, 0, 2, 0], sizes = [2, 6, 6, 16], strides = [1, 1, 1, 1]} : vector<2x8x8x16xf32> to vector<2x6x6x16xf32>
    %37 = vector.extract_strided_slice %31 {offsets = [0, 1, 0, 0], sizes = [2, 6, 6, 16], strides = [1, 1, 1, 1]} : vector<2x8x8x16xf32> to vector<2x6x6x16xf32>
    %38 = vector.extract_strided_slice %31 {offsets = [0, 1, 1, 0], sizes = [2, 6, 6, 16], strides = [1, 1, 1, 1]} : vector<2x8x8x16xf32> to vector<2x6x6x16xf32>
    %39 = vector.extract_strided_slice %31 {offsets = [0, 1, 2, 0], sizes = [2, 6, 6, 16], strides = [1, 1, 1, 1]} : vector<2x8x8x16xf32> to vector<2x6x6x16xf32>
    %40 = vector.extract_strided_slice %31 {offsets = [0, 2, 0, 0], sizes = [2, 6, 6, 16], strides = [1, 1, 1, 1]} : vector<2x8x8x16xf32> to vector<2x6x6x16xf32>
    %41 = vector.extract_strided_slice %31 {offsets = [0, 2, 1, 0], sizes = [2, 6, 6, 16], strides = [1, 1, 1, 1]} : vector<2x8x8x16xf32> to vector<2x6x6x16xf32>
    %42 = vector.extract_strided_slice %31 {offsets = [0, 2, 2, 0], sizes = [2, 6, 6, 16], strides = [1, 1, 1, 1]} : vector<2x8x8x16xf32> to vector<2x6x6x16xf32>
    %43 = tpu.concatenate %34, %35, %36, %37, %38, %39, %40, %41, %42 in 3 : vector<2x6x6x16xf32>, vector<2x6x6x16xf32>, vector<2x6x6x16xf32>, vector<2x6x6x16xf32>, vector<2x6x6x16xf32>, vector<2x6x6x16xf32>, vector<2x6x6x16xf32>, vector<2x6x6x16xf32>, vector<2x6x6x16xf32> -> vector<2x6x6x144xf32>
    %44 = vector.shape_cast %43 : vector<2x6x6x144xf32> to vector<72x144xf32>
    %45 = arith.truncf %44 : vector<72x144xf32> to vector<72x144xbf16>
    %cst_12 = arith.constant dense<0.000000e+00> : vector<72x32xf32>
    %46 = tpu.matmul %45, %32, %cst_12 {dimension_numbers = #tpu.dot_dimension_numbers<[1], [0], [0], [1], [0, 0, 1, 1], [], []>} : vector<72x144xbf16>, vector<144x32xbf16>, vector<72x32xf32> -> vector<72x32xf32>
    %47 = vector.broadcast %33 : vector<1x32xf32> to vector<72x32xf32>
    %48 = arith.addf %46, %47 : vector<72x32xf32>
    %49 = vector.shape_cast %48 : vector<72x32xf32> to vector<6x2x3x2x32xf32>
    %50 = vector.extract_strided_slice %49 {offsets = [0, 0, 0, 0, 0], sizes = [6, 1, 3, 2, 32], strides = [1, 1, 1, 1, 1]} : vector<6x2x3x2x32xf32> to vector<6x1x3x2x32xf32>
    %51 = vector.shape_cast %50 : vector<6x1x3x2x32xf32> to vector<6x3x2x32xf32>
    %52 = vector.extract_strided_slice %49 {offsets = [0, 1, 0, 0, 0], sizes = [6, 1, 3, 2, 32], strides = [1, 1, 1, 1, 1]} : vector<6x2x3x2x32xf32> to vector<6x1x3x2x32xf32>
    %53 = vector.shape_cast %52 : vector<6x1x3x2x32xf32> to vector<6x3x2x32xf32>
    %54 = arith.maximumf %51, %53 : vector<6x3x2x32xf32>
    %55 = vector.extract_strided_slice %54 {offsets = [0, 0, 0, 0], sizes = [6, 3, 1, 32], strides = [1, 1, 1, 1]} : vector<6x3x2x32xf32> to vector<6x3x1x32xf32>
    %56 = vector.shape_cast %55 : vector<6x3x1x32xf32> to vector<6x3x32xf32>
    %57 = vector.extract_strided_slice %54 {offsets = [0, 0, 1, 0], sizes = [6, 3, 1, 32], strides = [1, 1, 1, 1]} : vector<6x3x2x32xf32> to vector<6x3x1x32xf32>
    %58 = vector.shape_cast %57 : vector<6x3x1x32xf32> to vector<6x3x32xf32>
    %59 = arith.maximumf %56, %58 : vector<6x3x32xf32>
    %cst_13 = arith.constant 0.000000e+00 : f32
    %60 = vector.broadcast %cst_13 : f32 to vector<6x3x32xf32>
    %61 = arith.maximumf %59, %60 : vector<6x3x32xf32>
    %62 = vector.shape_cast %61 : vector<6x3x32xf32> to vector<2x3x3x32xf32>
    %c0_14 = arith.constant 0 : index
    %c0_15 = arith.constant 0 : index
    %63 = vector.load %arg6[%c0_14, %c0_15] : memref<128x64xbf16, #tpu.memory_space<vmem>>, vector<128x64xbf16>
    %c0_16 = arith.constant 0 : index
    %c0_17 = arith.constant 0 : index
    %64 = vector.load %arg7[%c0_16, %c0_17] : memref<1x64xf32, #tpu.memory_space<vmem>>, vector<1x64xf32>
    %65 = vector.extract_strided_slice %62 {offsets = [0, 0, 0, 0], sizes = [2, 2, 2, 32], strides = [1, 1, 1, 1]} : vector<2x3x3x32xf32> to vector<2x2x2x32xf32>
    %66 = vector.extract_strided_slice %62 {offsets = [0, 0, 1, 0], sizes = [2, 2, 2, 32], strides = [1, 1, 1, 1]} : vector<2x3x3x32xf32> to vector<2x2x2x32xf32>
    %67 = vector.extract_strided_slice %62 {offsets = [0, 1, 0, 0], sizes = [2, 2, 2, 32], strides = [1, 1, 1, 1]} : vector<2x3x3x32xf32> to vector<2x2x2x32xf32>
    %68 = vector.extract_strided_slice %62 {offsets = [0, 1, 1, 0], sizes = [2, 2, 2, 32], strides = [1, 1, 1, 1]} : vector<2x3x3x32xf32> to vector<2x2x2x32xf32>
    %69 = tpu.concatenate %65, %66, %67, %68 in 3 : vector<2x2x2x32xf32>, vector<2x2x2x32xf32>, vector<2x2x2x32xf32>, vector<2x2x2x32xf32> -> vector<2x2x2x128xf32>
    %70 = vector.shape_cast %69 : vector<2x2x2x128xf32> to vector<8x128xf32>
    %71 = arith.truncf %70 : vector<8x128xf32> to vector<8x128xbf16>
    %cst_18 = arith.constant dense<0.000000e+00> : vector<8x64xf32>
    %72 = tpu.matmul %71, %63, %cst_18 {dimension_numbers = #tpu.dot_dimension_numbers<[1], [0], [0], [1], [0, 0, 1, 1], [], []>} : vector<8x128xbf16>, vector<128x64xbf16>, vector<8x64xf32> -> vector<8x64xf32>
    %73 = vector.broadcast %64 : vector<1x64xf32> to vector<8x64xf32>
    %74 = arith.addf %72, %73 : vector<8x64xf32>
    %75 = vector.shape_cast %74 : vector<8x64xf32> to vector<2x2x1x2x64xf32>
    %76 = vector.extract_strided_slice %75 {offsets = [0, 0, 0, 0, 0], sizes = [2, 1, 1, 2, 64], strides = [1, 1, 1, 1, 1]} : vector<2x2x1x2x64xf32> to vector<2x1x1x2x64xf32>
    %77 = vector.shape_cast %76 : vector<2x1x1x2x64xf32> to vector<2x1x2x64xf32>
    %78 = vector.extract_strided_slice %75 {offsets = [0, 1, 0, 0, 0], sizes = [2, 1, 1, 2, 64], strides = [1, 1, 1, 1, 1]} : vector<2x2x1x2x64xf32> to vector<2x1x1x2x64xf32>
    %79 = vector.shape_cast %78 : vector<2x1x1x2x64xf32> to vector<2x1x2x64xf32>
    %80 = arith.maximumf %77, %79 : vector<2x1x2x64xf32>
    %81 = vector.extract_strided_slice %80 {offsets = [0, 0, 0, 0], sizes = [2, 1, 1, 64], strides = [1, 1, 1, 1]} : vector<2x1x2x64xf32> to vector<2x1x1x64xf32>
    %82 = vector.shape_cast %81 : vector<2x1x1x64xf32> to vector<2x1x64xf32>
    %83 = vector.extract_strided_slice %80 {offsets = [0, 0, 1, 0], sizes = [2, 1, 1, 64], strides = [1, 1, 1, 1]} : vector<2x1x2x64xf32> to vector<2x1x1x64xf32>
    %84 = vector.shape_cast %83 : vector<2x1x1x64xf32> to vector<2x1x64xf32>
    %85 = arith.maximumf %82, %84 : vector<2x1x64xf32>
    %cst_19 = arith.constant 0.000000e+00 : f32
    %86 = vector.broadcast %cst_19 : f32 to vector<2x1x64xf32>
    %87 = arith.maximumf %85, %86 : vector<2x1x64xf32>
    %88 = vector.shape_cast %87 : vector<2x1x64xf32> to vector<2x1x1x64xf32>
    %89 = vector.shape_cast %88 : vector<2x1x1x64xf32> to vector<2x64xf32>
    %90 = arith.truncf %89 : vector<2x64xf32> to vector<2x64xbf16>
    %c0_20 = arith.constant 0 : index
    %c0_21 = arith.constant 0 : index
    %91 = vector.load %arg8[%c0_20, %c0_21] : memref<64x16xbf16, #tpu.memory_space<vmem>>, vector<64x16xbf16>
    %cst_22 = arith.constant dense<0.000000e+00> : vector<2x16xf32>
    %92 = tpu.matmul %90, %91, %cst_22 {dimension_numbers = #tpu.dot_dimension_numbers<[1], [0], [0], [1], [0, 0, 1, 1], [], []>} : vector<2x64xbf16>, vector<64x16xbf16>, vector<2x16xf32> -> vector<2x16xf32>
    %c0_23 = arith.constant 0 : index
    %c0_24 = arith.constant 0 : index
    %93 = vector.load %arg9[%c0_23, %c0_24] : memref<1x16xf32, #tpu.memory_space<vmem>>, vector<1x16xf32>
    %94 = vector.broadcast %93 : vector<1x16xf32> to vector<2x16xf32>
    %95 = arith.addf %92, %94 : vector<2x16xf32>
    %cst_25 = arith.constant 0.000000e+00 : f32
    %96 = vector.broadcast %cst_25 : f32 to vector<2x16xf32>
    %97 = arith.maximumf %95, %96 : vector<2x16xf32>
    %98 = arith.truncf %97 : vector<2x16xf32> to vector<2x16xbf16>
    %c0_26 = arith.constant 0 : index
    %c0_27 = arith.constant 0 : index
    %99 = vector.load %arg10[%c0_26, %c0_27] : memref<16x5xbf16, #tpu.memory_space<vmem>>, vector<16x5xbf16>
    %cst_28 = arith.constant dense<0.000000e+00> : vector<2x5xf32>
    %100 = tpu.matmul %98, %99, %cst_28 {dimension_numbers = #tpu.dot_dimension_numbers<[1], [0], [0], [1], [0, 0, 1, 1], [], []>} : vector<2x16xbf16>, vector<16x5xbf16>, vector<2x5xf32> -> vector<2x5xf32>
    %c0_29 = arith.constant 0 : index
    %c0_30 = arith.constant 0 : index
    %101 = vector.load %arg11[%c0_29, %c0_30] : memref<1x5xf32, #tpu.memory_space<vmem>>, vector<1x5xf32>
    %102 = vector.broadcast %101 : vector<1x5xf32> to vector<2x5xf32>
    %103 = arith.addf %100, %102 : vector<2x5xf32>
    %cst_31 = arith.constant dense<0xFF800000> : vector<2xf32>
    %104 = vector.multi_reduction <maximumf>, %103, %cst_31 [1] : vector<2x5xf32> to vector<2xf32>
    %105 = vector.shape_cast %104 : vector<2xf32> to vector<2x1xf32>
    %106 = vector.broadcast %105 : vector<2x1xf32> to vector<2x5xf32>
    %107 = arith.subf %103, %106 : vector<2x5xf32>
    %108 = math.exp %107 : vector<2x5xf32>
    %cst_32 = arith.constant dense<0.000000e+00> : vector<2xf32>
    %109 = vector.multi_reduction <add>, %108, %cst_32 [1] : vector<2x5xf32> to vector<2xf32>
    %110 = vector.shape_cast %109 : vector<2xf32> to vector<2x1xf32>
    %111 = math.log %110 : vector<2x1xf32>
    %112 = arith.addf %105, %111 : vector<2x1xf32>
    %113 = vector.broadcast %112 : vector<2x1xf32> to vector<2x5xf32>
    %114 = arith.subf %103, %113 : vector<2x5xf32>
    %c0_33 = arith.constant 0 : index
    %c0_34 = arith.constant 0 : index
    %115 = vector.load %arg12[%c0_33, %c0_34] : memref<2x5xf32, #tpu.memory_space<vmem>>, vector<2x5xf32>
    tpu.vector_store %arg12[%c0_33, %c0_34], %114 {strides = array<i32>} : memref<2x5xf32, #tpu.memory_space<vmem>>, vector<2x5xf32>,
    return
  }
  func.func @transform_0(%arg0: i32) -> (i32, i32, i32, i32) {
    %c0_i32 = arith.constant 0 : i32
    %c0_i32_0 = arith.constant 0 : i32
    %c0_i32_1 = arith.constant 0 : i32
    %c0_i32_2 = arith.constant 0 : i32
    return %arg0, %c0_i32, %c0_i32_0, %c0_i32_1 : i32, i32, i32, i32
  }
  func.func @transform_1(%arg0: i32) -> (i32, i32) {
    %c0_i32 = arith.constant 0 : i32
    %c0_i32_0 = arith.constant 0 : i32
    %c0_i32_1 = arith.constant 0 : i32
    return %c0_i32, %c0_i32_0 : i32, i32
  }
  func.func @transform_2(%arg0: i32) -> (i32, i32) {
    %c0_i32 = arith.constant 0 : i32
    %c0_i32_0 = arith.constant 0 : i32
    %c0_i32_1 = arith.constant 0 : i32
    return %c0_i32, %c0_i32_0 : i32, i32
  }
  func.func @transform_3(%arg0: i32) -> (i32, i32) {
    %c0_i32 = arith.constant 0 : i32
    %c0_i32_0 = arith.constant 0 : i32
    %c0_i32_1 = arith.constant 0 : i32
    return %c0_i32, %c0_i32_0 : i32, i32
  }
  func.func @transform_4(%arg0: i32) -> (i32, i32) {
    %c0_i32 = arith.constant 0 : i32
    %c0_i32_0 = arith.constant 0 : i32
    %c0_i32_1 = arith.constant 0 : i32
    return %c0_i32, %c0_i32_0 : i32, i32
  }
  func.func @transform_5(%arg0: i32) -> (i32, i32) {
    %c0_i32 = arith.constant 0 : i32
    %c0_i32_0 = arith.constant 0 : i32
    %c0_i32_1 = arith.constant 0 : i32
    return %c0_i32, %c0_i32_0 : i32, i32
  }
  func.func @transform_6(%arg0: i32) -> (i32, i32) {
    %c0_i32 = arith.constant 0 : i32
    %c0_i32_0 = arith.constant 0 : i32
    %c0_i32_1 = arith.constant 0 : i32
    return %c0_i32, %c0_i32_0 : i32, i32
  }
  func.func @transform_7(%arg0: i32) -> (i32, i32) {
    %c0_i32 = arith.constant 0 : i32
    %c0_i32_0 = arith.constant 0 : i32
    %c0_i32_1 = arith.constant 0 : i32
    return %c0_i32, %c0_i32_0 : i32, i32
  }
  func.func @transform_8(%arg0: i32) -> (i32, i32) {
    %c0_i32 = arith.constant 0 : i32
    %c0_i32_0 = arith.constant 0 : i32
    %c0_i32_1 = arith.constant 0 : i32
    return %c0_i32, %c0_i32_0 : i32, i32
  }
  func.func @transform_9(%arg0: i32) -> (i32, i32) {
    %c0_i32 = arith.constant 0 : i32
    %c0_i32_0 = arith.constant 0 : i32
    %c0_i32_1 = arith.constant 0 : i32
    return %c0_i32, %c0_i32_0 : i32, i32
  }
  func.func @transform_10(%arg0: i32) -> (i32, i32) {
    %c0_i32 = arith.constant 0 : i32
    %c0_i32_0 = arith.constant 0 : i32
    %c0_i32_1 = arith.constant 0 : i32
    return %c0_i32, %c0_i32_0 : i32, i32
  }
  func.func @transform_11(%arg0: i32) -> (i32, i32) {
    %c0_i32 = arith.constant 0 : i32
    %c0_i32_0 = arith.constant 0 : i32
    return %arg0, %c0_i32 : i32, i32
  }
}

</mosaic_0001>

<llo_original>
// kernel: tpu_custom_call.1
$region0: #{tpu_custom_call.1}
  #allocation0 [shape = 'u32[]', space=smem, size = 0x4, offset = 0x4, fixed_abs, tag = 'smem constant byte address 0x4 - core index']
  #allocation1 [shape = 'u32[144,128]{1,0:T(1,128)}', space=vmem, size = 0x12000, scoped, tag = 'internal scratch']
  %s0 = inlined_call_operand.vmem [shape: f32[2,18,18,3], index: 0, kind: input, shape index: {}]
  %s1 = inlined_call_operand.vmem [shape: bf16[27,16], index: 1, kind: input, shape index: {}]
  %s2 = inlined_call_operand.vmem [shape: f32[1,16], index: 2, kind: input, shape index: {}]
  %s3 = inlined_call_operand.vmem [shape: bf16[144,32], index: 3, kind: input, shape index: {}]
  %s4 = inlined_call_operand.vmem [shape: f32[1,32], index: 4, kind: input, shape index: {}]
  %s5 = inlined_call_operand.vmem [shape: bf16[128,64], index: 5, kind: input, shape index: {}]
  %s6 = inlined_call_operand.vmem [shape: f32[1,64], index: 6, kind: input, shape index: {}]
  %s7 = inlined_call_operand.vmem [shape: bf16[64,16], index: 7, kind: input, shape index: {}]
  %s8 = inlined_call_operand.vmem [shape: f32[1,16], index: 8, kind: input, shape index: {}]
  %s9 = inlined_call_operand.vmem [shape: bf16[16,5], index: 9, kind: input, shape index: {}]
  %s10 = inlined_call_operand.vmem [shape: f32[1,5], index: 10, kind: input, shape index: {}]
  %s11 = inlined_call_operand.hbm [shape: f32[2,5], index: 11, kind: output, shape index: {}]
  %s12 = sld [smem:[#allocation0]]
  $region54: #{tpu_custom_call.1} parent=0
    _
  %s14 = ssub.s32 1, %s12
  %s15 = scalar_select 0, %s14, %s12
  $region1: #{tpu_custom_call.1} parent=0
    #allocation2 [shape = 'u8[1024]{0}', space=vmem, size = 0x400, scoped, tag = 'output window, operand 0, single buffered']
    #allocation3 [shape = 's32[1]{0}', space=sflag, size = 0x4, scoped, tag = 'scoped memory for tpu_custom_call.1']
    %16 = vsyncpa [#allocation3], 0
    // Predicated region
    $region2: #{tpu_custom_call.1} parent=1 // pred_check
      _
    $region3: #{tpu_custom_call.1} parent=1 // pred_check_branch
      %18 = sbr.rel (0) target = $region5
    $region4: #{tpu_custom_call.1} parent=1 // pred_region
      _
    $region5: #{tpu_custom_call.1} parent=1 // pred_fallthru
      _
    // Predicated region
    $region6: #{tpu_custom_call.1} parent=1 // pred_check
      _
    $region7: #{tpu_custom_call.1} parent=1 // pred_check_branch
      %20 = sbr.rel (0) target = $region9
    $region8: #{tpu_custom_call.1} parent=1 // pred_region
      _
    $region9: #{tpu_custom_call.1} parent=1 // pred_fallthru
      _
    // Predicated region
    $region10: #{tpu_custom_call.1} parent=1 // pred_check
      _
    $region11: #{tpu_custom_call.1} parent=1 // pred_check_branch
      %22 = sbr.rel (0) target = $region13
    $region12: #{tpu_custom_call.1} parent=1 // pred_region
      _
    $region13: #{tpu_custom_call.1} parent=1 // pred_fallthru
      _
    // Predicated region
    $region14: #{tpu_custom_call.1} parent=1 // pred_check
      _
    $region15: #{tpu_custom_call.1} parent=1 // pred_check_branch
      %24 = sbr.rel (0) target = $region17
    $region16: #{tpu_custom_call.1} parent=1 // pred_region
      _
    $region17: #{tpu_custom_call.1} parent=1 // pred_fallthru
      _
    // Predicated region
    $region18: #{tpu_custom_call.1} parent=1 // pred_check
      _
    $region19: #{tpu_custom_call.1} parent=1 // pred_check_branch
      %26 = sbr.rel (0) target = $region21
    $region20: #{tpu_custom_call.1} parent=1 // pred_region
      _
    $region21: #{tpu_custom_call.1} parent=1 // pred_fallthru
      _
    // Predicated region
    $region22: #{tpu_custom_call.1} parent=1 // pred_check
      _
    $region23: #{tpu_custom_call.1} parent=1 // pred_check_branch
      %28 = sbr.rel (0) target = $region25
    $region24: #{tpu_custom_call.1} parent=1 // pred_region
      _
    $region25: #{tpu_custom_call.1} parent=1 // pred_fallthru
      _
    // Predicated region
    $region26: #{tpu_custom_call.1} parent=1 // pred_check
      _
    $region27: #{tpu_custom_call.1} parent=1 // pred_check_branch
      %30 = sbr.rel (0) target = $region29
    $region28: #{tpu_custom_call.1} parent=1 // pred_region
      _
    $region29: #{tpu_custom_call.1} parent=1 // pred_fallthru
      _
    // Predicated region
    $region30: #{tpu_custom_call.1} parent=1 // pred_check
      _
    $region31: #{tpu_custom_call.1} parent=1 // pred_check_branch
      %32 = sbr.rel (0) target = $region33
    $region32: #{tpu_custom_call.1} parent=1 // pred_region
      _
    $region33: #{tpu_custom_call.1} parent=1 // pred_fallthru
      _
    // Predicated region
    $region34: #{tpu_custom_call.1} parent=1 // pred_check
      _
    $region35: #{tpu_custom_call.1} parent=1 // pred_check_branch
      %34 = sbr.rel (0) target = $region37
    $region36: #{tpu_custom_call.1} parent=1 // pred_region
      _
    $region37: #{tpu_custom_call.1} parent=1 // pred_fallthru
      _
    // Predicated region
    $region38: #{tpu_custom_call.1} parent=1 // pred_check
      _
    $region39: #{tpu_custom_call.1} parent=1 // pred_check_branch
      %36 = sbr.rel (0) target = $region41
    $region40: #{tpu_custom_call.1} parent=1 // pred_region
      _
    $region41: #{tpu_custom_call.1} parent=1 // pred_fallthru
      _
    // Predicated region
    $region42: #{tpu_custom_call.1} parent=1 // pred_check
      _
    $region43: #{tpu_custom_call.1} parent=1 // pred_check_branch
      %38 = sbr.rel (0) target = $region45
    $region44: #{tpu_custom_call.1} parent=1 // pred_region
      _
    $region45: #{tpu_custom_call.1} parent=1 // pred_fallthru
      _
    %v40 = vld [vmem:[%s0] sm:$0xff]
    %v41 = vld [vmem:[%s0 + $0x8] sm:$0xff]
    %v42 = vld [vmem:[%s0 + $0x10] sm:$0x3]
    %v43 = vld [vmem:[%s0 + $0x18] sm:$0xff]
    %v44 = vld [vmem:[%s0 + $0x20] sm:$0xff]
    %v45 = vld [vmem:[%s0 + $0x28] sm:$0x3]
    %v46 = vld [vmem:[%s0 + $0x30] sm:$0xff]
    %v47 = vld [vmem:[%s0 + $0x38] sm:$0xff]
    %v48 = vld [vmem:[%s0 + $0x40] sm:$0x3]
    %v49 = vld [vmem:[%s0 + $0x48] sm:$0xff]
    %v50 = vld [vmem:[%s0 + $0x50] sm:$0xff]
    %v51 = vld [vmem:[%s0 + $0x58] sm:$0x3]
    %v52 = vld [vmem:[%s0 + $0x60] sm:$0xff]
    %v53 = vld [vmem:[%s0 + $0x68] sm:$0xff]
    %v54 = vld [vmem:[%s0 + $0x70] sm:$0x3]
    %v55 = vld [vmem:[%s0 + $0x78] sm:$0xff]
    %v56 = vld [vmem:[%s0 + $0x80] sm:$0xff]
    %v57 = vld [vmem:[%s0 + $0x88] sm:$0x3]
    %v58 = vld [vmem:[%s0 + $0x90] sm:$0xff]
    %v59 = vld [vmem:[%s0 + $0x98] sm:$0xff]
    %v60 = vld [vmem:[%s0 + $0xa0] sm:$0x3]
    %v61 = vld [vmem:[%s0 + $0xa8] sm:$0xff]
    %v62 = vld [vmem:[%s0 + $0xb0] sm:$0xff]
    %v63 = vld [vmem:[%s0 + $0xb8] sm:$0x3]
    %v64 = vld [vmem:[%s0 + $0xc0] sm:$0xff]
    %v65 = vld [vmem:[%s0 + $0xc8] sm:$0xff]
    %v66 = vld [vmem:[%s0 + $0xd0] sm:$0x3]
    %v67 = vld [vmem:[%s0 + $0xd8] sm:$0xff]
    %v68 = vld [vmem:[%s0 + $0xe0] sm:$0xff]
    %v69 = vld [vmem:[%s0 + $0xe8] sm:$0x3]
    %v70 = vld [vmem:[%s0 + $0xf0] sm:$0xff]
    %v71 = vld [vmem:[%s0 + $0xf8] sm:$0xff]
    %v72 = vld [vmem:[%s0 + $0x100] sm:$0x3]
    %v73 = vld [vmem:[%s0 + $0x108] sm:$0xff]
    %v74 = vld [vmem:[%s0 + $0x110] sm:$0xff]
    %v75 = vld [vmem:[%s0 + $0x118] sm:$0x3]
    %v76 = vld [vmem:[%s0 + $0x120] sm:$0xff]
    %v77 = vld [vmem:[%s0 + $0x128] sm:$0xff]
    %v78 = vld [vmem:[%s0 + $0x130] sm:$0x3]
    %v79 = vld [vmem:[%s0 + $0x138] sm:$0xff]
    %v80 = vld [vmem:[%s0 + $0x140] sm:$0xff]
    %v81 = vld [vmem:[%s0 + $0x148] sm:$0x3]
    %v82 = vld [vmem:[%s0 + $0x150] sm:$0xff]
    %v83 = vld [vmem:[%s0 + $0x158] sm:$0xff]
    %v84 = vld [vmem:[%s0 + $0x160] sm:$0x3]
    %v85 = vld [vmem:[%s0 + $0x168] sm:$0xff]
    %v86 = vld [vmem:[%s0 + $0x170] sm:$0xff]
    %v87 = vld [vmem:[%s0 + $0x178] sm:$0x3]
    %v88 = vld [vmem:[%s0 + $0x180] sm:$0xff]
    %v89 = vld [vmem:[%s0 + $0x188] sm:$0xff]
    %v90 = vld [vmem:[%s0 + $0x190] sm:$0x3]
    %v91 = vld [vmem:[%s0 + $0x198] sm:$0xff]
    %v92 = vld [vmem:[%s0 + $0x1a0] sm:$0xff]
    %v93 = vld [vmem:[%s0 + $0x1a8] sm:$0x3]
    %v94 = vld [vmem:[%s0 + $0x1b0] sm:$0xff]
    %v95 = vld [vmem:[%s0 + $0x1b8] sm:$0xff]
    %v96 = vld [vmem:[%s0 + $0x1c0] sm:$0x3]
    %v97 = vld [vmem:[%s0 + $0x1c8] sm:$0xff]
    %v98 = vld [vmem:[%s0 + $0x1d0] sm:$0xff]
    %v99 = vld [vmem:[%s0 + $0x1d8] sm:$0x3]
    %v100 = vld [vmem:[%s0 + $0x1e0] sm:$0xff]
    %v101 = vld [vmem:[%s0 + $0x1e8] sm:$0xff]
    %v102 = vld [vmem:[%s0 + $0x1f0] sm:$0x3]
    %v103 = vld [vmem:[%s0 + $0x1f8] sm:$0xff]
    %v104 = vld [vmem:[%s0 + $0x200] sm:$0xff]
    %v105 = vld [vmem:[%s0 + $0x208] sm:$0x3]
    %v106 = vld [vmem:[%s0 + $0x210] sm:$0xff]
    %v107 = vld [vmem:[%s0 + $0x218] sm:$0xff]
    %v108 = vld [vmem:[%s0 + $0x220] sm:$0x3]
    %v109 = vld [vmem:[%s0 + $0x228] sm:$0xff]
    %v110 = vld [vmem:[%s0 + $0x230] sm:$0xff]
    %v111 = vld [vmem:[%s0 + $0x238] sm:$0x3]
    %v112 = vld [vmem:[%s0 + $0x240] sm:$0xff]
    %v113 = vld [vmem:[%s0 + $0x248] sm:$0xff]
    %v114 = vld [vmem:[%s0 + $0x250] sm:$0x3]
    %v115 = vld [vmem:[%s0 + $0x258] sm:$0xff]
    %v116 = vld [vmem:[%s0 + $0x260] sm:$0xff]
    %v117 = vld [vmem:[%s0 + $0x268] sm:$0x3]
    %v118 = vld [vmem:[%s0 + $0x270] sm:$0xff]
    %v119 = vld [vmem:[%s0 + $0x278] sm:$0xff]
    %v120 = vld [vmem:[%s0 + $0x280] sm:$0x3]
    %v121 = vld [vmem:[%s0 + $0x288] sm:$0xff]
    %v122 = vld [vmem:[%s0 + $0x290] sm:$0xff]
    %v123 = vld [vmem:[%s0 + $0x298] sm:$0x3]
    %v124 = vld [vmem:[%s0 + $0x2a0] sm:$0xff]
    %v125 = vld [vmem:[%s0 + $0x2a8] sm:$0xff]
    %v126 = vld [vmem:[%s0 + $0x2b0] sm:$0x3]
    %v127 = vld [vmem:[%s0 + $0x2b8] sm:$0xff]
    %v128 = vld [vmem:[%s0 + $0x2c0] sm:$0xff]
    %v129 = vld [vmem:[%s0 + $0x2c8] sm:$0x3]
    %v130 = vld [vmem:[%s0 + $0x2d0] sm:$0xff]
    %v131 = vld [vmem:[%s0 + $0x2d8] sm:$0xff]
    %v132 = vld [vmem:[%s0 + $0x2e0] sm:$0x3]
    %v133 = vld [vmem:[%s0 + $0x2e8] sm:$0xff]
    %v134 = vld [vmem:[%s0 + $0x2f0] sm:$0xff]
    %v135 = vld [vmem:[%s0 + $0x2f8] sm:$0x3]
    %v136 = vld [vmem:[%s0 + $0x300] sm:$0xff]
    %v137 = vld [vmem:[%s0 + $0x308] sm:$0xff]
    %v138 = vld [vmem:[%s0 + $0x310] sm:$0x3]
    %v139 = vld [vmem:[%s0 + $0x318] sm:$0xff]
    %v140 = vld [vmem:[%s0 + $0x320] sm:$0xff]
    %v141 = vld [vmem:[%s0 + $0x328] sm:$0x3]
    %v142 = vld [vmem:[%s0 + $0x330] sm:$0xff]
    %v143 = vld [vmem:[%s0 + $0x338] sm:$0xff]
    %v144 = vld [vmem:[%s0 + $0x340] sm:$0x3]
    %v145 = vld [vmem:[%s0 + $0x348] sm:$0xff]
    %v146 = vld [vmem:[%s0 + $0x350] sm:$0xff]
    %v147 = vld [vmem:[%s0 + $0x358] sm:$0x3]
    %v148 = vld [vmem:[%s1] sm:$0xf]
    %v149 = vld [vmem:[%s1 + $0x4] sm:$0xf]
    %v150 = vld [vmem:[%s1 + $0x8] sm:$0xf]
    %v151 = vld [vmem:[%s1 + $0xc] sm:$0x3]
    %v152 = vld [vmem:[%s2] sm:$0x1]
    %vm249 = vcmask 1046528
    %v250 = vrot.slane %v40, 1
    %v251 = vrot.slane %v41, 1
    %v252 = vsel %vm249, %v250, %v251
    %v253 = vrot.slane %v42, 1
    %v254 = vsel %vm249, %v251, %v253
    %v255 = vrot.slane %v43, 1
    %v256 = vrot.slane %v44, 1
    %v257 = vsel %vm249, %v255, %v256
    %v258 = vrot.slane %v45, 1
    %v259 = vsel %vm249, %v256, %v258
    %v260 = vrot.slane %v46, 1
    %v261 = vrot.slane %v47, 1
    %v262 = vsel %vm249, %v260, %v261
    %v263 = vrot.slane %v48, 1
    %v264 = vsel %vm249, %v261, %v263
    %v265 = vrot.slane %v49, 1
    %v266 = vrot.slane %v50, 1
    %v267 = vsel %vm249, %v265, %v266
    %v268 = vrot.slane %v51, 1
    %v269 = vsel %vm249, %v266, %v268
    %v270 = vrot.slane %v52, 1
    %v271 = vrot.slane %v53, 1
    %v272 = vsel %vm249, %v270, %v271
    %v273 = vrot.slane %v54, 1
    %v274 = vsel %vm249, %v271, %v273
    %v275 = vrot.slane %v55, 1
    %v276 = vrot.slane %v56, 1
    %v277 = vsel %vm249, %v275, %v276
    %v278 = vrot.slane %v57, 1
    %v279 = vsel %vm249, %v276, %v278
    %v280 = vrot.slane %v58, 1
    %v281 = vrot.slane %v59, 1
    %v282 = vsel %vm249, %v280, %v281
    %v283 = vrot.slane %v60, 1
    %v284 = vsel %vm249, %v281, %v283
    %v285 = vrot.slane %v61, 1
    %v286 = vrot.slane %v62, 1
    %v287 = vsel %vm249, %v285, %v286
    %v288 = vrot.slane %v63, 1
    %v289 = vsel %vm249, %v286, %v288
    %v290 = vrot.slane %v64, 1
    %v291 = vrot.slane %v65, 1
    %v292 = vsel %vm249, %v290, %v291
    %v293 = vrot.slane %v66, 1
    %v294 = vsel %vm249, %v291, %v293
    %v295 = vrot.slane %v67, 1
    %v296 = vrot.slane %v68, 1
    %v297 = vsel %vm249, %v295, %v296
    %v298 = vrot.slane %v69, 1
    %v299 = vsel %vm249, %v296, %v298
    %v300 = vrot.slane %v70, 1
    %v301 = vrot.slane %v71, 1
    %v302 = vsel %vm249, %v300, %v301
    %v303 = vrot.slane %v72, 1
    %v304 = vsel %vm249, %v301, %v303
    %v305 = vrot.slane %v73, 1
    %v306 = vrot.slane %v74, 1
    %v307 = vsel %vm249, %v305, %v306
    %v308 = vrot.slane %v75, 1
    %v309 = vsel %vm249, %v306, %v308
    %v310 = vrot.slane %v76, 1
    %v311 = vrot.slane %v77, 1
    %v312 = vsel %vm249, %v310, %v311
    %v313 = vrot.slane %v78, 1
    %v314 = vsel %vm249, %v311, %v313
    %v315 = vrot.slane %v79, 1
    %v316 = vrot.slane %v80, 1
    %v317 = vsel %vm249, %v315, %v316
    %v318 = vrot.slane %v81, 1
    %v319 = vsel %vm249, %v316, %v318
    %v320 = vrot.slane %v82, 1
    %v321 = vrot.slane %v83, 1
    %v322 = vsel %vm249, %v320, %v321
    %v323 = vrot.slane %v84, 1
    %v324 = vsel %vm249, %v321, %v323
    %v325 = vrot.slane %v85, 1
    %v326 = vrot.slane %v86, 1
    %v327 = vsel %vm249, %v325, %v326
    %v328 = vrot.slane %v87, 1
    %v329 = vsel %vm249, %v326, %v328
    %v330 = vrot.slane %v94, 1
    %v331 = vrot.slane %v95, 1
    %v332 = vsel %vm249, %v330, %v331
    %v333 = vrot.slane %v96, 1
    %v334 = vsel %vm249, %v331, %v333
    %v335 = vrot.slane %v97, 1
    %v336 = vrot.slane %v98, 1
    %v337 = vsel %vm249, %v335, %v336
    %v338 = vrot.slane %v99, 1
    %v339 = vsel %vm249, %v336, %v338
    %v340 = vrot.slane %v100, 1
    %v341 = vrot.slane %v101, 1
    %v342 = vsel %vm249, %v340, %v341
    %v343 = vrot.slane %v102, 1
    %v344 = vsel %vm249, %v341, %v343
    %v345 = vrot.slane %v103, 1
    %v346 = vrot.slane %v104, 1
    %v347 = vsel %vm249, %v345, %v346
    %v348 = vrot.slane %v105, 1
    %v349 = vsel %vm249, %v346, %v348
    %v350 = vrot.slane %v106, 1
    %v351 = vrot.slane %v107, 1
    %v352 = vsel %vm249, %v350, %v351
    %v353 = vrot.slane %v108, 1
    %v354 = vsel %vm249, %v351, %v353
    %v355 = vrot.slane %v109, 1
    %v356 = vrot.slane %v110, 1
    %v357 = vsel %vm249, %v355, %v356
    %v358 = vrot.slane %v111, 1
    %v359 = vsel %vm249, %v356, %v358
    %v360 = vrot.slane %v112, 1
    %v361 = vrot.slane %v113, 1
    %v362 = vsel %vm249, %v360, %v361
    %v363 = vrot.slane %v114, 1
    %v364 = vsel %vm249, %v361, %v363
    %v365 = vrot.slane %v115, 1
    %v366 = vrot.slane %v116, 1
    %v367 = vsel %vm249, %v365, %v366
    %v368 = vrot.slane %v117, 1
    %v369 = vsel %vm249, %v366, %v368
    %v370 = vrot.slane %v118, 1
    %v371 = vrot.slane %v119, 1
    %v372 = vsel %vm249, %v370, %v371
    %v373 = vrot.slane %v120, 1
    %v374 = vsel %vm249, %v371, %v373
    %v375 = vrot.slane %v121, 1
    %v376 = vrot.slane %v122, 1
    %v377 = vsel %vm249, %v375, %v376
    %v378 = vrot.slane %v123, 1
    %v379 = vsel %vm249, %v376, %v378
    %v380 = vrot.slane %v124, 1
    %v381 = vrot.slane %v125, 1
    %v382 = vsel %vm249, %v380, %v381
    %v383 = vrot.slane %v126, 1
    %v384 = vsel %vm249, %v381, %v383
    %v385 = vrot.slane %v127, 1
    %v386 = vrot.slane %v128, 1
    %v387 = vsel %vm249, %v385, %v386
    %v388 = vrot.slane %v129, 1
    %v389 = vsel %vm249, %v386, %v388
    %v390 = vrot.slane %v130, 1
    %v391 = vrot.slane %v131, 1
    %v392 = vsel %vm249, %v390, %v391
    %v393 = vrot.slane %v132, 1
    %v394 = vsel %vm249, %v391, %v393
    %v395 = vrot.slane %v133, 1
    %v396 = vrot.slane %v134, 1
    %v397 = vsel %vm249, %v395, %v396
    %v398 = vrot.slane %v135, 1
    %v399 = vsel %vm249, %v396, %v398
    %v400 = vrot.slane %v136, 1
    %v401 = vrot.slane %v137, 1
    %v402 = vsel %vm249, %v400, %v401
    %v403 = vrot.slane %v138, 1
    %v404 = vsel %vm249, %v401, %v403
    %v405 = vrot.slane %v139, 1
    %v406 = vrot.slane %v140, 1
    %v407 = vsel %vm249, %v405, %v406
    %v408 = vrot.slane %v141, 1
    %v409 = vsel %vm249, %v406, %v408
    %410 = vrot.lane.b32.xlu0 %v252, 3
    %v411 = vpop.permute.xlu0 %410
    %412 = vrot.lane.b32.xlu0 %v254, 3
    %v413 = vpop.permute.xlu0 %412
    %414 = vrot.lane.b32.xlu0 %v257, 3
    %v415 = vpop.permute.xlu0 %414
    %416 = vrot.lane.b32.xlu0 %v259, 3
    %v417 = vpop.permute.xlu0 %416
    %418 = vrot.lane.b32.xlu0 %v262, 3
    %v419 = vpop.permute.xlu0 %418
    %420 = vrot.lane.b32.xlu0 %v264, 3
    %v421 = vpop.permute.xlu0 %420
    %422 = vrot.lane.b32.xlu0 %v267, 3
    %v423 = vpop.permute.xlu0 %422
    %424 = vrot.lane.b32.xlu0 %v269, 3
    %v425 = vpop.permute.xlu0 %424
    %426 = vrot.lane.b32.xlu0 %v272, 3
    %v427 = vpop.permute.xlu0 %426
    %428 = vrot.lane.b32.xlu0 %v274, 3
    %v429 = vpop.permute.xlu0 %428
    %430 = vrot.lane.b32.xlu0 %v277, 3
    %v431 = vpop.permute.xlu0 %430
    %432 = vrot.lane.b32.xlu0 %v279, 3
    %v433 = vpop.permute.xlu0 %432
    %434 = vrot.lane.b32.xlu0 %v282, 3
    %v435 = vpop.permute.xlu0 %434
    %436 = vrot.lane.b32.xlu0 %v284, 3
    %v437 = vpop.permute.xlu0 %436
    %438 = vrot.lane.b32.xlu0 %v287, 3
    %v439 = vpop.permute.xlu0 %438
    %440 = vrot.lane.b32.xlu0 %v289, 3
    %v441 = vpop.permute.xlu0 %440
    %442 = vrot.lane.b32.xlu0 %v292, 3
    %v443 = vpop.permute.xlu0 %442
    %444 = vrot.lane.b32.xlu0 %v294, 3
    %v445 = vpop.permute.xlu0 %444
    %446 = vrot.lane.b32.xlu0 %v297, 3
    %v447 = vpop.permute.xlu0 %446
    %448 = vrot.lane.b32.xlu0 %v299, 3
    %v449 = vpop.permute.xlu0 %448
    %450 = vrot.lane.b32.xlu0 %v302, 3
    %v451 = vpop.permute.xlu0 %450
    %452 = vrot.lane.b32.xlu0 %v304, 3
    %v453 = vpop.permute.xlu0 %452
    %454 = vrot.lane.b32.xlu0 %v307, 3
    %v455 = vpop.permute.xlu0 %454
    %456 = vrot.lane.b32.xlu0 %v309, 3
    %v457 = vpop.permute.xlu0 %456
    %458 = vrot.lane.b32.xlu0 %v312, 3
    %v459 = vpop.permute.xlu0 %458
    %460 = vrot.lane.b32.xlu0 %v314, 3
    %v461 = vpop.permute.xlu0 %460
    %462 = vrot.lane.b32.xlu0 %v317, 3
    %v463 = vpop.permute.xlu0 %462
    %464 = vrot.lane.b32.xlu0 %v319, 3
    %v465 = vpop.permute.xlu0 %464
    %466 = vrot.lane.b32.xlu0 %v322, 3
    %v467 = vpop.permute.xlu0 %466
    %468 = vrot.lane.b32.xlu0 %v324, 3
    %v469 = vpop.permute.xlu0 %468
    %470 = vrot.lane.b32.xlu0 %v327, 3
    %v471 = vpop.permute.xlu0 %470
    %472 = vrot.lane.b32.xlu0 %v329, 3
    %v473 = vpop.permute.xlu0 %472
    %474 = vrot.lane.b32.xlu0 %v332, 3
    %v475 = vpop.permute.xlu0 %474
    %476 = vrot.lane.b32.xlu0 %v334, 3
    %v477 = vpop.permute.xlu0 %476
    %478 = vrot.lane.b32.xlu0 %v337, 3
    %v479 = vpop.permute.xlu0 %478
    %480 = vrot.lane.b32.xlu0 %v339, 3
    %v481 = vpop.permute.xlu0 %480
    %482 = vrot.lane.b32.xlu0 %v342, 3
    %v483 = vpop.permute.xlu0 %482
    %484 = vrot.lane.b32.xlu0 %v344, 3
    %v485 = vpop.permute.xlu0 %484
    %486 = vrot.lane.b32.xlu0 %v347, 3
    %v487 = vpop.permute.xlu0 %486
    %488 = vrot.lane.b32.xlu0 %v349, 3
    %v489 = vpop.permute.xlu0 %488
    %490 = vrot.lane.b32.xlu0 %v352, 3
    %v491 = vpop.permute.xlu0 %490
    %492 = vrot.lane.b32.xlu0 %v354, 3
    %v493 = vpop.permute.xlu0 %492
    %494 = vrot.lane.b32.xlu0 %v357, 3
    %v495 = vpop.permute.xlu0 %494
    %496 = vrot.lane.b32.xlu0 %v359, 3
    %v497 = vpop.permute.xlu0 %496
    %498 = vrot.lane.b32.xlu0 %v362, 3
    %v499 = vpop.permute.xlu0 %498
    %500 = vrot.lane.b32.xlu0 %v364, 3
    %v501 = vpop.permute.xlu0 %500
    %502 = vrot.lane.b32.xlu0 %v367, 3
    %v503 = vpop.permute.xlu0 %502
    %504 = vrot.lane.b32.xlu0 %v369, 3
    %v505 = vpop.permute.xlu0 %504
    %506 = vrot.lane.b32.xlu0 %v372, 3
    %v507 = vpop.permute.xlu0 %506
    %508 = vrot.lane.b32.xlu0 %v374, 3
    %v509 = vpop.permute.xlu0 %508
    %510 = vrot.lane.b32.xlu0 %v377, 3
    %v511 = vpop.permute.xlu0 %510
    %512 = vrot.lane.b32.xlu0 %v379, 3
    %v513 = vpop.permute.xlu0 %512
    %514 = vrot.lane.b32.xlu0 %v382, 3
    %v515 = vpop.permute.xlu0 %514
    %516 = vrot.lane.b32.xlu0 %v384, 3
    %v517 = vpop.permute.xlu0 %516
    %518 = vrot.lane.b32.xlu0 %v387, 3
    %v519 = vpop.permute.xlu0 %518
    %520 = vrot.lane.b32.xlu0 %v389, 3
    %v521 = vpop.permute.xlu0 %520
    %522 = vrot.lane.b32.xlu0 %v392, 3
    %v523 = vpop.permute.xlu0 %522
    %524 = vrot.lane.b32.xlu0 %v394, 3
    %v525 = vpop.permute.xlu0 %524
    %526 = vrot.lane.b32.xlu0 %v397, 3
    %v527 = vpop.permute.xlu0 %526
    %528 = vrot.lane.b32.xlu0 %v399, 3
    %v529 = vpop.permute.xlu0 %528
    %530 = vrot.lane.b32.xlu0 %v402, 3
    %v531 = vpop.permute.xlu0 %530
    %532 = vrot.lane.b32.xlu0 %v404, 3
    %v533 = vpop.permute.xlu0 %532
    %534 = vrot.lane.b32.xlu0 %v407, 3
    %v535 = vpop.permute.xlu0 %534
    %536 = vrot.lane.b32.xlu0 %v409, 3
    %v537 = vpop.permute.xlu0 %536
    %vm602 = vcmask 1045504
    %v603 = vrot.slane %v40, 2
    %v604 = vrot.slane %v41, 2
    %v605 = vsel %vm602, %v603, %v604
    %v606 = vrot.slane %v42, 2
    %v607 = vsel %vm602, %v604, %v606
    %v608 = vrot.slane %v43, 2
    %v609 = vrot.slane %v44, 2
    %v610 = vsel %vm602, %v608, %v609
    %v611 = vrot.slane %v45, 2
    %v612 = vsel %vm602, %v609, %v611
    %v613 = vrot.slane %v46, 2
    %v614 = vrot.slane %v47, 2
    %v615 = vsel %vm602, %v613, %v614
    %v616 = vrot.slane %v48, 2
    %v617 = vsel %vm602, %v614, %v616
    %v618 = vrot.slane %v49, 2
    %v619 = vrot.slane %v50, 2
    %v620 = vsel %vm602, %v618, %v619
    %v621 = vrot.slane %v51, 2
    %v622 = vsel %vm602, %v619, %v621
    %v623 = vrot.slane %v52, 2
    %v624 = vrot.slane %v53, 2
    %v625 = vsel %vm602, %v623, %v624
    %v626 = vrot.slane %v54, 2
    %v627 = vsel %vm602, %v624, %v626
    %v628 = vrot.slane %v55, 2
    %v629 = vrot.slane %v56, 2
    %v630 = vsel %vm602, %v628, %v629
    %v631 = vrot.slane %v57, 2
    %v632 = vsel %vm602, %v629, %v631
    %v633 = vrot.slane %v58, 2
    %v634 = vrot.slane %v59, 2
    %v635 = vsel %vm602, %v633, %v634
    %v636 = vrot.slane %v60, 2
    %v637 = vsel %vm602, %v634, %v636
    %v638 = vrot.slane %v61, 2
    %v639 = vrot.slane %v62, 2
    %v640 = vsel %vm602, %v638, %v639
    %v641 = vrot.slane %v63, 2
    %v642 = vsel %vm602, %v639, %v641
    %v643 = vrot.slane %v64, 2
    %v644 = vrot.slane %v65, 2
    %v645 = vsel %vm602, %v643, %v644
    %v646 = vrot.slane %v66, 2
    %v647 = vsel %vm602, %v644, %v646
    %v648 = vrot.slane %v67, 2
    %v649 = vrot.slane %v68, 2
    %v650 = vsel %vm602, %v648, %v649
    %v651 = vrot.slane %v69, 2
    %v652 = vsel %vm602, %v649, %v651
    %v653 = vrot.slane %v70, 2
    %v654 = vrot.slane %v71, 2
    %v655 = vsel %vm602, %v653, %v654
    %v656 = vrot.slane %v72, 2
    %v657 = vsel %vm602, %v654, %v656
    %v658 = vrot.slane %v73, 2
    %v659 = vrot.slane %v74, 2
    %v660 = vsel %vm602, %v658, %v659
    %v661 = vrot.slane %v75, 2
    %v662 = vsel %vm602, %v659, %v661
    %v663 = vrot.slane %v76, 2
    %v664 = vrot.slane %v77, 2
    %v665 = vsel %vm602, %v663, %v664
    %v666 = vrot.slane %v78, 2
    %v667 = vsel %vm602, %v664, %v666
    %v668 = vrot.slane %v79, 2
    %v669 = vrot.slane %v80, 2
    %v670 = vsel %vm602, %v668, %v669
    %v671 = vrot.slane %v81, 2
    %v672 = vsel %vm602, %v669, %v671
    %v673 = vrot.slane %v82, 2
    %v674 = vrot.slane %v83, 2
    %v675 = vsel %vm602, %v673, %v674
    %v676 = vrot.slane %v84, 2
    %v677 = vsel %vm602, %v674, %v676
    %v678 = vrot.slane %v85, 2
    %v679 = vrot.slane %v86, 2
    %v680 = vsel %vm602, %v678, %v679
    %v681 = vrot.slane %v87, 2
    %v682 = vsel %vm602, %v679, %v681
    %v683 = vrot.slane %v94, 2
    %v684 = vrot.slane %v95, 2
    %v685 = vsel %vm602, %v683, %v684
    %v686 = vrot.slane %v96, 2
    %v687 = vsel %vm602, %v684, %v686
    %v688 = vrot.slane %v97, 2
    %v689 = vrot.slane %v98, 2
    %v690 = vsel %vm602, %v688, %v689
    %v691 = vrot.slane %v99, 2
    %v692 = vsel %vm602, %v689, %v691
    %v693 = vrot.slane %v100, 2
    %v694 = vrot.slane %v101, 2
    %v695 = vsel %vm602, %v693, %v694
    %v696 = vrot.slane %v102, 2
    %v697 = vsel %vm602, %v694, %v696
    %v698 = vrot.slane %v103, 2
    %v699 = vrot.slane %v104, 2
    %v700 = vsel %vm602, %v698, %v699
    %v701 = vrot.slane %v105, 2
    %v702 = vsel %vm602, %v699, %v701
    %v703 = vrot.slane %v106, 2
    %v704 = vrot.slane %v107, 2
    %v705 = vsel %vm602, %v703, %v704
    %v706 = vrot.slane %v108, 2
    %v707 = vsel %vm602, %v704, %v706
    %v708 = vrot.slane %v109, 2
    %v709 = vrot.slane %v110, 2
    %v710 = vsel %vm602, %v708, %v709
    %v711 = vrot.slane %v111, 2
    %v712 = vsel %vm602, %v709, %v711
    %v713 = vrot.slane %v112, 2
    %v714 = vrot.slane %v113, 2
    %v715 = vsel %vm602, %v713, %v714
    %v716 = vrot.slane %v114, 2
    %v717 = vsel %vm602, %v714, %v716
    %v718 = vrot.slane %v115, 2
    %v719 = vrot.slane %v116, 2
    %v720 = vsel %vm602, %v718, %v719
    %v721 = vrot.slane %v117, 2
    %v722 = vsel %vm602, %v719, %v721
    %v723 = vrot.slane %v118, 2
    %v724 = vrot.slane %v119, 2
    %v725 = vsel %vm602, %v723, %v724
    %v726 = vrot.slane %v120, 2
    %v727 = vsel %vm602, %v724, %v726
    %v728 = vrot.slane %v121, 2
    %v729 = vrot.slane %v122, 2
    %v730 = vsel %vm602, %v728, %v729
    %v731 = vrot.slane %v123, 2
    %v732 = vsel %vm602, %v729, %v731
    %v733 = vrot.slane %v124, 2
    %v734 = vrot.slane %v125, 2
    %v735 = vsel %vm602, %v733, %v734
    %v736 = vrot.slane %v126, 2
    %v737 = vsel %vm602, %v734, %v736
    %v738 = vrot.slane %v127, 2
    %v739 = vrot.slane %v128, 2
    %v740 = vsel %vm602, %v738, %v739
    %v741 = vrot.slane %v129, 2
    %v742 = vsel %vm602, %v739, %v741
    %v743 = vrot.slane %v130, 2
    %v744 = vrot.slane %v131, 2
    %v745 = vsel %vm602, %v743, %v744
    %v746 = vrot.slane %v132, 2
    %v747 = vsel %vm602, %v744, %v746
    %v748 = vrot.slane %v133, 2
    %v749 = vrot.slane %v134, 2
    %v750 = vsel %vm602, %v748, %v749
    %v751 = vrot.slane %v135, 2
    %v752 = vsel %vm602, %v749, %v751
    %v753 = vrot.slane %v136, 2
    %v754 = vrot.slane %v137, 2
    %v755 = vsel %vm602, %v753, %v754
    %v756 = vrot.slane %v138, 2
    %v757 = vsel %vm602, %v754, %v756
    %v758 = vrot.slane %v139, 2
    %v759 = vrot.slane %v140, 2
    %v760 = vsel %vm602, %v758, %v759
    %v761 = vrot.slane %v141, 2
    %v762 = vsel %vm602, %v759, %v761
    %763 = vrot.lane.b32.xlu0 %v605, 6
    %v764 = vpop.permute.xlu0 %763
    %765 = vrot.lane.b32.xlu0 %v607, 6
    %v766 = vpop.permute.xlu0 %765
    %767 = vrot.lane.b32.xlu0 %v610, 6
    %v768 = vpop.permute.xlu0 %767
    %769 = vrot.lane.b32.xlu0 %v612, 6
    %v770 = vpop.permute.xlu0 %769
    %771 = vrot.lane.b32.xlu0 %v615, 6
    %v772 = vpop.permute.xlu0 %771
    %773 = vrot.lane.b32.xlu0 %v617, 6
    %v774 = vpop.permute.xlu0 %773
    %775 = vrot.lane.b32.xlu0 %v620, 6
    %v776 = vpop.permute.xlu0 %775
    %777 = vrot.lane.b32.xlu0 %v622, 6
    %v778 = vpop.permute.xlu0 %777
    %779 = vrot.lane.b32.xlu0 %v625, 6
    %v780 = vpop.permute.xlu0 %779
    %781 = vrot.lane.b32.xlu0 %v627, 6
    %v782 = vpop.permute.xlu0 %781
    %783 = vrot.lane.b32.xlu0 %v630, 6
    %v784 = vpop.permute.xlu0 %783
    %785 = vrot.lane.b32.xlu0 %v632, 6
    %v786 = vpop.permute.xlu0 %785
    %787 = vrot.lane.b32.xlu0 %v635, 6
    %v788 = vpop.permute.xlu0 %787
    %789 = vrot.lane.b32.xlu0 %v637, 6
    %v790 = vpop.permute.xlu0 %789
    %791 = vrot.lane.b32.xlu0 %v640, 6
    %v792 = vpop.permute.xlu0 %791
    %793 = vrot.lane.b32.xlu0 %v642, 6
    %v794 = vpop.permute.xlu0 %793
    %795 = vrot.lane.b32.xlu0 %v645, 6
    %v796 = vpop.permute.xlu0 %795
    %797 = vrot.lane.b32.xlu0 %v647, 6
    %v798 = vpop.permute.xlu0 %797
    %799 = vrot.lane.b32.xlu0 %v650, 6
    %v800 = vpop.permute.xlu0 %799
    %801 = vrot.lane.b32.xlu0 %v652, 6
    %v802 = vpop.permute.xlu0 %801
    %803 = vrot.lane.b32.xlu0 %v655, 6
    %v804 = vpop.permute.xlu0 %803
    %805 = vrot.lane.b32.xlu0 %v657, 6
    %v806 = vpop.permute.xlu0 %805
    %807 = vrot.lane.b32.xlu0 %v660, 6
    %v808 = vpop.permute.xlu0 %807
    %809 = vrot.lane.b32.xlu0 %v662, 6
    %v810 = vpop.permute.xlu0 %809
    %811 = vrot.lane.b32.xlu0 %v665, 6
    %v812 = vpop.permute.xlu0 %811
    %813 = vrot.lane.b32.xlu0 %v667, 6
    %v814 = vpop.permute.xlu0 %813
    %815 = vrot.lane.b32.xlu0 %v670, 6
    %v816 = vpop.permute.xlu0 %815
    %817 = vrot.lane.b32.xlu0 %v672, 6
    %v818 = vpop.permute.xlu0 %817
    %819 = vrot.lane.b32.xlu0 %v675, 6
    %v820 = vpop.permute.xlu0 %819
    %821 = vrot.lane.b32.xlu0 %v677, 6
    %v822 = vpop.permute.xlu0 %821
    %823 = vrot.lane.b32.xlu0 %v680, 6
    %v824 = vpop.permute.xlu0 %823
    %825 = vrot.lane.b32.xlu0 %v682, 6
    %v826 = vpop.permute.xlu0 %825
    %827 = vrot.lane.b32.xlu0 %v685, 6
    %v828 = vpop.permute.xlu0 %827
    %829 = vrot.lane.b32.xlu0 %v687, 6
    %v830 = vpop.permute.xlu0 %829
    %831 = vrot.lane.b32.xlu0 %v690, 6
    %v832 = vpop.permute.xlu0 %831
    %833 = vrot.lane.b32.xlu0 %v692, 6
    %v834 = vpop.permute.xlu0 %833
    %835 = vrot.lane.b32.xlu0 %v695, 6
    %v836 = vpop.permute.xlu0 %835
    %837 = vrot.lane.b32.xlu0 %v697, 6
    %v838 = vpop.permute.xlu0 %837
    %839 = vrot.lane.b32.xlu0 %v700, 6
    %v840 = vpop.permute.xlu0 %839
    %841 = vrot.lane.b32.xlu0 %v702, 6
    %v842 = vpop.permute.xlu0 %841
    %843 = vrot.lane.b32.xlu0 %v705, 6
    %v844 = vpop.permute.xlu0 %843
    %845 = vrot.lane.b32.xlu0 %v707, 6
    %v846 = vpop.permute.xlu0 %845
    %847 = vrot.lane.b32.xlu0 %v710, 6
    %v848 = vpop.permute.xlu0 %847
    %849 = vrot.lane.b32.xlu0 %v712, 6
    %v850 = vpop.permute.xlu0 %849
    %851 = vrot.lane.b32.xlu0 %v715, 6
    %v852 = vpop.permute.xlu0 %851
    %853 = vrot.lane.b32.xlu0 %v717, 6
    %v854 = vpop.permute.xlu0 %853
    %855 = vrot.lane.b32.xlu0 %v720, 6
    %v856 = vpop.permute.xlu0 %855
    %857 = vrot.lane.b32.xlu0 %v722, 6
    %v858 = vpop.permute.xlu0 %857
    %859 = vrot.lane.b32.xlu0 %v725, 6
    %v860 = vpop.permute.xlu0 %859
    %861 = vrot.lane.b32.xlu0 %v727, 6
    %v862 = vpop.permute.xlu0 %861
    %863 = vrot.lane.b32.xlu0 %v730, 6
    %v864 = vpop.permute.xlu0 %863
    %865 = vrot.lane.b32.xlu0 %v732, 6
    %v866 = vpop.permute.xlu0 %865
    %867 = vrot.lane.b32.xlu0 %v735, 6
    %v868 = vpop.permute.xlu0 %867
    %869 = vrot.lane.b32.xlu0 %v737, 6
    %v870 = vpop.permute.xlu0 %869
    %871 = vrot.lane.b32.xlu0 %v740, 6
    %v872 = vpop.permute.xlu0 %871
    %873 = vrot.lane.b32.xlu0 %v742, 6
    %v874 = vpop.permute.xlu0 %873
    %875 = vrot.lane.b32.xlu0 %v745, 6
    %v876 = vpop.permute.xlu0 %875
    %877 = vrot.lane.b32.xlu0 %v747, 6
    %v878 = vpop.permute.xlu0 %877
    %879 = vrot.lane.b32.xlu0 %v750, 6
    %v880 = vpop.permute.xlu0 %879
    %881 = vrot.lane.b32.xlu0 %v752, 6
    %v882 = vpop.permute.xlu0 %881
    %883 = vrot.lane.b32.xlu0 %v755, 6
    %v884 = vpop.permute.xlu0 %883
    %885 = vrot.lane.b32.xlu0 %v757, 6
    %v886 = vpop.permute.xlu0 %885
    %887 = vrot.lane.b32.xlu0 %v760, 6
    %v888 = vpop.permute.xlu0 %887
    %889 = vrot.lane.b32.xlu0 %v762, 6
    %v890 = vpop.permute.xlu0 %889
    %959 = vrot.lane.b32.xlu0 %v43, 9
    %v960 = vpop.permute.xlu0 %959
    %961 = vrot.lane.b32.xlu0 %v44, 9
    %v962 = vpop.permute.xlu0 %961
    %963 = vrot.lane.b32.xlu0 %v46, 9
    %v964 = vpop.permute.xlu0 %963
    %965 = vrot.lane.b32.xlu0 %v47, 9
    %v966 = vpop.permute.xlu0 %965
    %967 = vrot.lane.b32.xlu0 %v49, 9
    %v968 = vpop.permute.xlu0 %967
    %969 = vrot.lane.b32.xlu0 %v50, 9
    %v970 = vpop.permute.xlu0 %969
    %971 = vrot.lane.b32.xlu0 %v52, 9
    %v972 = vpop.permute.xlu0 %971
    %973 = vrot.lane.b32.xlu0 %v53, 9
    %v974 = vpop.permute.xlu0 %973
    %975 = vrot.lane.b32.xlu0 %v55, 9
    %v976 = vpop.permute.xlu0 %975
    %977 = vrot.lane.b32.xlu0 %v56, 9
    %v978 = vpop.permute.xlu0 %977
    %979 = vrot.lane.b32.xlu0 %v58, 9
    %v980 = vpop.permute.xlu0 %979
    %981 = vrot.lane.b32.xlu0 %v59, 9
    %v982 = vpop.permute.xlu0 %981
    %983 = vrot.lane.b32.xlu0 %v61, 9
    %v984 = vpop.permute.xlu0 %983
    %985 = vrot.lane.b32.xlu0 %v62, 9
    %v986 = vpop.permute.xlu0 %985
    %987 = vrot.lane.b32.xlu0 %v64, 9
    %v988 = vpop.permute.xlu0 %987
    %989 = vrot.lane.b32.xlu0 %v65, 9
    %v990 = vpop.permute.xlu0 %989
    %991 = vrot.lane.b32.xlu0 %v67, 9
    %v992 = vpop.permute.xlu0 %991
    %993 = vrot.lane.b32.xlu0 %v68, 9
    %v994 = vpop.permute.xlu0 %993
    %995 = vrot.lane.b32.xlu0 %v70, 9
    %v996 = vpop.permute.xlu0 %995
    %997 = vrot.lane.b32.xlu0 %v71, 9
    %v998 = vpop.permute.xlu0 %997
    %999 = vrot.lane.b32.xlu0 %v73, 9
    %v1000 = vpop.permute.xlu0 %999
    %1001 = vrot.lane.b32.xlu0 %v74, 9
    %v1002 = vpop.permute.xlu0 %1001
    %1003 = vrot.lane.b32.xlu0 %v76, 9
    %v1004 = vpop.permute.xlu0 %1003
    %1005 = vrot.lane.b32.xlu0 %v77, 9
    %v1006 = vpop.permute.xlu0 %1005
    %1007 = vrot.lane.b32.xlu0 %v79, 9
    %v1008 = vpop.permute.xlu0 %1007
    %1009 = vrot.lane.b32.xlu0 %v80, 9
    %v1010 = vpop.permute.xlu0 %1009
    %1011 = vrot.lane.b32.xlu0 %v82, 9
    %v1012 = vpop.permute.xlu0 %1011
    %1013 = vrot.lane.b32.xlu0 %v83, 9
    %v1014 = vpop.permute.xlu0 %1013
    %1015 = vrot.lane.b32.xlu0 %v85, 9
    %v1016 = vpop.permute.xlu0 %1015
    %1017 = vrot.lane.b32.xlu0 %v86, 9
    %v1018 = vpop.permute.xlu0 %1017
    %1019 = vrot.lane.b32.xlu0 %v88, 9
    %v1020 = vpop.permute.xlu0 %1019
    %1021 = vrot.lane.b32.xlu0 %v89, 9
    %v1022 = vpop.permute.xlu0 %1021
    %1023 = vrot.lane.b32.xlu0 %v97, 9
    %v1024 = vpop.permute.xlu0 %1023
    %1025 = vrot.lane.b32.xlu0 %v98, 9
    %v1026 = vpop.permute.xlu0 %1025
    %1027 = vrot.lane.b32.xlu0 %v100, 9
    %v1028 = vpop.permute.xlu0 %1027
    %1029 = vrot.lane.b32.xlu0 %v101, 9
    %v1030 = vpop.permute.xlu0 %1029
    %1031 = vrot.lane.b32.xlu0 %v103, 9
    %v1032 = vpop.permute.xlu0 %1031
    %1033 = vrot.lane.b32.xlu0 %v104, 9
    %v1034 = vpop.permute.xlu0 %1033
    %1035 = vrot.lane.b32.xlu0 %v106, 9
    %v1036 = vpop.permute.xlu0 %1035
    %1037 = vrot.lane.b32.xlu0 %v107, 9
    %v1038 = vpop.permute.xlu0 %1037
    %1039 = vrot.lane.b32.xlu0 %v109, 9
    %v1040 = vpop.permute.xlu0 %1039
    %1041 = vrot.lane.b32.xlu0 %v110, 9
    %v1042 = vpop.permute.xlu0 %1041
    %1043 = vrot.lane.b32.xlu0 %v112, 9
    %v1044 = vpop.permute.xlu0 %1043
    %1045 = vrot.lane.b32.xlu0 %v113, 9
    %v1046 = vpop.permute.xlu0 %1045
    %1047 = vrot.lane.b32.xlu0 %v115, 9
    %v1048 = vpop.permute.xlu0 %1047
    %1049 = vrot.lane.b32.xlu0 %v116, 9
    %v1050 = vpop.permute.xlu0 %1049
    %1051 = vrot.lane.b32.xlu0 %v118, 9
    %v1052 = vpop.permute.xlu0 %1051
    %1053 = vrot.lane.b32.xlu0 %v119, 9
    %v1054 = vpop.permute.xlu0 %1053
    %1055 = vrot.lane.b32.xlu0 %v121, 9
    %v1056 = vpop.permute.xlu0 %1055
    %1057 = vrot.lane.b32.xlu0 %v122, 9
    %v1058 = vpop.permute.xlu0 %1057
    %1059 = vrot.lane.b32.xlu0 %v124, 9
    %v1060 = vpop.permute.xlu0 %1059
    %1061 = vrot.lane.b32.xlu0 %v125, 9
    %v1062 = vpop.permute.xlu0 %1061
    %1063 = vrot.lane.b32.xlu0 %v127, 9
    %v1064 = vpop.permute.xlu0 %1063
    %1065 = vrot.lane.b32.xlu0 %v128, 9
    %v1066 = vpop.permute.xlu0 %1065
    %1067 = vrot.lane.b32.xlu0 %v130, 9
    %v1068 = vpop.permute.xlu0 %1067
    %1069 = vrot.lane.b32.xlu0 %v131, 9
    %v1070 = vpop.permute.xlu0 %1069
    %1071 = vrot.lane.b32.xlu0 %v133, 9
    %v1072 = vpop.permute.xlu0 %1071
    %1073 = vrot.lane.b32.xlu0 %v134, 9
    %v1074 = vpop.permute.xlu0 %1073
    %1075 = vrot.lane.b32.xlu0 %v136, 9
    %v1076 = vpop.permute.xlu0 %1075
    %1077 = vrot.lane.b32.xlu0 %v137, 9
    %v1078 = vpop.permute.xlu0 %1077
    %1079 = vrot.lane.b32.xlu0 %v139, 9
    %v1080 = vpop.permute.xlu0 %1079
    %1081 = vrot.lane.b32.xlu0 %v140, 9
    %v1082 = vpop.permute.xlu0 %1081
    %1083 = vrot.lane.b32.xlu0 %v142, 9
    %v1084 = vpop.permute.xlu0 %1083
    %1085 = vrot.lane.b32.xlu0 %v143, 9
    %v1086 = vpop.permute.xlu0 %1085
    %v1153 = vrot.slane %v88, 1
    %v1154 = vrot.slane %v89, 1
    %v1155 = vsel %vm249, %v1153, %v1154
    %v1156 = vrot.slane %v90, 1
    %v1157 = vsel %vm249, %v1154, %v1156
    %v1158 = vrot.slane %v142, 1
    %v1159 = vrot.slane %v143, 1
    %v1160 = vsel %vm249, %v1158, %v1159
    %v1161 = vrot.slane %v144, 1
    %v1162 = vsel %vm249, %v1159, %v1161
    %1163 = vrot.lane.b32.xlu0 %v257, 12
    %v1164 = vpop.permute.xlu0 %1163
    %1165 = vrot.lane.b32.xlu0 %v259, 12
    %v1166 = vpop.permute.xlu0 %1165
    %1167 = vrot.lane.b32.xlu0 %v262, 12
    %v1168 = vpop.permute.xlu0 %1167
    %1169 = vrot.lane.b32.xlu0 %v264, 12
    %v1170 = vpop.permute.xlu0 %1169
    %1171 = vrot.lane.b32.xlu0 %v267, 12
    %v1172 = vpop.permute.xlu0 %1171
    %1173 = vrot.lane.b32.xlu0 %v269, 12
    %v1174 = vpop.permute.xlu0 %1173
    %1175 = vrot.lane.b32.xlu0 %v272, 12
    %v1176 = vpop.permute.xlu0 %1175
    %1177 = vrot.lane.b32.xlu0 %v274, 12
    %v1178 = vpop.permute.xlu0 %1177
    %1179 = vrot.lane.b32.xlu0 %v277, 12
    %v1180 = vpop.permute.xlu0 %1179
    %1181 = vrot.lane.b32.xlu0 %v279, 12
    %v1182 = vpop.permute.xlu0 %1181
    %1183 = vrot.lane.b32.xlu0 %v282, 12
    %v1184 = vpop.permute.xlu0 %1183
    %1185 = vrot.lane.b32.xlu0 %v284, 12
    %v1186 = vpop.permute.xlu0 %1185
    %1187 = vrot.lane.b32.xlu0 %v287, 12
    %v1188 = vpop.permute.xlu0 %1187
    %1189 = vrot.lane.b32.xlu0 %v289, 12
    %v1190 = vpop.permute.xlu0 %1189
    %1191 = vrot.lane.b32.xlu0 %v292, 12
    %v1192 = vpop.permute.xlu0 %1191
    %1193 = vrot.lane.b32.xlu0 %v294, 12
    %v1194 = vpop.permute.xlu0 %1193
    %1195 = vrot.lane.b32.xlu0 %v297, 12
    %v1196 = vpop.permute.xlu0 %1195
    %1197 = vrot.lane.b32.xlu0 %v299, 12
    %v1198 = vpop.permute.xlu0 %1197
    %1199 = vrot.lane.b32.xlu0 %v302, 12
    %v1200 = vpop.permute.xlu0 %1199
    %1201 = vrot.lane.b32.xlu0 %v304, 12
    %v1202 = vpop.permute.xlu0 %1201
    %1203 = vrot.lane.b32.xlu0 %v307, 12
    %v1204 = vpop.permute.xlu0 %1203
    %1205 = vrot.lane.b32.xlu0 %v309, 12
    %v1206 = vpop.permute.xlu0 %1205
    %1207 = vrot.lane.b32.xlu0 %v312, 12
    %v1208 = vpop.permute.xlu0 %1207
    %1209 = vrot.lane.b32.xlu0 %v314, 12
    %v1210 = vpop.permute.xlu0 %1209
    %1211 = vrot.lane.b32.xlu0 %v317, 12
    %v1212 = vpop.permute.xlu0 %1211
    %1213 = vrot.lane.b32.xlu0 %v319, 12
    %v1214 = vpop.permute.xlu0 %1213
    %1215 = vrot.lane.b32.xlu0 %v322, 12
    %v1216 = vpop.permute.xlu0 %1215
    %1217 = vrot.lane.b32.xlu0 %v324, 12
    %v1218 = vpop.permute.xlu0 %1217
    %1219 = vrot.lane.b32.xlu0 %v327, 12
    %v1220 = vpop.permute.xlu0 %1219
    %1221 = vrot.lane.b32.xlu0 %v329, 12
    %v1222 = vpop.permute.xlu0 %1221
    %1223 = vrot.lane.b32.xlu0 %v1155, 12
    %v1224 = vpop.permute.xlu0 %1223
    %1225 = vrot.lane.b32.xlu0 %v1157, 12
    %v1226 = vpop.permute.xlu0 %1225
    %1227 = vrot.lane.b32.xlu0 %v337, 12
    %v1228 = vpop.permute.xlu0 %1227
    %1229 = vrot.lane.b32.xlu0 %v339, 12
    %v1230 = vpop.permute.xlu0 %1229
    %1231 = vrot.lane.b32.xlu0 %v342, 12
    %v1232 = vpop.permute.xlu0 %1231
    %1233 = vrot.lane.b32.xlu0 %v344, 12
    %v1234 = vpop.permute.xlu0 %1233
    %1235 = vrot.lane.b32.xlu0 %v347, 12
    %v1236 = vpop.permute.xlu0 %1235
    %1237 = vrot.lane.b32.xlu0 %v349, 12
    %v1238 = vpop.permute.xlu0 %1237
    %1239 = vrot.lane.b32.xlu0 %v352, 12
    %v1240 = vpop.permute.xlu0 %1239
    %1241 = vrot.lane.b32.xlu0 %v354, 12
    %v1242 = vpop.permute.xlu0 %1241
    %1243 = vrot.lane.b32.xlu0 %v357, 12
    %v1244 = vpop.permute.xlu0 %1243
    %1245 = vrot.lane.b32.xlu0 %v359, 12
    %v1246 = vpop.permute.xlu0 %1245
    %1247 = vrot.lane.b32.xlu0 %v362, 12
    %v1248 = vpop.permute.xlu0 %1247
    %1249 = vrot.lane.b32.xlu0 %v364, 12
    %v1250 = vpop.permute.xlu0 %1249
    %1251 = vrot.lane.b32.xlu0 %v367, 12
    %v1252 = vpop.permute.xlu0 %1251
    %1253 = vrot.lane.b32.xlu0 %v369, 12
    %v1254 = vpop.permute.xlu0 %1253
    %1255 = vrot.lane.b32.xlu0 %v372, 12
    %v1256 = vpop.permute.xlu0 %1255
    %1257 = vrot.lane.b32.xlu0 %v374, 12
    %v1258 = vpop.permute.xlu0 %1257
    %1259 = vrot.lane.b32.xlu0 %v377, 12
    %v1260 = vpop.permute.xlu0 %1259
    %1261 = vrot.lane.b32.xlu0 %v379, 12
    %v1262 = vpop.permute.xlu0 %1261
    %1263 = vrot.lane.b32.xlu0 %v382, 12
    %v1264 = vpop.permute.xlu0 %1263
    %1265 = vrot.lane.b32.xlu0 %v384, 12
    %v1266 = vpop.permute.xlu0 %1265
    %1267 = vrot.lane.b32.xlu0 %v387, 12
    %v1268 = vpop.permute.xlu0 %1267
    %1269 = vrot.lane.b32.xlu0 %v389, 12
    %v1270 = vpop.permute.xlu0 %1269
    %1271 = vrot.lane.b32.xlu0 %v392, 12
    %v1272 = vpop.permute.xlu0 %1271
    %1273 = vrot.lane.b32.xlu0 %v394, 12
    %v1274 = vpop.permute.xlu0 %1273
    %1275 = vrot.lane.b32.xlu0 %v397, 12
    %v1276 = vpop.permute.xlu0 %1275
    %1277 = vrot.lane.b32.xlu0 %v399, 12
    %v1278 = vpop.permute.xlu0 %1277
    %1279 = vrot.lane.b32.xlu0 %v402, 12
    %v1280 = vpop.permute.xlu0 %1279
    %1281 = vrot.lane.b32.xlu0 %v404, 12
    %v1282 = vpop.permute.xlu0 %1281
    %1283 = vrot.lane.b32.xlu0 %v407, 12
    %v1284 = vpop.permute.xlu0 %1283
    %1285 = vrot.lane.b32.xlu0 %v409, 12
    %v1286 = vpop.permute.xlu0 %1285
    %1287 = vrot.lane.b32.xlu0 %v1160, 12
    %v1288 = vpop.permute.xlu0 %1287
    %1289 = vrot.lane.b32.xlu0 %v1162, 12
    %v1290 = vpop.permute.xlu0 %1289
    %v1355 = vrot.slane %v88, 2
    %v1356 = vrot.slane %v89, 2
    %v1357 = vsel %vm602, %v1355, %v1356
    %v1358 = vrot.slane %v90, 2
    %v1359 = vsel %vm602, %v1356, %v1358
    %v1360 = vrot.slane %v142, 2
    %v1361 = vrot.slane %v143, 2
    %v1362 = vsel %vm602, %v1360, %v1361
    %v1363 = vrot.slane %v144, 2
    %v1364 = vsel %vm602, %v1361, %v1363
    %1365 = vrot.lane.b32.xlu0 %v610, 15
    %v1366 = vpop.permute.xlu0 %1365
    %1367 = vrot.lane.b32.xlu0 %v612, 15
    %v1368 = vpop.permute.xlu0 %1367
    %1369 = vrot.lane.b32.xlu0 %v615, 15
    %v1370 = vpop.permute.xlu0 %1369
    %1371 = vrot.lane.b32.xlu0 %v617, 15
    %v1372 = vpop.permute.xlu0 %1371
    %1373 = vrot.lane.b32.xlu0 %v620, 15
    %v1374 = vpop.permute.xlu0 %1373
    %1375 = vrot.lane.b32.xlu0 %v622, 15
    %v1376 = vpop.permute.xlu0 %1375
    %1377 = vrot.lane.b32.xlu0 %v625, 15
    %v1378 = vpop.permute.xlu0 %1377
    %1379 = vrot.lane.b32.xlu0 %v627, 15
    %v1380 = vpop.permute.xlu0 %1379
    %1381 = vrot.lane.b32.xlu0 %v630, 15
    %v1382 = vpop.permute.xlu0 %1381
    %1383 = vrot.lane.b32.xlu0 %v632, 15
    %v1384 = vpop.permute.xlu0 %1383
    %1385 = vrot.lane.b32.xlu0 %v635, 15
    %v1386 = vpop.permute.xlu0 %1385
    %1387 = vrot.lane.b32.xlu0 %v637, 15
    %v1388 = vpop.permute.xlu0 %1387
    %1389 = vrot.lane.b32.xlu0 %v640, 15
    %v1390 = vpop.permute.xlu0 %1389
    %1391 = vrot.lane.b32.xlu0 %v642, 15
    %v1392 = vpop.permute.xlu0 %1391
    %1393 = vrot.lane.b32.xlu0 %v645, 15
    %v1394 = vpop.permute.xlu0 %1393
    %1395 = vrot.lane.b32.xlu0 %v647, 15
    %v1396 = vpop.permute.xlu0 %1395
    %1397 = vrot.lane.b32.xlu0 %v650, 15
    %v1398 = vpop.permute.xlu0 %1397
    %1399 = vrot.lane.b32.xlu0 %v652, 15
    %v1400 = vpop.permute.xlu0 %1399
    %1401 = vrot.lane.b32.xlu0 %v655, 15
    %v1402 = vpop.permute.xlu0 %1401
    %1403 = vrot.lane.b32.xlu0 %v657, 15
    %v1404 = vpop.permute.xlu0 %1403
    %1405 = vrot.lane.b32.xlu0 %v660, 15
    %v1406 = vpop.permute.xlu0 %1405
    %1407 = vrot.lane.b32.xlu0 %v662, 15
    %v1408 = vpop.permute.xlu0 %1407
    %1409 = vrot.lane.b32.xlu0 %v665, 15
    %v1410 = vpop.permute.xlu0 %1409
    %1411 = vrot.lane.b32.xlu0 %v667, 15
    %v1412 = vpop.permute.xlu0 %1411
    %1413 = vrot.lane.b32.xlu0 %v670, 15
    %v1414 = vpop.permute.xlu0 %1413
    %1415 = vrot.lane.b32.xlu0 %v672, 15
    %v1416 = vpop.permute.xlu0 %1415
    %1417 = vrot.lane.b32.xlu0 %v675, 15
    %v1418 = vpop.permute.xlu0 %1417
    %1419 = vrot.lane.b32.xlu0 %v677, 15
    %v1420 = vpop.permute.xlu0 %1419
    %1421 = vrot.lane.b32.xlu0 %v680, 15
    %v1422 = vpop.permute.xlu0 %1421
    %1423 = vrot.lane.b32.xlu0 %v682, 15
    %v1424 = vpop.permute.xlu0 %1423
    %1425 = vrot.lane.b32.xlu0 %v1357, 15
    %v1426 = vpop.permute.xlu0 %1425
    %1427 = vrot.lane.b32.xlu0 %v1359, 15
    %v1428 = vpop.permute.xlu0 %1427
    %1429 = vrot.lane.b32.xlu0 %v690, 15
    %v1430 = vpop.permute.xlu0 %1429
    %1431 = vrot.lane.b32.xlu0 %v692, 15
    %v1432 = vpop.permute.xlu0 %1431
    %1433 = vrot.lane.b32.xlu0 %v695, 15
    %v1434 = vpop.permute.xlu0 %1433
    %1435 = vrot.lane.b32.xlu0 %v697, 15
    %v1436 = vpop.permute.xlu0 %1435
    %1437 = vrot.lane.b32.xlu0 %v700, 15
    %v1438 = vpop.permute.xlu0 %1437
    %1439 = vrot.lane.b32.xlu0 %v702, 15
    %v1440 = vpop.permute.xlu0 %1439
    %1441 = vrot.lane.b32.xlu0 %v705, 15
    %v1442 = vpop.permute.xlu0 %1441
    %1443 = vrot.lane.b32.xlu0 %v707, 15
    %v1444 = vpop.permute.xlu0 %1443
    %1445 = vrot.lane.b32.xlu0 %v710, 15
    %v1446 = vpop.permute.xlu0 %1445
    %1447 = vrot.lane.b32.xlu0 %v712, 15
    %v1448 = vpop.permute.xlu0 %1447
    %1449 = vrot.lane.b32.xlu0 %v715, 15
    %v1450 = vpop.permute.xlu0 %1449
    %1451 = vrot.lane.b32.xlu0 %v717, 15
    %v1452 = vpop.permute.xlu0 %1451
    %1453 = vrot.lane.b32.xlu0 %v720, 15
    %v1454 = vpop.permute.xlu0 %1453
    %1455 = vrot.lane.b32.xlu0 %v722, 15
    %v1456 = vpop.permute.xlu0 %1455
    %1457 = vrot.lane.b32.xlu0 %v725, 15
    %v1458 = vpop.permute.xlu0 %1457
    %1459 = vrot.lane.b32.xlu0 %v727, 15
    %v1460 = vpop.permute.xlu0 %1459
    %1461 = vrot.lane.b32.xlu0 %v730, 15
    %v1462 = vpop.permute.xlu0 %1461
    %1463 = vrot.lane.b32.xlu0 %v732, 15
    %v1464 = vpop.permute.xlu0 %1463
    %1465 = vrot.lane.b32.xlu0 %v735, 15
    %v1466 = vpop.permute.xlu0 %1465
    %1467 = vrot.lane.b32.xlu0 %v737, 15
    %v1468 = vpop.permute.xlu0 %1467
    %1469 = vrot.lane.b32.xlu0 %v740, 15
    %v1470 = vpop.permute.xlu0 %1469
    %1471 = vrot.lane.b32.xlu0 %v742, 15
    %v1472 = vpop.permute.xlu0 %1471
    %1473 = vrot.lane.b32.xlu0 %v745, 15
    %v1474 = vpop.permute.xlu0 %1473
    %1475 = vrot.lane.b32.xlu0 %v747, 15
    %v1476 = vpop.permute.xlu0 %1475
    %1477 = vrot.lane.b32.xlu0 %v750, 15
    %v1478 = vpop.permute.xlu0 %1477
    %1479 = vrot.lane.b32.xlu0 %v752, 15
    %v1480 = vpop.permute.xlu0 %1479
    %1481 = vrot.lane.b32.xlu0 %v755, 15
    %v1482 = vpop.permute.xlu0 %1481
    %1483 = vrot.lane.b32.xlu0 %v757, 15
    %v1484 = vpop.permute.xlu0 %1483
    %1485 = vrot.lane.b32.xlu0 %v760, 15
    %v1486 = vpop.permute.xlu0 %1485
    %1487 = vrot.lane.b32.xlu0 %v762, 15
    %v1488 = vpop.permute.xlu0 %1487
    %1489 = vrot.lane.b32.xlu0 %v1362, 15
    %v1490 = vpop.permute.xlu0 %1489
    %1491 = vrot.lane.b32.xlu0 %v1364, 15
    %v1492 = vpop.permute.xlu0 %1491
    %1561 = vrot.lane.b32.xlu0 %v46, 18
    %v1562 = vpop.permute.xlu0 %1561
    %1563 = vrot.lane.b32.xlu0 %v47, 18
    %v1564 = vpop.permute.xlu0 %1563
    %1565 = vrot.lane.b32.xlu0 %v49, 18
    %v1566 = vpop.permute.xlu0 %1565
    %1567 = vrot.lane.b32.xlu0 %v50, 18
    %v1568 = vpop.permute.xlu0 %1567
    %1569 = vrot.lane.b32.xlu0 %v52, 18
    %v1570 = vpop.permute.xlu0 %1569
    %1571 = vrot.lane.b32.xlu0 %v53, 18
    %v1572 = vpop.permute.xlu0 %1571
    %1573 = vrot.lane.b32.xlu0 %v55, 18
    %v1574 = vpop.permute.xlu0 %1573
    %1575 = vrot.lane.b32.xlu0 %v56, 18
    %v1576 = vpop.permute.xlu0 %1575
    %1577 = vrot.lane.b32.xlu0 %v58, 18
    %v1578 = vpop.permute.xlu0 %1577
    %1579 = vrot.lane.b32.xlu0 %v59, 18
    %v1580 = vpop.permute.xlu0 %1579
    %1581 = vrot.lane.b32.xlu0 %v61, 18
    %v1582 = vpop.permute.xlu0 %1581
    %1583 = vrot.lane.b32.xlu0 %v62, 18
    %v1584 = vpop.permute.xlu0 %1583
    %1585 = vrot.lane.b32.xlu0 %v64, 18
    %v1586 = vpop.permute.xlu0 %1585
    %1587 = vrot.lane.b32.xlu0 %v65, 18
    %v1588 = vpop.permute.xlu0 %1587
    %1589 = vrot.lane.b32.xlu0 %v67, 18
    %v1590 = vpop.permute.xlu0 %1589
    %1591 = vrot.lane.b32.xlu0 %v68, 18
    %v1592 = vpop.permute.xlu0 %1591
    %1593 = vrot.lane.b32.xlu0 %v70, 18
    %v1594 = vpop.permute.xlu0 %1593
    %1595 = vrot.lane.b32.xlu0 %v71, 18
    %v1596 = vpop.permute.xlu0 %1595
    %1597 = vrot.lane.b32.xlu0 %v73, 18
    %v1598 = vpop.permute.xlu0 %1597
    %1599 = vrot.lane.b32.xlu0 %v74, 18
    %v1600 = vpop.permute.xlu0 %1599
    %1601 = vrot.lane.b32.xlu0 %v76, 18
    %v1602 = vpop.permute.xlu0 %1601
    %1603 = vrot.lane.b32.xlu0 %v77, 18
    %v1604 = vpop.permute.xlu0 %1603
    %1605 = vrot.lane.b32.xlu0 %v79, 18
    %v1606 = vpop.permute.xlu0 %1605
    %1607 = vrot.lane.b32.xlu0 %v80, 18
    %v1608 = vpop.permute.xlu0 %1607
    %1609 = vrot.lane.b32.xlu0 %v82, 18
    %v1610 = vpop.permute.xlu0 %1609
    %1611 = vrot.lane.b32.xlu0 %v83, 18
    %v1612 = vpop.permute.xlu0 %1611
    %1613 = vrot.lane.b32.xlu0 %v85, 18
    %v1614 = vpop.permute.xlu0 %1613
    %1615 = vrot.lane.b32.xlu0 %v86, 18
    %v1616 = vpop.permute.xlu0 %1615
    %1617 = vrot.lane.b32.xlu0 %v88, 18
    %v1618 = vpop.permute.xlu0 %1617
    %1619 = vrot.lane.b32.xlu0 %v89, 18
    %v1620 = vpop.permute.xlu0 %1619
    %1621 = vrot.lane.b32.xlu0 %v91, 18
    %v1622 = vpop.permute.xlu0 %1621
    %1623 = vrot.lane.b32.xlu0 %v92, 18
    %v1624 = vpop.permute.xlu0 %1623
    %1625 = vrot.lane.b32.xlu0 %v100, 18
    %v1626 = vpop.permute.xlu0 %1625
    %1627 = vrot.lane.b32.xlu0 %v101, 18
    %v1628 = vpop.permute.xlu0 %1627
    %1629 = vrot.lane.b32.xlu0 %v103, 18
    %v1630 = vpop.permute.xlu0 %1629
    %1631 = vrot.lane.b32.xlu0 %v104, 18
    %v1632 = vpop.permute.xlu0 %1631
    %1633 = vrot.lane.b32.xlu0 %v106, 18
    %v1634 = vpop.permute.xlu0 %1633
    %1635 = vrot.lane.b32.xlu0 %v107, 18
    %v1636 = vpop.permute.xlu0 %1635
    %1637 = vrot.lane.b32.xlu0 %v109, 18
    %v1638 = vpop.permute.xlu0 %1637
    %1639 = vrot.lane.b32.xlu0 %v110, 18
    %v1640 = vpop.permute.xlu0 %1639
    %1641 = vrot.lane.b32.xlu0 %v112, 18
    %v1642 = vpop.permute.xlu0 %1641
    %1643 = vrot.lane.b32.xlu0 %v113, 18
    %v1644 = vpop.permute.xlu0 %1643
    %1645 = vrot.lane.b32.xlu0 %v115, 18
    %v1646 = vpop.permute.xlu0 %1645
    %1647 = vrot.lane.b32.xlu0 %v116, 18
    %v1648 = vpop.permute.xlu0 %1647
    %1649 = vrot.lane.b32.xlu0 %v118, 18
    %v1650 = vpop.permute.xlu0 %1649
    %1651 = vrot.lane.b32.xlu0 %v119, 18
    %v1652 = vpop.permute.xlu0 %1651
    %1653 = vrot.lane.b32.xlu0 %v121, 18
    %v1654 = vpop.permute.xlu0 %1653
    %1655 = vrot.lane.b32.xlu0 %v122, 18
    %v1656 = vpop.permute.xlu0 %1655
    %1657 = vrot.lane.b32.xlu0 %v124, 18
    %v1658 = vpop.permute.xlu0 %1657
    %1659 = vrot.lane.b32.xlu0 %v125, 18
    %v1660 = vpop.permute.xlu0 %1659
    %1661 = vrot.lane.b32.xlu0 %v127, 18
    %v1662 = vpop.permute.xlu0 %1661
    %1663 = vrot.lane.b32.xlu0 %v128, 18
    %v1664 = vpop.permute.xlu0 %1663
    %1665 = vrot.lane.b32.xlu0 %v130, 18
    %v1666 = vpop.permute.xlu0 %1665
    %1667 = vrot.lane.b32.xlu0 %v131, 18
    %v1668 = vpop.permute.xlu0 %1667
    %1669 = vrot.lane.b32.xlu0 %v133, 18
    %v1670 = vpop.permute.xlu0 %1669
    %1671 = vrot.lane.b32.xlu0 %v134, 18
    %v1672 = vpop.permute.xlu0 %1671
    %1673 = vrot.lane.b32.xlu0 %v136, 18
    %v1674 = vpop.permute.xlu0 %1673
    %1675 = vrot.lane.b32.xlu0 %v137, 18
    %v1676 = vpop.permute.xlu0 %1675
    %1677 = vrot.lane.b32.xlu0 %v139, 18
    %v1678 = vpop.permute.xlu0 %1677
    %1679 = vrot.lane.b32.xlu0 %v140, 18
    %v1680 = vpop.permute.xlu0 %1679
    %1681 = vrot.lane.b32.xlu0 %v142, 18
    %v1682 = vpop.permute.xlu0 %1681
    %1683 = vrot.lane.b32.xlu0 %v143, 18
    %v1684 = vpop.permute.xlu0 %1683
    %1685 = vrot.lane.b32.xlu0 %v145, 18
    %v1686 = vpop.permute.xlu0 %1685
    %1687 = vrot.lane.b32.xlu0 %v146, 18
    %v1688 = vpop.permute.xlu0 %1687
    %v1755 = vrot.slane %v91, 1
    %v1756 = vrot.slane %v92, 1
    %v1757 = vsel %vm249, %v1755, %v1756
    %v1758 = vrot.slane %v93, 1
    %v1759 = vsel %vm249, %v1756, %v1758
    %v1760 = vrot.slane %v145, 1
    %v1761 = vrot.slane %v146, 1
    %v1762 = vsel %vm249, %v1760, %v1761
    %v1763 = vrot.slane %v147, 1
    %v1764 = vsel %vm249, %v1761, %v1763
    %1765 = vrot.lane.b32.xlu0 %v262, 21
    %v1766 = vpop.permute.xlu0 %1765
    %1767 = vrot.lane.b32.xlu0 %v264, 21
    %v1768 = vpop.permute.xlu0 %1767
    %1769 = vrot.lane.b32.xlu0 %v267, 21
    %v1770 = vpop.permute.xlu0 %1769
    %1771 = vrot.lane.b32.xlu0 %v269, 21
    %v1772 = vpop.permute.xlu0 %1771
    %1773 = vrot.lane.b32.xlu0 %v272, 21
    %v1774 = vpop.permute.xlu0 %1773
    %1775 = vrot.lane.b32.xlu0 %v274, 21
    %v1776 = vpop.permute.xlu0 %1775
    %1777 = vrot.lane.b32.xlu0 %v277, 21
    %v1778 = vpop.permute.xlu0 %1777
    %1779 = vrot.lane.b32.xlu0 %v279, 21
    %v1780 = vpop.permute.xlu0 %1779
    %1781 = vrot.lane.b32.xlu0 %v282, 21
    %v1782 = vpop.permute.xlu0 %1781
    %1783 = vrot.lane.b32.xlu0 %v284, 21
    %v1784 = vpop.permute.xlu0 %1783
    %1785 = vrot.lane.b32.xlu0 %v287, 21
    %v1786 = vpop.permute.xlu0 %1785
    %1787 = vrot.lane.b32.xlu0 %v289, 21
    %v1788 = vpop.permute.xlu0 %1787
    %1789 = vrot.lane.b32.xlu0 %v292, 21
    %v1790 = vpop.permute.xlu0 %1789
    %1791 = vrot.lane.b32.xlu0 %v294, 21
    %v1792 = vpop.permute.xlu0 %1791
    %1793 = vrot.lane.b32.xlu0 %v297, 21
    %v1794 = vpop.permute.xlu0 %1793
    %1795 = vrot.lane.b32.xlu0 %v299, 21
    %v1796 = vpop.permute.xlu0 %1795
    %1797 = vrot.lane.b32.xlu0 %v302, 21
    %v1798 = vpop.permute.xlu0 %1797
    %1799 = vrot.lane.b32.xlu0 %v304, 21
    %v1800 = vpop.permute.xlu0 %1799
    %1801 = vrot.lane.b32.xlu0 %v307, 21
    %v1802 = vpop.permute.xlu0 %1801
    %1803 = vrot.lane.b32.xlu0 %v309, 21
    %v1804 = vpop.permute.xlu0 %1803
    %1805 = vrot.lane.b32.xlu0 %v312, 21
    %v1806 = vpop.permute.xlu0 %1805
    %1807 = vrot.lane.b32.xlu0 %v314, 21
    %v1808 = vpop.permute.xlu0 %1807
    %1809 = vrot.lane.b32.xlu0 %v317, 21
    %v1810 = vpop.permute.xlu0 %1809
    %1811 = vrot.lane.b32.xlu0 %v319, 21
    %v1812 = vpop.permute.xlu0 %1811
    %1813 = vrot.lane.b32.xlu0 %v322, 21
    %v1814 = vpop.permute.xlu0 %1813
    %1815 = vrot.lane.b32.xlu0 %v324, 21
    %v1816 = vpop.permute.xlu0 %1815
    %1817 = vrot.lane.b32.xlu0 %v327, 21
    %v1818 = vpop.permute.xlu0 %1817
    %1819 = vrot.lane.b32.xlu0 %v329, 21
    %v1820 = vpop.permute.xlu0 %1819
    %1821 = vrot.lane.b32.xlu0 %v1155, 21
    %v1822 = vpop.permute.xlu0 %1821
    %1823 = vrot.lane.b32.xlu0 %v1157, 21
    %v1824 = vpop.permute.xlu0 %1823
    %1825 = vrot.lane.b32.xlu0 %v1757, 21
    %v1826 = vpop.permute.xlu0 %1825
    %1827 = vrot.lane.b32.xlu0 %v1759, 21
    %v1828 = vpop.permute.xlu0 %1827
    %1829 = vrot.lane.b32.xlu0 %v342, 21
    %v1830 = vpop.permute.xlu0 %1829
    %1831 = vrot.lane.b32.xlu0 %v344, 21
    %v1832 = vpop.permute.xlu0 %1831
    %1833 = vrot.lane.b32.xlu0 %v347, 21
    %v1834 = vpop.permute.xlu0 %1833
    %1835 = vrot.lane.b32.xlu0 %v349, 21
    %v1836 = vpop.permute.xlu0 %1835
    %1837 = vrot.lane.b32.xlu0 %v352, 21
    %v1838 = vpop.permute.xlu0 %1837
    %1839 = vrot.lane.b32.xlu0 %v354, 21
    %v1840 = vpop.permute.xlu0 %1839
    %1841 = vrot.lane.b32.xlu0 %v357, 21
    %v1842 = vpop.permute.xlu0 %1841
    %1843 = vrot.lane.b32.xlu0 %v359, 21
    %v1844 = vpop.permute.xlu0 %1843
    %1845 = vrot.lane.b32.xlu0 %v362, 21
    %v1846 = vpop.permute.xlu0 %1845
    %1847 = vrot.lane.b32.xlu0 %v364, 21
    %v1848 = vpop.permute.xlu0 %1847
    %1849 = vrot.lane.b32.xlu0 %v367, 21
    %v1850 = vpop.permute.xlu0 %1849
    %1851 = vrot.lane.b32.xlu0 %v369, 21
    %v1852 = vpop.permute.xlu0 %1851
    %1853 = vrot.lane.b32.xlu0 %v372, 21
    %v1854 = vpop.permute.xlu0 %1853
    %1855 = vrot.lane.b32.xlu0 %v374, 21
    %v1856 = vpop.permute.xlu0 %1855
    %1857 = vrot.lane.b32.xlu0 %v377, 21
    %v1858 = vpop.permute.xlu0 %1857
    %1859 = vrot.lane.b32.xlu0 %v379, 21
    %v1860 = vpop.permute.xlu0 %1859
    %1861 = vrot.lane.b32.xlu0 %v382, 21
    %v1862 = vpop.permute.xlu0 %1861
    %1863 = vrot.lane.b32.xlu0 %v384, 21
    %v1864 = vpop.permute.xlu0 %1863
    %1865 = vrot.lane.b32.xlu0 %v387, 21
    %v1866 = vpop.permute.xlu0 %1865
    %1867 = vrot.lane.b32.xlu0 %v389, 21
    %v1868 = vpop.permute.xlu0 %1867
    %1869 = vrot.lane.b32.xlu0 %v392, 21
    %v1870 = vpop.permute.xlu0 %1869
    %1871 = vrot.lane.b32.xlu0 %v394, 21
    %v1872 = vpop.permute.xlu0 %1871
    %1873 = vrot.lane.b32.xlu0 %v397, 21
    %v1874 = vpop.permute.xlu0 %1873
    %1875 = vrot.lane.b32.xlu0 %v399, 21
    %v1876 = vpop.permute.xlu0 %1875
    %1877 = vrot.lane.b32.xlu0 %v402, 21
    %v1878 = vpop.permute.xlu0 %1877
    %1879 = vrot.lane.b32.xlu0 %v404, 21
    %v1880 = vpop.permute.xlu0 %1879
    %1881 = vrot.lane.b32.xlu0 %v407, 21
    %v1882 = vpop.permute.xlu0 %1881
    %1883 = vrot.lane.b32.xlu0 %v409, 21
    %v1884 = vpop.permute.xlu0 %1883
    %1885 = vrot.lane.b32.xlu0 %v1160, 21
    %v1886 = vpop.permute.xlu0 %1885
    %1887 = vrot.lane.b32.xlu0 %v1162, 21
    %v1888 = vpop.permute.xlu0 %1887
    %1889 = vrot.lane.b32.xlu0 %v1762, 21
    %v1890 = vpop.permute.xlu0 %1889
    %1891 = vrot.lane.b32.xlu0 %v1764, 21
    %v1892 = vpop.permute.xlu0 %1891
    %v1957 = vrot.slane %v91, 2
    %v1958 = vrot.slane %v92, 2
    %v1959 = vsel %vm602, %v1957, %v1958
    %v1960 = vrot.slane %v93, 2
    %v1961 = vsel %vm602, %v1958, %v1960
    %v1962 = vrot.slane %v145, 2
    %v1963 = vrot.slane %v146, 2
    %v1964 = vsel %vm602, %v1962, %v1963
    %v1965 = vrot.slane %v147, 2
    %v1966 = vsel %vm602, %v1963, %v1965
    %1967 = vrot.lane.b32.xlu0 %v615, 24
    %v1968 = vpop.permute.xlu0 %1967
    %1969 = vrot.lane.b32.xlu0 %v617, 24
    %v1970 = vpop.permute.xlu0 %1969
    %1971 = vrot.lane.b32.xlu0 %v620, 24
    %v1972 = vpop.permute.xlu0 %1971
    %1973 = vrot.lane.b32.xlu0 %v622, 24
    %v1974 = vpop.permute.xlu0 %1973
    %1975 = vrot.lane.b32.xlu0 %v625, 24
    %v1976 = vpop.permute.xlu0 %1975
    %1977 = vrot.lane.b32.xlu0 %v627, 24
    %v1978 = vpop.permute.xlu0 %1977
    %1979 = vrot.lane.b32.xlu0 %v630, 24
    %v1980 = vpop.permute.xlu0 %1979
    %1981 = vrot.lane.b32.xlu0 %v632, 24
    %v1982 = vpop.permute.xlu0 %1981
    %1983 = vrot.lane.b32.xlu0 %v635, 24
    %v1984 = vpop.permute.xlu0 %1983
    %1985 = vrot.lane.b32.xlu0 %v637, 24
    %v1986 = vpop.permute.xlu0 %1985
    %1987 = vrot.lane.b32.xlu0 %v640, 24
    %v1988 = vpop.permute.xlu0 %1987
    %1989 = vrot.lane.b32.xlu0 %v642, 24
    %v1990 = vpop.permute.xlu0 %1989
    %1991 = vrot.lane.b32.xlu0 %v645, 24
    %v1992 = vpop.permute.xlu0 %1991
    %1993 = vrot.lane.b32.xlu0 %v647, 24
    %v1994 = vpop.permute.xlu0 %1993
    %1995 = vrot.lane.b32.xlu0 %v650, 24
    %v1996 = vpop.permute.xlu0 %1995
    %1997 = vrot.lane.b32.xlu0 %v652, 24
    %v1998 = vpop.permute.xlu0 %1997
    %1999 = vrot.lane.b32.xlu0 %v655, 24
    %v2000 = vpop.permute.xlu0 %1999
    %2001 = vrot.lane.b32.xlu0 %v657, 24
    %v2002 = vpop.permute.xlu0 %2001
    %2003 = vrot.lane.b32.xlu0 %v660, 24
    %v2004 = vpop.permute.xlu0 %2003
    %2005 = vrot.lane.b32.xlu0 %v662, 24
    %v2006 = vpop.permute.xlu0 %2005
    %2007 = vrot.lane.b32.xlu0 %v665, 24
    %v2008 = vpop.permute.xlu0 %2007
    %2009 = vrot.lane.b32.xlu0 %v667, 24
    %v2010 = vpop.permute.xlu0 %2009
    %2011 = vrot.lane.b32.xlu0 %v670, 24
    %v2012 = vpop.permute.xlu0 %2011
    %2013 = vrot.lane.b32.xlu0 %v672, 24
    %v2014 = vpop.permute.xlu0 %2013
    %2015 = vrot.lane.b32.xlu0 %v675, 24
    %v2016 = vpop.permute.xlu0 %2015
    %2017 = vrot.lane.b32.xlu0 %v677, 24
    %v2018 = vpop.permute.xlu0 %2017
    %2019 = vrot.lane.b32.xlu0 %v680, 24
    %v2020 = vpop.permute.xlu0 %2019
    %2021 = vrot.lane.b32.xlu0 %v682, 24
    %v2022 = vpop.permute.xlu0 %2021
    %2023 = vrot.lane.b32.xlu0 %v1357, 24
    %v2024 = vpop.permute.xlu0 %2023
    %2025 = vrot.lane.b32.xlu0 %v1359, 24
    %v2026 = vpop.permute.xlu0 %2025
    %2027 = vrot.lane.b32.xlu0 %v1959, 24
    %v2028 = vpop.permute.xlu0 %2027
    %2029 = vrot.lane.b32.xlu0 %v1961, 24
    %v2030 = vpop.permute.xlu0 %2029
    %2031 = vrot.lane.b32.xlu0 %v695, 24
    %v2032 = vpop.permute.xlu0 %2031
    %2033 = vrot.lane.b32.xlu0 %v697, 24
    %v2034 = vpop.permute.xlu0 %2033
    %2035 = vrot.lane.b32.xlu0 %v700, 24
    %v2036 = vpop.permute.xlu0 %2035
    %2037 = vrot.lane.b32.xlu0 %v702, 24
    %v2038 = vpop.permute.xlu0 %2037
    %2039 = vrot.lane.b32.xlu0 %v705, 24
    %v2040 = vpop.permute.xlu0 %2039
    %2041 = vrot.lane.b32.xlu0 %v707, 24
    %v2042 = vpop.permute.xlu0 %2041
    %2043 = vrot.lane.b32.xlu0 %v710, 24
    %v2044 = vpop.permute.xlu0 %2043
    %2045 = vrot.lane.b32.xlu0 %v712, 24
    %v2046 = vpop.permute.xlu0 %2045
    %2047 = vrot.lane.b32.xlu0 %v715, 24
    %v2048 = vpop.permute.xlu0 %2047
    %2049 = vrot.lane.b32.xlu0 %v717, 24
    %v2050 = vpop.permute.xlu0 %2049
    %2051 = vrot.lane.b32.xlu0 %v720, 24
    %v2052 = vpop.permute.xlu0 %2051
    %2053 = vrot.lane.b32.xlu0 %v722, 24
    %v2054 = vpop.permute.xlu0 %2053
    %2055 = vrot.lane.b32.xlu0 %v725, 24
    %v2056 = vpop.permute.xlu0 %2055
    %2057 = vrot.lane.b32.xlu0 %v727, 24
    %v2058 = vpop.permute.xlu0 %2057
    %2059 = vrot.lane.b32.xlu0 %v730, 24
    %v2060 = vpop.permute.xlu0 %2059
    %2061 = vrot.lane.b32.xlu0 %v732, 24
    %v2062 = vpop.permute.xlu0 %2061
    %2063 = vrot.lane.b32.xlu0 %v735, 24
    %v2064 = vpop.permute.xlu0 %2063
    %2065 = vrot.lane.b32.xlu0 %v737, 24
    %v2066 = vpop.permute.xlu0 %2065
    %2067 = vrot.lane.b32.xlu0 %v740, 24
    %v2068 = vpop.permute.xlu0 %2067
    %2069 = vrot.lane.b32.xlu0 %v742, 24
    %v2070 = vpop.permute.xlu0 %2069
    %2071 = vrot.lane.b32.xlu0 %v745, 24
    %v2072 = vpop.permute.xlu0 %2071
    %2073 = vrot.lane.b32.xlu0 %v747, 24
    %v2074 = vpop.permute.xlu0 %2073
    %2075 = vrot.lane.b32.xlu0 %v750, 24
    %v2076 = vpop.permute.xlu0 %2075
    %2077 = vrot.lane.b32.xlu0 %v752, 24
    %v2078 = vpop.permute.xlu0 %2077
    %2079 = vrot.lane.b32.xlu0 %v755, 24
    %v2080 = vpop.permute.xlu0 %2079
    %2081 = vrot.lane.b32.xlu0 %v757, 24
    %v2082 = vpop.permute.xlu0 %2081
    %2083 = vrot.lane.b32.xlu0 %v760, 24
    %v2084 = vpop.permute.xlu0 %2083
    %2085 = vrot.lane.b32.xlu0 %v762, 24
    %v2086 = vpop.permute.xlu0 %2085
    %2087 = vrot.lane.b32.xlu0 %v1362, 24
    %v2088 = vpop.permute.xlu0 %2087
    %2089 = vrot.lane.b32.xlu0 %v1364, 24
    %v2090 = vpop.permute.xlu0 %2089
    %2091 = vrot.lane.b32.xlu0 %v1964, 24
    %v2092 = vpop.permute.xlu0 %2091
    %2093 = vrot.lane.b32.xlu0 %v1966, 24
    %v2094 = vpop.permute.xlu0 %2093
    %vm2159 = vcmask 23552
    %v2160 = vsel %vm2159, %v40, %v411
    %v2161 = vsel %vm2159, %v41, %v413
    %v2162 = vsel %vm2159, %v43, %v415
    %v2163 = vsel %vm2159, %v44, %v417
    %v2164 = vsel %vm2159, %v46, %v419
    %v2165 = vsel %vm2159, %v47, %v421
    %v2166 = vsel %vm2159, %v49, %v423
    %v2167 = vsel %vm2159, %v50, %v425
    %v2168 = vsel %vm2159, %v52, %v427
    %v2169 = vsel %vm2159, %v53, %v429
    %v2170 = vsel %vm2159, %v55, %v431
    %v2171 = vsel %vm2159, %v56, %v433
    %v2172 = vsel %vm2159, %v58, %v435
    %v2173 = vsel %vm2159, %v59, %v437
    %v2174 = vsel %vm2159, %v61, %v439
    %v2175 = vsel %vm2159, %v62, %v441
    %v2176 = vsel %vm2159, %v64, %v443
    %v2177 = vsel %vm2159, %v65, %v445
    %v2178 = vsel %vm2159, %v67, %v447
    %v2179 = vsel %vm2159, %v68, %v449
    %v2180 = vsel %vm2159, %v70, %v451
    %v2181 = vsel %vm2159, %v71, %v453
    %v2182 = vsel %vm2159, %v73, %v455
    %v2183 = vsel %vm2159, %v74, %v457
    %v2184 = vsel %vm2159, %v76, %v459
    %v2185 = vsel %vm2159, %v77, %v461
    %v2186 = vsel %vm2159, %v79, %v463
    %v2187 = vsel %vm2159, %v80, %v465
    %v2188 = vsel %vm2159, %v82, %v467
    %v2189 = vsel %vm2159, %v83, %v469
    %v2190 = vsel %vm2159, %v85, %v471
    %v2191 = vsel %vm2159, %v86, %v473
    %v2192 = vsel %vm2159, %v94, %v475
    %v2193 = vsel %vm2159, %v95, %v477
    %v2194 = vsel %vm2159, %v97, %v479
    %v2195 = vsel %vm2159, %v98, %v481
    %v2196 = vsel %vm2159, %v100, %v483
    %v2197 = vsel %vm2159, %v101, %v485
    %v2198 = vsel %vm2159, %v103, %v487
    %v2199 = vsel %vm2159, %v104, %v489
    %v2200 = vsel %vm2159, %v106, %v491
    %v2201 = vsel %vm2159, %v107, %v493
    %v2202 = vsel %vm2159, %v109, %v495
    %v2203 = vsel %vm2159, %v110, %v497
    %v2204 = vsel %vm2159, %v112, %v499
    %v2205 = vsel %vm2159, %v113, %v501
    %v2206 = vsel %vm2159, %v115, %v503
    %v2207 = vsel %vm2159, %v116, %v505
    %v2208 = vsel %vm2159, %v118, %v507
    %v2209 = vsel %vm2159, %v119, %v509
    %v2210 = vsel %vm2159, %v121, %v511
    %v2211 = vsel %vm2159, %v122, %v513
    %v2212 = vsel %vm2159, %v124, %v515
    %v2213 = vsel %vm2159, %v125, %v517
    %v2214 = vsel %vm2159, %v127, %v519
    %v2215 = vsel %vm2159, %v128, %v521
    %v2216 = vsel %vm2159, %v130, %v523
    %v2217 = vsel %vm2159, %v131, %v525
    %v2218 = vsel %vm2159, %v133, %v527
    %v2219 = vsel %vm2159, %v134, %v529
    %v2220 = vsel %vm2159, %v136, %v531
    %v2221 = vsel %vm2159, %v137, %v533
    %v2222 = vsel %vm2159, %v139, %v535
    %v2223 = vsel %vm2159, %v140, %v537
    %vm2224 = vcmask 48128
    %v2225 = vsel %vm2224, %v2160, %v764
    %v2226 = vsel %vm2224, %v2161, %v766
    %v2227 = vsel %vm2224, %v2162, %v768
    %v2228 = vsel %vm2224, %v2163, %v770
    %v2229 = vsel %vm2224, %v2164, %v772
    %v2230 = vsel %vm2224, %v2165, %v774
    %v2231 = vsel %vm2224, %v2166, %v776
    %v2232 = vsel %vm2224, %v2167, %v778
    %v2233 = vsel %vm2224, %v2168, %v780
    %v2234 = vsel %vm2224, %v2169, %v782
    %v2235 = vsel %vm2224, %v2170, %v784
    %v2236 = vsel %vm2224, %v2171, %v786
    %v2237 = vsel %vm2224, %v2172, %v788
    %v2238 = vsel %vm2224, %v2173, %v790
    %v2239 = vsel %vm2224, %v2174, %v792
    %v2240 = vsel %vm2224, %v2175, %v794
    %v2241 = vsel %vm2224, %v2176, %v796
    %v2242 = vsel %vm2224, %v2177, %v798
    %v2243 = vsel %vm2224, %v2178, %v800
    %v2244 = vsel %vm2224, %v2179, %v802
    %v2245 = vsel %vm2224, %v2180, %v804
    %v2246 = vsel %vm2224, %v2181, %v806
    %v2247 = vsel %vm2224, %v2182, %v808
    %v2248 = vsel %vm2224, %v2183, %v810
    %v2249 = vsel %vm2224, %v2184, %v812
    %v2250 = vsel %vm2224, %v2185, %v814
    %v2251 = vsel %vm2224, %v2186, %v816
    %v2252 = vsel %vm2224, %v2187, %v818
    %v2253 = vsel %vm2224, %v2188, %v820
    %v2254 = vsel %vm2224, %v2189, %v822
    %v2255 = vsel %vm2224, %v2190, %v824
    %v2256 = vsel %vm2224, %v2191, %v826
    %v2257 = vsel %vm2224, %v2192, %v828
    %v2258 = vsel %vm2224, %v2193, %v830
    %v2259 = vsel %vm2224, %v2194, %v832
    %v2260 = vsel %vm2224, %v2195, %v834
    %v2261 = vsel %vm2224, %v2196, %v836
    %v2262 = vsel %vm2224, %v2197, %v838
    %v2263 = vsel %vm2224, %v2198, %v840
    %v2264 = vsel %vm2224, %v2199, %v842
    %v2265 = vsel %vm2224, %v2200, %v844
    %v2266 = vsel %vm2224, %v2201, %v846
    %v2267 = vsel %vm2224, %v2202, %v848
    %v2268 = vsel %vm2224, %v2203, %v850
    %v2269 = vsel %vm2224, %v2204, %v852
    %v2270 = vsel %vm2224, %v2205, %v854
    %v2271 = vsel %vm2224, %v2206, %v856
    %v2272 = vsel %vm2224, %v2207, %v858
    %v2273 = vsel %vm2224, %v2208, %v860
    %v2274 = vsel %vm2224, %v2209, %v862
    %v2275 = vsel %vm2224, %v2210, %v864
    %v2276 = vsel %vm2224, %v2211, %v866
    %v2277 = vsel %vm2224, %v2212, %v868
    %v2278 = vsel %vm2224, %v2213, %v870
    %v2279 = vsel %vm2224, %v2214, %v872
    %v2280 = vsel %vm2224, %v2215, %v874
    %v2281 = vsel %vm2224, %v2216, %v876
    %v2282 = vsel %vm2224, %v2217, %v878
    %v2283 = vsel %vm2224, %v2218, %v880
    %v2284 = vsel %vm2224, %v2219, %v882
    %v2285 = vsel %vm2224, %v2220, %v884
    %v2286 = vsel %vm2224, %v2221, %v886
    %v2287 = vsel %vm2224, %v2222, %v888
    %v2288 = vsel %vm2224, %v2223, %v890
    %vm2289 = vcmask 72704
    %v2290 = vsel %vm2289, %v2225, %v960
    %v2291 = vsel %vm2289, %v2226, %v962
    %v2292 = vsel %vm2289, %v2227, %v964
    %v2293 = vsel %vm2289, %v2228, %v966
    %v2294 = vsel %vm2289, %v2229, %v968
    %v2295 = vsel %vm2289, %v2230, %v970
    %v2296 = vsel %vm2289, %v2231, %v972
    %v2297 = vsel %vm2289, %v2232, %v974
    %v2298 = vsel %vm2289, %v2233, %v976
    %v2299 = vsel %vm2289, %v2234, %v978
    %v2300 = vsel %vm2289, %v2235, %v980
    %v2301 = vsel %vm2289, %v2236, %v982
    %v2302 = vsel %vm2289, %v2237, %v984
    %v2303 = vsel %vm2289, %v2238, %v986
    %v2304 = vsel %vm2289, %v2239, %v988
    %v2305 = vsel %vm2289, %v2240, %v990
    %v2306 = vsel %vm2289, %v2241, %v992
    %v2307 = vsel %vm2289, %v2242, %v994
    %v2308 = vsel %vm2289, %v2243, %v996
    %v2309 = vsel %vm2289, %v2244, %v998
    %v2310 = vsel %vm2289, %v2245, %v1000
    %v2311 = vsel %vm2289, %v2246, %v1002
    %v2312 = vsel %vm2289, %v2247, %v1004
    %v2313 = vsel %vm2289, %v2248, %v1006
    %v2314 = vsel %vm2289, %v2249, %v1008
    %v2315 = vsel %vm2289, %v2250, %v1010
    %v2316 = vsel %vm2289, %v2251, %v1012
    %v2317 = vsel %vm2289, %v2252, %v1014
    %v2318 = vsel %vm2289, %v2253, %v1016
    %v2319 = vsel %vm2289, %v2254, %v1018
    %v2320 = vsel %vm2289, %v2255, %v1020
    %v2321 = vsel %vm2289, %v2256, %v1022
    %v2322 = vsel %vm2289, %v2257, %v1024
    %v2323 = vsel %vm2289, %v2258, %v1026
    %v2324 = vsel %vm2289, %v2259, %v1028
    %v2325 = vsel %vm2289, %v2260, %v1030
    %v2326 = vsel %vm2289, %v2261, %v1032
    %v2327 = vsel %vm2289, %v2262, %v1034
    %v2328 = vsel %vm2289, %v2263, %v1036
    %v2329 = vsel %vm2289, %v2264, %v1038
    %v2330 = vsel %vm2289, %v2265, %v1040
    %v2331 = vsel %vm2289, %v2266, %v1042
    %v2332 = vsel %vm2289, %v2267, %v1044
    %v2333 = vsel %vm2289, %v2268, %v1046
    %v2334 = vsel %vm2289, %v2269, %v1048
    %v2335 = vsel %vm2289, %v2270, %v1050
    %v2336 = vsel %vm2289, %v2271, %v1052
    %v2337 = vsel %vm2289, %v2272, %v1054
    %v2338 = vsel %vm2289, %v2273, %v1056
    %v2339 = vsel %vm2289, %v2274, %v1058
    %v2340 = vsel %vm2289, %v2275, %v1060
    %v2341 = vsel %vm2289, %v2276, %v1062
    %v2342 = vsel %vm2289, %v2277, %v1064
    %v2343 = vsel %vm2289, %v2278, %v1066
    %v2344 = vsel %vm2289, %v2279, %v1068
    %v2345 = vsel %vm2289, %v2280, %v1070
    %v2346 = vsel %vm2289, %v2281, %v1072
    %v2347 = vsel %vm2289, %v2282, %v1074
    %v2348 = vsel %vm2289, %v2283, %v1076
    %v2349 = vsel %vm2289, %v2284, %v1078
    %v2350 = vsel %vm2289, %v2285, %v1080
    %v2351 = vsel %vm2289, %v2286, %v1082
    %v2352 = vsel %vm2289, %v2287, %v1084
    %v2353 = vsel %vm2289, %v2288, %v1086
    %vm2354 = vcmask 97280
    %v2355 = vsel %vm2354, %v2290, %v1164
    %v2356 = vsel %vm2354, %v2291, %v1166
    %v2357 = vsel %vm2354, %v2292, %v1168
    %v2358 = vsel %vm2354, %v2293, %v1170
    %v2359 = vsel %vm2354, %v2294, %v1172
    %v2360 = vsel %vm2354, %v2295, %v1174
    %v2361 = vsel %vm2354, %v2296, %v1176
    %v2362 = vsel %vm2354, %v2297, %v1178
    %v2363 = vsel %vm2354, %v2298, %v1180
    %v2364 = vsel %vm2354, %v2299, %v1182
    %v2365 = vsel %vm2354, %v2300, %v1184
    %v2366 = vsel %vm2354, %v2301, %v1186
    %v2367 = vsel %vm2354, %v2302, %v1188
    %v2368 = vsel %vm2354, %v2303, %v1190
    %v2369 = vsel %vm2354, %v2304, %v1192
    %v2370 = vsel %vm2354, %v2305, %v1194
    %v2371 = vsel %vm2354, %v2306, %v1196
    %v2372 = vsel %vm2354, %v2307, %v1198
    %v2373 = vsel %vm2354, %v2308, %v1200
    %v2374 = vsel %vm2354, %v2309, %v1202
    %v2375 = vsel %vm2354, %v2310, %v1204
    %v2376 = vsel %vm2354, %v2311, %v1206
    %v2377 = vsel %vm2354, %v2312, %v1208
    %v2378 = vsel %vm2354, %v2313, %v1210
    %v2379 = vsel %vm2354, %v2314, %v1212
    %v2380 = vsel %vm2354, %v2315, %v1214
    %v2381 = vsel %vm2354, %v2316, %v1216
    %v2382 = vsel %vm2354, %v2317, %v1218
    %v2383 = vsel %vm2354, %v2318, %v1220
    %v2384 = vsel %vm2354, %v2319, %v1222
    %v2385 = vsel %vm2354, %v2320, %v1224
    %v2386 = vsel %vm2354, %v2321, %v1226
    %v2387 = vsel %vm2354, %v2322, %v1228
    %v2388 = vsel %vm2354, %v2323, %v1230
    %v2389 = vsel %vm2354, %v2324, %v1232
    %v2390 = vsel %vm2354, %v2325, %v1234
    %v2391 = vsel %vm2354, %v2326, %v1236
    %v2392 = vsel %vm2354, %v2327, %v1238
    %v2393 = vsel %vm2354, %v2328, %v1240
    %v2394 = vsel %vm2354, %v2329, %v1242
    %v2395 = vsel %vm2354, %v2330, %v1244
    %v2396 = vsel %vm2354, %v2331, %v1246
    %v2397 = vsel %vm2354, %v2332, %v1248
    %v2398 = vsel %vm2354, %v2333, %v1250
    %v2399 = vsel %vm2354, %v2334, %v1252
    %v2400 = vsel %vm2354, %v2335, %v1254
    %v2401 = vsel %vm2354, %v2336, %v1256
    %v2402 = vsel %vm2354, %v2337, %v1258
    %v2403 = vsel %vm2354, %v2338, %v1260
    %v2404 = vsel %vm2354, %v2339, %v1262
    %v2405 = vsel %vm2354, %v2340, %v1264
    %v2406 = vsel %vm2354, %v2341, %v1266
    %v2407 = vsel %vm2354, %v2342, %v1268
    %v2408 = vsel %vm2354, %v2343, %v1270
    %v2409 = vsel %vm2354, %v2344, %v1272
    %v2410 = vsel %vm2354, %v2345, %v1274
    %v2411 = vsel %vm2354, %v2346, %v1276
    %v2412 = vsel %vm2354, %v2347, %v1278
    %v2413 = vsel %vm2354, %v2348, %v1280
    %v2414 = vsel %vm2354, %v2349, %v1282
    %v2415 = vsel %vm2354, %v2350, %v1284
    %v2416 = vsel %vm2354, %v2351, %v1286
    %v2417 = vsel %vm2354, %v2352, %v1288
    %v2418 = vsel %vm2354, %v2353, %v1290
    %vm2419 = vcmask 121856
    %v2420 = vsel %vm2419, %v2355, %v1366
    %v2421 = vsel %vm2419, %v2356, %v1368
    %v2422 = vsel %vm2419, %v2357, %v1370
    %v2423 = vsel %vm2419, %v2358, %v1372
    %v2424 = vsel %vm2419, %v2359, %v1374
    %v2425 = vsel %vm2419, %v2360, %v1376
    %v2426 = vsel %vm2419, %v2361, %v1378
    %v2427 = vsel %vm2419, %v2362, %v1380
    %v2428 = vsel %vm2419, %v2363, %v1382
    %v2429 = vsel %vm2419, %v2364, %v1384
    %v2430 = vsel %vm2419, %v2365, %v1386
    %v2431 = vsel %vm2419, %v2366, %v1388
    %v2432 = vsel %vm2419, %v2367, %v1390
    %v2433 = vsel %vm2419, %v2368, %v1392
    %v2434 = vsel %vm2419, %v2369, %v1394
    %v2435 = vsel %vm2419, %v2370, %v1396
    %v2436 = vsel %vm2419, %v2371, %v1398
    %v2437 = vsel %vm2419, %v2372, %v1400
    %v2438 = vsel %vm2419, %v2373, %v1402
    %v2439 = vsel %vm2419, %v2374, %v1404
    %v2440 = vsel %vm2419, %v2375, %v1406
    %v2441 = vsel %vm2419, %v2376, %v1408
    %v2442 = vsel %vm2419, %v2377, %v1410
    %v2443 = vsel %vm2419, %v2378, %v1412
    %v2444 = vsel %vm2419, %v2379, %v1414
    %v2445 = vsel %vm2419, %v2380, %v1416
    %v2446 = vsel %vm2419, %v2381, %v1418
    %v2447 = vsel %vm2419, %v2382, %v1420
    %v2448 = vsel %vm2419, %v2383, %v1422
    %v2449 = vsel %vm2419, %v2384, %v1424
    %v2450 = vsel %vm2419, %v2385, %v1426
    %v2451 = vsel %vm2419, %v2386, %v1428
    %v2452 = vsel %vm2419, %v2387, %v1430
    %v2453 = vsel %vm2419, %v2388, %v1432
    %v2454 = vsel %vm2419, %v2389, %v1434
    %v2455 = vsel %vm2419, %v2390, %v1436
    %v2456 = vsel %vm2419, %v2391, %v1438
    %v2457 = vsel %vm2419, %v2392, %v1440
    %v2458 = vsel %vm2419, %v2393, %v1442
    %v2459 = vsel %vm2419, %v2394, %v1444
    %v2460 = vsel %vm2419, %v2395, %v1446
    %v2461 = vsel %vm2419, %v2396, %v1448
    %v2462 = vsel %vm2419, %v2397, %v1450
    %v2463 = vsel %vm2419, %v2398, %v1452
    %v2464 = vsel %vm2419, %v2399, %v1454
    %v2465 = vsel %vm2419, %v2400, %v1456
    %v2466 = vsel %vm2419, %v2401, %v1458
    %v2467 = vsel %vm2419, %v2402, %v1460
    %v2468 = vsel %vm2419, %v2403, %v1462
    %v2469 = vsel %vm2419, %v2404, %v1464
    %v2470 = vsel %vm2419, %v2405, %v1466
    %v2471 = vsel %vm2419, %v2406, %v1468
    %v2472 = vsel %vm2419, %v2407, %v1470
    %v2473 = vsel %vm2419, %v2408, %v1472
    %v2474 = vsel %vm2419, %v2409, %v1474
    %v2475 = vsel %vm2419, %v2410, %v1476
    %v2476 = vsel %vm2419, %v2411, %v1478
    %v2477 = vsel %vm2419, %v2412, %v1480
    %v2478 = vsel %vm2419, %v2413, %v1482
    %v2479 = vsel %vm2419, %v2414, %v1484
    %v2480 = vsel %vm2419, %v2415, %v1486
    %v2481 = vsel %vm2419, %v2416, %v1488
    %v2482 = vsel %vm2419, %v2417, %v1490
    %v2483 = vsel %vm2419, %v2418, %v1492
    %vm2484 = vcmask 146432
    %v2485 = vsel %vm2484, %v2420, %v1562
    %v2486 = vsel %vm2484, %v2421, %v1564
    %v2487 = vsel %vm2484, %v2422, %v1566
    %v2488 = vsel %vm2484, %v2423, %v1568
    %v2489 = vsel %vm2484, %v2424, %v1570
    %v2490 = vsel %vm2484, %v2425, %v1572
    %v2491 = vsel %vm2484, %v2426, %v1574
    %v2492 = vsel %vm2484, %v2427, %v1576
    %v2493 = vsel %vm2484, %v2428, %v1578
    %v2494 = vsel %vm2484, %v2429, %v1580
    %v2495 = vsel %vm2484, %v2430, %v1582
    %v2496 = vsel %vm2484, %v2431, %v1584
    %v2497 = vsel %vm2484, %v2432, %v1586
    %v2498 = vsel %vm2484, %v2433, %v1588
    %v2499 = vsel %vm2484, %v2434, %v1590
    %v2500 = vsel %vm2484, %v2435, %v1592
    %v2501 = vsel %vm2484, %v2436, %v1594
    %v2502 = vsel %vm2484, %v2437, %v1596
    %v2503 = vsel %vm2484, %v2438, %v1598
    %v2504 = vsel %vm2484, %v2439, %v1600
    %v2505 = vsel %vm2484, %v2440, %v1602
    %v2506 = vsel %vm2484, %v2441, %v1604
    %v2507 = vsel %vm2484, %v2442, %v1606
    %v2508 = vsel %vm2484, %v2443, %v1608
    %v2509 = vsel %vm2484, %v2444, %v1610
    %v2510 = vsel %vm2484, %v2445, %v1612
    %v2511 = vsel %vm2484, %v2446, %v1614
    %v2512 = vsel %vm2484, %v2447, %v1616
    %v2513 = vsel %vm2484, %v2448, %v1618
    %v2514 = vsel %vm2484, %v2449, %v1620
    %v2515 = vsel %vm2484, %v2450, %v1622
    %v2516 = vsel %vm2484, %v2451, %v1624
    %v2517 = vsel %vm2484, %v2452, %v1626
    %v2518 = vsel %vm2484, %v2453, %v1628
    %v2519 = vsel %vm2484, %v2454, %v1630
    %v2520 = vsel %vm2484, %v2455, %v1632
    %v2521 = vsel %vm2484, %v2456, %v1634
    %v2522 = vsel %vm2484, %v2457, %v1636
    %v2523 = vsel %vm2484, %v2458, %v1638
    %v2524 = vsel %vm2484, %v2459, %v1640
    %v2525 = vsel %vm2484, %v2460, %v1642
    %v2526 = vsel %vm2484, %v2461, %v1644
    %v2527 = vsel %vm2484, %v2462, %v1646
    %v2528 = vsel %vm2484, %v2463, %v1648
    %v2529 = vsel %vm2484, %v2464, %v1650
    %v2530 = vsel %vm2484, %v2465, %v1652
    %v2531 = vsel %vm2484, %v2466, %v1654
    %v2532 = vsel %vm2484, %v2467, %v1656
    %v2533 = vsel %vm2484, %v2468, %v1658
    %v2534 = vsel %vm2484, %v2469, %v1660
    %v2535 = vsel %vm2484, %v2470, %v1662
    %v2536 = vsel %vm2484, %v2471, %v1664
    %v2537 = vsel %vm2484, %v2472, %v1666
    %v2538 = vsel %vm2484, %v2473, %v1668
    %v2539 = vsel %vm2484, %v2474, %v1670
    %v2540 = vsel %vm2484, %v2475, %v1672
    %v2541 = vsel %vm2484, %v2476, %v1674
    %v2542 = vsel %vm2484, %v2477, %v1676
    %v2543 = vsel %vm2484, %v2478, %v1678
    %v2544 = vsel %vm2484, %v2479, %v1680
    %v2545 = vsel %vm2484, %v2480, %v1682
    %v2546 = vsel %vm2484, %v2481, %v1684
    %v2547 = vsel %vm2484, %v2482, %v1686
    %v2548 = vsel %vm2484, %v2483, %v1688
    %vm2549 = vcmask 171008
    %v2550 = vsel %vm2549, %v2485, %v1766
    %v2551 = vsel %vm2549, %v2486, %v1768
    %v2552 = vsel %vm2549, %v2487, %v1770
    %v2553 = vsel %vm2549, %v2488, %v1772
    %v2554 = vsel %vm2549, %v2489, %v1774
    %v2555 = vsel %vm2549, %v2490, %v1776
    %v2556 = vsel %vm2549, %v2491, %v1778
    %v2557 = vsel %vm2549, %v2492, %v1780
    %v2558 = vsel %vm2549, %v2493, %v1782
    %v2559 = vsel %vm2549, %v2494, %v1784
    %v2560 = vsel %vm2549, %v2495, %v1786
    %v2561 = vsel %vm2549, %v2496, %v1788
    %v2562 = vsel %vm2549, %v2497, %v1790
    %v2563 = vsel %vm2549, %v2498, %v1792
    %v2564 = vsel %vm2549, %v2499, %v1794
    %v2565 = vsel %vm2549, %v2500, %v1796
    %v2566 = vsel %vm2549, %v2501, %v1798
    %v2567 = vsel %vm2549, %v2502, %v1800
    %v2568 = vsel %vm2549, %v2503, %v1802
    %v2569 = vsel %vm2549, %v2504, %v1804
    %v2570 = vsel %vm2549, %v2505, %v1806
    %v2571 = vsel %vm2549, %v2506, %v1808
    %v2572 = vsel %vm2549, %v2507, %v1810
    %v2573 = vsel %vm2549, %v2508, %v1812
    %v2574 = vsel %vm2549, %v2509, %v1814
    %v2575 = vsel %vm2549, %v2510, %v1816
    %v2576 = vsel %vm2549, %v2511, %v1818
    %v2577 = vsel %vm2549, %v2512, %v1820
    %v2578 = vsel %vm2549, %v2513, %v1822
    %v2579 = vsel %vm2549, %v2514, %v1824
    %v2580 = vsel %vm2549, %v2515, %v1826
    %v2581 = vsel %vm2549, %v2516, %v1828
    %v2582 = vsel %vm2549, %v2517, %v1830
    %v2583 = vsel %vm2549, %v2518, %v1832
    %v2584 = vsel %vm2549, %v2519, %v1834
    %v2585 = vsel %vm2549, %v2520, %v1836
    %v2586 = vsel %vm2549, %v2521, %v1838
    %v2587 = vsel %vm2549, %v2522, %v1840
    %v2588 = vsel %vm2549, %v2523, %v1842
    %v2589 = vsel %vm2549, %v2524, %v1844
    %v2590 = vsel %vm2549, %v2525, %v1846
    %v2591 = vsel %vm2549, %v2526, %v1848
    %v2592 = vsel %vm2549, %v2527, %v1850
    %v2593 = vsel %vm2549, %v2528, %v1852
    %v2594 = vsel %vm2549, %v2529, %v1854
    %v2595 = vsel %vm2549, %v2530, %v1856
    %v2596 = vsel %vm2549, %v2531, %v1858
    %v2597 = vsel %vm2549, %v2532, %v1860
    %v2598 = vsel %vm2549, %v2533, %v1862
    %v2599 = vsel %vm2549, %v2534, %v1864
    %v2600 = vsel %vm2549, %v2535, %v1866
    %v2601 = vsel %vm2549, %v2536, %v1868
    %v2602 = vsel %vm2549, %v2537, %v1870
    %v2603 = vsel %vm2549, %v2538, %v1872
    %v2604 = vsel %vm2549, %v2539, %v1874
    %v2605 = vsel %vm2549, %v2540, %v1876
    %v2606 = vsel %vm2549, %v2541, %v1878
    %v2607 = vsel %vm2549, %v2542, %v1880
    %v2608 = vsel %vm2549, %v2543, %v1882
    %v2609 = vsel %vm2549, %v2544, %v1884
    %v2610 = vsel %vm2549, %v2545, %v1886
    %v2611 = vsel %vm2549, %v2546, %v1888
    %v2612 = vsel %vm2549, %v2547, %v1890
    %v2613 = vsel %vm2549, %v2548, %v1892
    %vm2614 = vcmask 195584
    %v2615 = vsel %vm2614, %v2550, %v1968
    %v2616 = vsel %vm2614, %v2551, %v1970
    %v2617 = vsel %vm2614, %v2552, %v1972
    %v2618 = vsel %vm2614, %v2553, %v1974
    %v2619 = vsel %vm2614, %v2554, %v1976
    %v2620 = vsel %vm2614, %v2555, %v1978
    %v2621 = vsel %vm2614, %v2556, %v1980
    %v2622 = vsel %vm2614, %v2557, %v1982
    %v2623 = vsel %vm2614, %v2558, %v1984
    %v2624 = vsel %vm2614, %v2559, %v1986
    %v2625 = vsel %vm2614, %v2560, %v1988
    %v2626 = vsel %vm2614, %v2561, %v1990
    %v2627 = vsel %vm2614, %v2562, %v1992
    %v2628 = vsel %vm2614, %v2563, %v1994
    %v2629 = vsel %vm2614, %v2564, %v1996
    %v2630 = vsel %vm2614, %v2565, %v1998
    %v2631 = vsel %vm2614, %v2566, %v2000
    %v2632 = vsel %vm2614, %v2567, %v2002
    %v2633 = vsel %vm2614, %v2568, %v2004
    %v2634 = vsel %vm2614, %v2569, %v2006
    %v2635 = vsel %vm2614, %v2570, %v2008
    %v2636 = vsel %vm2614, %v2571, %v2010
    %v2637 = vsel %vm2614, %v2572, %v2012
    %v2638 = vsel %vm2614, %v2573, %v2014
    %v2639 = vsel %vm2614, %v2574, %v2016
    %v2640 = vsel %vm2614, %v2575, %v2018
    %v2641 = vsel %vm2614, %v2576, %v2020
    %v2642 = vsel %vm2614, %v2577, %v2022
    %v2643 = vsel %vm2614, %v2578, %v2024
    %v2644 = vsel %vm2614, %v2579, %v2026
    %v2645 = vsel %vm2614, %v2580, %v2028
    %v2646 = vsel %vm2614, %v2581, %v2030
    %v2647 = vsel %vm2614, %v2582, %v2032
    %v2648 = vsel %vm2614, %v2583, %v2034
    %v2649 = vsel %vm2614, %v2584, %v2036
    %v2650 = vsel %vm2614, %v2585, %v2038
    %v2651 = vsel %vm2614, %v2586, %v2040
    %v2652 = vsel %vm2614, %v2587, %v2042
    %v2653 = vsel %vm2614, %v2588, %v2044
    %v2654 = vsel %vm2614, %v2589, %v2046
    %v2655 = vsel %vm2614, %v2590, %v2048
    %v2656 = vsel %vm2614, %v2591, %v2050
    %v2657 = vsel %vm2614, %v2592, %v2052
    %v2658 = vsel %vm2614, %v2593, %v2054
    %v2659 = vsel %vm2614, %v2594, %v2056
    %v2660 = vsel %vm2614, %v2595, %v2058
    %v2661 = vsel %vm2614, %v2596, %v2060
    %v2662 = vsel %vm2614, %v2597, %v2062
    %v2663 = vsel %vm2614, %v2598, %v2064
    %v2664 = vsel %vm2614, %v2599, %v2066
    %v2665 = vsel %vm2614, %v2600, %v2068
    %v2666 = vsel %vm2614, %v2601, %v2070
    %v2667 = vsel %vm2614, %v2602, %v2072
    %v2668 = vsel %vm2614, %v2603, %v2074
    %v2669 = vsel %vm2614, %v2604, %v2076
    %v2670 = vsel %vm2614, %v2605, %v2078
    %v2671 = vsel %vm2614, %v2606, %v2080
    %v2672 = vsel %vm2614, %v2607, %v2082
    %v2673 = vsel %vm2614, %v2608, %v2084
    %v2674 = vsel %vm2614, %v2609, %v2086
    %v2675 = vsel %vm2614, %v2610, %v2088
    %v2676 = vsel %vm2614, %v2611, %v2090
    %v2677 = vsel %vm2614, %v2612, %v2092
    %v2678 = vsel %vm2614, %v2613, %v2094
    %v2679 = vpack.c.bf16 %v2616, %v2615
    %v2680 = vpack.c.bf16 %v2618, %v2617
    %v2681 = vpack.c.bf16 %v2620, %v2619
    %v2682 = vpack.c.bf16 %v2622, %v2621
    %v2683 = vpack.c.bf16 %v2624, %v2623
    %v2684 = vpack.c.bf16 %v2626, %v2625
    %v2685 = vpack.c.bf16 %v2628, %v2627
    %v2686 = vpack.c.bf16 %v2630, %v2629
    %v2687 = vpack.c.bf16 %v2632, %v2631
    %v2688 = vpack.c.bf16 %v2634, %v2633
    %v2689 = vpack.c.bf16 %v2636, %v2635
    %v2690 = vpack.c.bf16 %v2638, %v2637
    %v2691 = vpack.c.bf16 %v2640, %v2639
    %v2692 = vpack.c.bf16 %v2642, %v2641
    %v2693 = vpack.c.bf16 %v2644, %v2643
    %v2694 = vpack.c.bf16 %v2646, %v2645
    %v2695 = vpack.c.bf16 %v2648, %v2647
    %v2696 = vpack.c.bf16 %v2650, %v2649
    %v2697 = vpack.c.bf16 %v2652, %v2651
    %v2698 = vpack.c.bf16 %v2654, %v2653
    %v2699 = vpack.c.bf16 %v2656, %v2655
    %v2700 = vpack.c.bf16 %v2658, %v2657
    %v2701 = vpack.c.bf16 %v2660, %v2659
    %v2702 = vpack.c.bf16 %v2662, %v2661
    %v2703 = vpack.c.bf16 %v2664, %v2663
    %v2704 = vpack.c.bf16 %v2666, %v2665
    %v2705 = vpack.c.bf16 %v2668, %v2667
    %v2706 = vpack.c.bf16 %v2670, %v2669
    %v2707 = vpack.c.bf16 %v2672, %v2671
    %v2708 = vpack.c.bf16 %v2674, %v2673
    %v2709 = vpack.c.bf16 %v2676, %v2675
    %v2710 = vpack.c.bf16 %v2678, %v2677
    %v2712 = vlaneseq
    %v2713 = vshrl.u32 %v2712, 7
    %v2714 = vsub.s32 0, %v2713
    %v2715 = vrot.slane %v152, %v2714
    %v2721 = vunpack.c.l.b16 %v148
    %v2722 = vunpack.c.l.b16 %v149
    %v2723 = vunpack.c.l.b16 %v150
    %v2724 = vunpack.c.l.b16 %v151
    %v2725 = vpack.c.b16 %v2722, %v2721
    %v2726 = vpack.c.b16 %v2724, %v2723
    %vm2728 = vcmask 220160
    %v2730 = vsel %vm2728, %v2679, 0
    %v2733 = vsel %vm2728, %v2680, 0
    %v2736 = vsel %vm2728, %v2681, 0
    %v2739 = vsel %vm2728, %v2682, 0
    %v2742 = vsel %vm2728, %v2683, 0
    %v2745 = vsel %vm2728, %v2684, 0
    %v2748 = vsel %vm2728, %v2685, 0
    %v2751 = vsel %vm2728, %v2686, 0
    %v2754 = vsel %vm2728, %v2687, 0
    %v2757 = vsel %vm2728, %v2688, 0
    %v2760 = vsel %vm2728, %v2689, 0
    %v2763 = vsel %vm2728, %v2690, 0
    %v2766 = vsel %vm2728, %v2691, 0
    %v2769 = vsel %vm2728, %v2692, 0
    %v2772 = vsel %vm2728, %v2693, 0
    %v2775 = vsel %vm2728, %v2694, 0
    %v2778 = vsel %vm2728, %v2695, 0
    %v2781 = vsel %vm2728, %v2696, 0
    %v2784 = vsel %vm2728, %v2697, 0
    %v2787 = vsel %vm2728, %v2698, 0
    %v2790 = vsel %vm2728, %v2699, 0
    %v2793 = vsel %vm2728, %v2700, 0
    %v2796 = vsel %vm2728, %v2701, 0
    %v2799 = vsel %vm2728, %v2702, 0
    %v2802 = vsel %vm2728, %v2703, 0
    %v2805 = vsel %vm2728, %v2704, 0
    %v2808 = vsel %vm2728, %v2705, 0
    %v2811 = vsel %vm2728, %v2706, 0
    %v2814 = vsel %vm2728, %v2707, 0
    %v2817 = vsel %vm2728, %v2708, 0
    %v2820 = vsel %vm2728, %v2709, 0
    %v2823 = vsel %vm2728, %v2710, 0
    %vm2825 = vcmask 1044480
    %v2826 = vsel %vm2825, 4294967295, 65535
    %v2827 = vsel %vm602, %v2826, 0
    %v2829 = vand.u32 %v2726, %v2827
    %2831 = vmatprep.subr.bf16.mxu0 0
    %2832 = vmatpush1.bf16.msra.mxu0 0
    %2833 = vmatprep.subr.bf16.mxu0 0
    %2834 = vmatpush1.bf16.msra.mxu0 0
    %2835 = vmatprep.subr.bf16.mxu0 0
    %2836 = vmatpush1.bf16.msra.mxu0 0
    %2837 = vmatprep.subr.bf16.mxu0 0
    %2838 = vmatpush1.bf16.msra.mxu0 0
    %2839 = vmatprep.subr.bf16.mxu0 0
    %2840 = vmatpush1.bf16.msra.mxu0 0
    %2841 = vmatprep.subr.bf16.mxu0 0
    %2842 = vmatpush1.bf16.msra.mxu0 0
    %2843 = vmatprep.subr.bf16.mxu0 0
    %2844 = vmatpush1.bf16.msra.mxu0 %v2829
    %2845 = vmatprep.subr.bf16.mxu0 0
    %2846 = vmatpush1.bf16.msra.mxu0 %v2725
    %2847 = vmatprep.subr.bf16.mxu0 0
    %2848 = vmatpush2.bf16.msra.mxu0 0
    %2849 = vmatprep.subr.bf16.mxu0 0
    %2850 = vmatpush2.bf16.msra.mxu0 0
    %2851 = vmatprep.subr.bf16.mxu0 0
    %2852 = vmatpush2.bf16.msra.mxu0 0
    %2853 = vmatprep.subr.bf16.mxu0 0
    %2854 = vmatpush2.bf16.msra.mxu0 0
    %2855 = vmatprep.subr.bf16.mxu0 0
    %2856 = vmatpush2.bf16.msra.mxu0 0
    %2857 = vmatprep.subr.bf16.mxu0 0
    %2858 = vmatpush2.bf16.msra.mxu0 0
    %2859 = vmatprep.subr.bf16.mxu0 0
    %2860 = vmatpush2.bf16.msra.mxu0 0
    %2861 = vmatprep.subr.bf16.mxu0 0
    %2862 = vmatpush2.bf16.msra.mxu0 0
    %2863 = vmatprep.mubr.bf16.mxu0 0
    %2864 = vmatmul.mubr.bf16.gmra.mxu0 %v2730
    %v2865 = vpop.f32.mrf.mxu0
    %v2866 = vadd.f32 %v2715, %v2865
    %v2867 = vpop.f32.mrf.mxu0
    %v2868 = vpop.f32.mrf.mxu0
    %v2869 = vadd.f32 %v2715, %v2868
    %v2870 = vpop.f32.mrf.mxu0
    %2871 = vmatprep.mubr.bf16.mxu0 0
    %2872 = vmatmul.mubr.bf16.gmra.mxu0 %v2733
    %v2873 = vpop.f32.mrf.mxu0
    %v2874 = vadd.f32 %v2715, %v2873
    %v2875 = vpop.f32.mrf.mxu0
    %v2876 = vpop.f32.mrf.mxu0
    %v2877 = vadd.f32 %v2715, %v2876
    %v2878 = vpop.f32.mrf.mxu0
    %2879 = vmatprep.mubr.bf16.mxu0 0
    %2880 = vmatmul.mubr.bf16.gmra.mxu0 %v2736
    %v2881 = vpop.f32.mrf.mxu0
    %v2882 = vadd.f32 %v2715, %v2881
    %v2883 = vpop.f32.mrf.mxu0
    %v2884 = vpop.f32.mrf.mxu0
    %v2885 = vadd.f32 %v2715, %v2884
    %v2886 = vpop.f32.mrf.mxu0
    %2887 = vmatprep.mubr.bf16.mxu0 0
    %2888 = vmatmul.mubr.bf16.gmra.mxu0 %v2739
    %v2889 = vpop.f32.mrf.mxu0
    %v2890 = vadd.f32 %v2715, %v2889
    %v2891 = vpop.f32.mrf.mxu0
    %v2892 = vpop.f32.mrf.mxu0
    %v2893 = vadd.f32 %v2715, %v2892
    %v2894 = vpop.f32.mrf.mxu0
    %2895 = vmatprep.mubr.bf16.mxu0 0
    %2896 = vmatmul.mubr.bf16.gmra.mxu0 %v2742
    %v2897 = vpop.f32.mrf.mxu0
    %v2898 = vadd.f32 %v2715, %v2897
    %v2899 = vpop.f32.mrf.mxu0
    %v2900 = vpop.f32.mrf.mxu0
    %v2901 = vadd.f32 %v2715, %v2900
    %v2902 = vpop.f32.mrf.mxu0
    %2903 = vmatprep.mubr.bf16.mxu0 0
    %2904 = vmatmul.mubr.bf16.gmra.mxu0 %v2745
    %v2905 = vpop.f32.mrf.mxu0
    %v2906 = vadd.f32 %v2715, %v2905
    %v2907 = vpop.f32.mrf.mxu0
    %v2908 = vpop.f32.mrf.mxu0
    %v2909 = vadd.f32 %v2715, %v2908
    %v2910 = vpop.f32.mrf.mxu0
    %2911 = vmatprep.mubr.bf16.mxu0 0
    %2912 = vmatmul.mubr.bf16.gmra.mxu0 %v2748
    %v2913 = vpop.f32.mrf.mxu0
    %v2914 = vadd.f32 %v2715, %v2913
    %v2915 = vpop.f32.mrf.mxu0
    %v2916 = vpop.f32.mrf.mxu0
    %v2917 = vadd.f32 %v2715, %v2916
    %v2918 = vpop.f32.mrf.mxu0
    %2919 = vmatprep.mubr.bf16.mxu0 0
    %2920 = vmatmul.mubr.bf16.gmra.mxu0 %v2751
    %v2921 = vpop.f32.mrf.mxu0
    %v2922 = vadd.f32 %v2715, %v2921
    %v2923 = vpop.f32.mrf.mxu0
    %v2924 = vpop.f32.mrf.mxu0
    %v2925 = vadd.f32 %v2715, %v2924
    %v2926 = vpop.f32.mrf.mxu0
    %2927 = vmatprep.mubr.bf16.mxu0 0
    %2928 = vmatmul.mubr.bf16.gmra.mxu0 %v2754
    %v2929 = vpop.f32.mrf.mxu0
    %v2930 = vadd.f32 %v2715, %v2929
    %v2931 = vpop.f32.mrf.mxu0
    %v2932 = vpop.f32.mrf.mxu0
    %v2933 = vadd.f32 %v2715, %v2932
    %v2934 = vpop.f32.mrf.mxu0
    %2935 = vmatprep.mubr.bf16.mxu0 0
    %2936 = vmatmul.mubr.bf16.gmra.mxu0 %v2757
    %v2937 = vpop.f32.mrf.mxu0
    %v2938 = vadd.f32 %v2715, %v2937
    %v2939 = vpop.f32.mrf.mxu0
    %v2940 = vpop.f32.mrf.mxu0
    %v2941 = vadd.f32 %v2715, %v2940
    %v2942 = vpop.f32.mrf.mxu0
    %2943 = vmatprep.mubr.bf16.mxu0 0
    %2944 = vmatmul.mubr.bf16.gmra.mxu0 %v2760
    %v2945 = vpop.f32.mrf.mxu0
    %v2946 = vadd.f32 %v2715, %v2945
    %v2947 = vpop.f32.mrf.mxu0
    %v2948 = vpop.f32.mrf.mxu0
    %v2949 = vadd.f32 %v2715, %v2948
    %v2950 = vpop.f32.mrf.mxu0
    %2951 = vmatprep.mubr.bf16.mxu0 0
    %2952 = vmatmul.mubr.bf16.gmra.mxu0 %v2763
    %v2953 = vpop.f32.mrf.mxu0
    %v2954 = vadd.f32 %v2715, %v2953
    %v2955 = vpop.f32.mrf.mxu0
    %v2956 = vpop.f32.mrf.mxu0
    %v2957 = vadd.f32 %v2715, %v2956
    %v2958 = vpop.f32.mrf.mxu0
    %2959 = vmatprep.mubr.bf16.mxu0 0
    %2960 = vmatmul.mubr.bf16.gmra.mxu0 %v2766
    %v2961 = vpop.f32.mrf.mxu0
    %v2962 = vadd.f32 %v2715, %v2961
    %v2963 = vpop.f32.mrf.mxu0
    %v2964 = vpop.f32.mrf.mxu0
    %v2965 = vadd.f32 %v2715, %v2964
    %v2966 = vpop.f32.mrf.mxu0
    %2967 = vmatprep.mubr.bf16.mxu0 0
    %2968 = vmatmul.mubr.bf16.gmra.mxu0 %v2769
    %v2969 = vpop.f32.mrf.mxu0
    %v2970 = vadd.f32 %v2715, %v2969
    %v2971 = vpop.f32.mrf.mxu0
    %v2972 = vpop.f32.mrf.mxu0
    %v2973 = vadd.f32 %v2715, %v2972
    %v2974 = vpop.f32.mrf.mxu0
    %2975 = vmatprep.mubr.bf16.mxu0 0
    %2976 = vmatmul.mubr.bf16.gmra.mxu0 %v2772
    %v2977 = vpop.f32.mrf.mxu0
    %v2978 = vadd.f32 %v2715, %v2977
    %v2979 = vpop.f32.mrf.mxu0
    %v2980 = vpop.f32.mrf.mxu0
    %v2981 = vadd.f32 %v2715, %v2980
    %v2982 = vpop.f32.mrf.mxu0
    %2983 = vmatprep.mubr.bf16.mxu0 0
    %2984 = vmatmul.mubr.bf16.gmra.mxu0 %v2775
    %v2985 = vpop.f32.mrf.mxu0
    %v2986 = vadd.f32 %v2715, %v2985
    %v2987 = vpop.f32.mrf.mxu0
    %v2988 = vpop.f32.mrf.mxu0
    %v2989 = vadd.f32 %v2715, %v2988
    %v2990 = vpop.f32.mrf.mxu0
    %2991 = vmatprep.mubr.bf16.mxu0 0
    %2992 = vmatmul.mubr.bf16.gmra.mxu0 %v2778
    %v2993 = vpop.f32.mrf.mxu0
    %v2994 = vadd.f32 %v2715, %v2993
    %v2995 = vpop.f32.mrf.mxu0
    %v2996 = vpop.f32.mrf.mxu0
    %v2997 = vadd.f32 %v2715, %v2996
    %v2998 = vpop.f32.mrf.mxu0
    %2999 = vmatprep.mubr.bf16.mxu0 0
    %3000 = vmatmul.mubr.bf16.gmra.mxu0 %v2781
    %v3001 = vpop.f32.mrf.mxu0
    %v3002 = vadd.f32 %v2715, %v3001
    %v3003 = vpop.f32.mrf.mxu0
    %v3004 = vpop.f32.mrf.mxu0
    %v3005 = vadd.f32 %v2715, %v3004
    %v3006 = vpop.f32.mrf.mxu0
    %3007 = vmatprep.mubr.bf16.mxu0 0
    %3008 = vmatmul.mubr.bf16.gmra.mxu0 %v2784
    %v3009 = vpop.f32.mrf.mxu0
    %v3010 = vadd.f32 %v2715, %v3009
    %v3011 = vpop.f32.mrf.mxu0
    %v3012 = vpop.f32.mrf.mxu0
    %v3013 = vadd.f32 %v2715, %v3012
    %v3014 = vpop.f32.mrf.mxu0
    %3015 = vmatprep.mubr.bf16.mxu0 0
    %3016 = vmatmul.mubr.bf16.gmra.mxu0 %v2787
    %v3017 = vpop.f32.mrf.mxu0
    %v3018 = vadd.f32 %v2715, %v3017
    %v3019 = vpop.f32.mrf.mxu0
    %v3020 = vpop.f32.mrf.mxu0
    %v3021 = vadd.f32 %v2715, %v3020
    %v3022 = vpop.f32.mrf.mxu0
    %3023 = vmatprep.mubr.bf16.mxu0 0
    %3024 = vmatmul.mubr.bf16.gmra.mxu0 %v2790
    %v3025 = vpop.f32.mrf.mxu0
    %v3026 = vadd.f32 %v2715, %v3025
    %v3027 = vpop.f32.mrf.mxu0
    %v3028 = vpop.f32.mrf.mxu0
    %v3029 = vadd.f32 %v2715, %v3028
    %v3030 = vpop.f32.mrf.mxu0
    %3031 = vmatprep.mubr.bf16.mxu0 0
    %3032 = vmatmul.mubr.bf16.gmra.mxu0 %v2793
    %v3033 = vpop.f32.mrf.mxu0
    %v3034 = vadd.f32 %v2715, %v3033
    %v3035 = vpop.f32.mrf.mxu0
    %v3036 = vpop.f32.mrf.mxu0
    %v3037 = vadd.f32 %v2715, %v3036
    %v3038 = vpop.f32.mrf.mxu0
    %3039 = vmatprep.mubr.bf16.mxu0 0
    %3040 = vmatmul.mubr.bf16.gmra.mxu0 %v2796
    %v3041 = vpop.f32.mrf.mxu0
    %v3042 = vadd.f32 %v2715, %v3041
    %v3043 = vpop.f32.mrf.mxu0
    %v3044 = vpop.f32.mrf.mxu0
    %v3045 = vadd.f32 %v2715, %v3044
    %v3046 = vpop.f32.mrf.mxu0
    %3047 = vmatprep.mubr.bf16.mxu0 0
    %3048 = vmatmul.mubr.bf16.gmra.mxu0 %v2799
    %v3049 = vpop.f32.mrf.mxu0
    %v3050 = vadd.f32 %v2715, %v3049
    %v3051 = vpop.f32.mrf.mxu0
    %v3052 = vpop.f32.mrf.mxu0
    %v3053 = vadd.f32 %v2715, %v3052
    %v3054 = vpop.f32.mrf.mxu0
    %3055 = vmatprep.mubr.bf16.mxu0 0
    %3056 = vmatmul.mubr.bf16.gmra.mxu0 %v2802
    %v3057 = vpop.f32.mrf.mxu0
    %v3058 = vadd.f32 %v2715, %v3057
    %v3059 = vpop.f32.mrf.mxu0
    %v3060 = vpop.f32.mrf.mxu0
    %v3061 = vadd.f32 %v2715, %v3060
    %v3062 = vpop.f32.mrf.mxu0
    %3063 = vmatprep.mubr.bf16.mxu0 0
    %3064 = vmatmul.mubr.bf16.gmra.mxu0 %v2805
    %v3065 = vpop.f32.mrf.mxu0
    %v3066 = vadd.f32 %v2715, %v3065
    %v3067 = vpop.f32.mrf.mxu0
    %v3068 = vpop.f32.mrf.mxu0
    %v3069 = vadd.f32 %v2715, %v3068
    %v3070 = vpop.f32.mrf.mxu0
    %3071 = vmatprep.mubr.bf16.mxu0 0
    %3072 = vmatmul.mubr.bf16.gmra.mxu0 %v2808
    %v3073 = vpop.f32.mrf.mxu0
    %v3074 = vadd.f32 %v2715, %v3073
    %v3075 = vpop.f32.mrf.mxu0
    %v3076 = vpop.f32.mrf.mxu0
    %v3077 = vadd.f32 %v2715, %v3076
    %v3078 = vpop.f32.mrf.mxu0
    %3079 = vmatprep.mubr.bf16.mxu0 0
    %3080 = vmatmul.mubr.bf16.gmra.mxu0 %v2811
    %v3081 = vpop.f32.mrf.mxu0
    %v3082 = vadd.f32 %v2715, %v3081
    %v3083 = vpop.f32.mrf.mxu0
    %v3084 = vpop.f32.mrf.mxu0
    %v3085 = vadd.f32 %v2715, %v3084
    %v3086 = vpop.f32.mrf.mxu0
    %3087 = vmatprep.mubr.bf16.mxu0 0
    %3088 = vmatmul.mubr.bf16.gmra.mxu0 %v2814
    %v3089 = vpop.f32.mrf.mxu0
    %v3090 = vadd.f32 %v2715, %v3089
    %v3091 = vpop.f32.mrf.mxu0
    %v3092 = vpop.f32.mrf.mxu0
    %v3093 = vadd.f32 %v2715, %v3092
    %v3094 = vpop.f32.mrf.mxu0
    %3095 = vmatprep.mubr.bf16.mxu0 0
    %3096 = vmatmul.mubr.bf16.gmra.mxu0 %v2817
    %v3097 = vpop.f32.mrf.mxu0
    %v3098 = vadd.f32 %v2715, %v3097
    %v3099 = vpop.f32.mrf.mxu0
    %v3100 = vpop.f32.mrf.mxu0
    %v3101 = vadd.f32 %v2715, %v3100
    %v3102 = vpop.f32.mrf.mxu0
    %3103 = vmatprep.mubr.bf16.mxu0 0
    %3104 = vmatmul.mubr.bf16.gmra.mxu0 %v2820
    %v3105 = vpop.f32.mrf.mxu0
    %v3106 = vadd.f32 %v2715, %v3105
    %v3107 = vpop.f32.mrf.mxu0
    %v3108 = vpop.f32.mrf.mxu0
    %v3109 = vadd.f32 %v2715, %v3108
    %v3110 = vpop.f32.mrf.mxu0
    %3111 = vmatprep.mubr.bf16.mxu0 0
    %3112 = vmatmul.mubr.bf16.gmra.mxu0 %v2823
    %v3113 = vpop.f32.mrf.mxu0
    %v3114 = vadd.f32 %v2715, %v3113
    %v3115 = vpop.f32.mrf.mxu0
    %v3116 = vpop.f32.mrf.mxu0
    %v3117 = vadd.f32 %v2715, %v3116
    %v3118 = vpop.f32.mrf.mxu0
    %3119 = vdwg.mxu0
    %v3184 = vcombine.high %v2866, %v2866
    %v3186 = vunpack.c.l.s4 1983009808
    %v3187 = vunpack.c.0.s8 %v3186
    %v3188 = vlaneseq
    %v3189 = vshrl.u32 %v3188, 7
    %v3190 = vsub.s32 %v3187, %v3189
    %v3191 = vrot.slane %v2866, %v3190
    %v3193 = vunpack.c.l.s4 1983009808
    %v3194 = vunpack.c.0.s8 %v3193
    %v3195 = vlaneseq
    %v3196 = vshrl.u32 %v3195, 7
    %v3197 = vsub.s32 %v3194, %v3196
    %v3198 = vrot.slane %v3184, %v3197
    %v3199 = vcombine.high %v3191, %v3191
    %v3200 = vcombine.high %v3198, %v3198
    %v3201 = vcombine.high %v2869, %v2869
    %v3203 = vunpack.c.l.s4 1983009808
    %v3204 = vunpack.c.0.s8 %v3203
    %v3205 = vlaneseq
    %v3206 = vshrl.u32 %v3205, 7
    %v3207 = vsub.s32 %v3204, %v3206
    %v3208 = vrot.slane %v2869, %v3207
    %v3210 = vunpack.c.l.s4 1983009808
    %v3211 = vunpack.c.0.s8 %v3210
    %v3212 = vlaneseq
    %v3213 = vshrl.u32 %v3212, 7
    %v3214 = vsub.s32 %v3211, %v3213
    %v3215 = vrot.slane %v3201, %v3214
    %v3216 = vcombine.high %v3208, %v3208
    %v3217 = vcombine.high %v3215, %v3215
    %v3218 = vcombine.high %v2874, %v2874
    %v3220 = vunpack.c.l.s4 1983009808
    %v3221 = vunpack.c.0.s8 %v3220
    %v3222 = vlaneseq
    %v3223 = vshrl.u32 %v3222, 7
    %v3224 = vsub.s32 %v3221, %v3223
    %v3225 = vrot.slane %v2874, %v3224
    %v3227 = vunpack.c.l.s4 1983009808
    %v3228 = vunpack.c.0.s8 %v3227
    %v3229 = vlaneseq
    %v3230 = vshrl.u32 %v3229, 7
    %v3231 = vsub.s32 %v3228, %v3230
    %v3232 = vrot.slane %v3218, %v3231
    %v3233 = vcombine.high %v3225, %v3225
    %v3234 = vcombine.high %v3232, %v3232
    %v3235 = vcombine.high %v2877, %v2877
    %v3237 = vunpack.c.l.s4 1983009808
    %v3238 = vunpack.c.0.s8 %v3237
    %v3239 = vlaneseq
    %v3240 = vshrl.u32 %v3239, 7
    %v3241 = vsub.s32 %v3238, %v3240
    %v3242 = vrot.slane %v2877, %v3241
    %v3244 = vunpack.c.l.s4 1983009808
    %v3245 = vunpack.c.0.s8 %v3244
    %v3246 = vlaneseq
    %v3247 = vshrl.u32 %v3246, 7
    %v3248 = vsub.s32 %v3245, %v3247
    %v3249 = vrot.slane %v3235, %v3248
    %v3250 = vcombine.high %v3242, %v3242
    %v3251 = vcombine.high %v3249, %v3249
    %v3252 = vcombine.high %v2882, %v2882
    %v3254 = vunpack.c.l.s4 1983009808
    %v3255 = vunpack.c.0.s8 %v3254
    %v3256 = vlaneseq
    %v3257 = vshrl.u32 %v3256, 7
    %v3258 = vsub.s32 %v3255, %v3257
    %v3259 = vrot.slane %v2882, %v3258
    %v3261 = vunpack.c.l.s4 1983009808
    %v3262 = vunpack.c.0.s8 %v3261
    %v3263 = vlaneseq
    %v3264 = vshrl.u32 %v3263, 7
    %v3265 = vsub.s32 %v3262, %v3264
    %v3266 = vrot.slane %v3252, %v3265
    %v3267 = vcombine.high %v3259, %v3259
    %v3268 = vcombine.high %v3266, %v3266
    %v3269 = vcombine.high %v2885, %v2885
    %v3271 = vunpack.c.l.s4 1983009808
    %v3272 = vunpack.c.0.s8 %v3271
    %v3273 = vlaneseq
    %v3274 = vshrl.u32 %v3273, 7
    %v3275 = vsub.s32 %v3272, %v3274
    %v3276 = vrot.slane %v2885, %v3275
    %v3278 = vunpack.c.l.s4 1983009808
    %v3279 = vunpack.c.0.s8 %v3278
    %v3280 = vlaneseq
    %v3281 = vshrl.u32 %v3280, 7
    %v3282 = vsub.s32 %v3279, %v3281
    %v3283 = vrot.slane %v3269, %v3282
    %v3284 = vcombine.high %v3276, %v3276
    %v3285 = vcombine.high %v3283, %v3283
    %v3286 = vcombine.high %v2890, %v2890
    %v3288 = vunpack.c.l.s4 1983009808
    %v3289 = vunpack.c.0.s8 %v3288
    %v3290 = vlaneseq
    %v3291 = vshrl.u32 %v3290, 7
    %v3292 = vsub.s32 %v3289, %v3291
    %v3293 = vrot.slane %v2890, %v3292
    %v3295 = vunpack.c.l.s4 1983009808
    %v3296 = vunpack.c.0.s8 %v3295
    %v3297 = vlaneseq
    %v3298 = vshrl.u32 %v3297, 7
    %v3299 = vsub.s32 %v3296, %v3298
    %v3300 = vrot.slane %v3286, %v3299
    %v3301 = vcombine.high %v3293, %v3293
    %v3302 = vcombine.high %v3300, %v3300
    %v3303 = vcombine.high %v2893, %v2893
    %v3305 = vunpack.c.l.s4 1983009808
    %v3306 = vunpack.c.0.s8 %v3305
    %v3307 = vlaneseq
    %v3308 = vshrl.u32 %v3307, 7
    %v3309 = vsub.s32 %v3306, %v3308
    %v3310 = vrot.slane %v2893, %v3309
    %v3312 = vunpack.c.l.s4 1983009808
    %v3313 = vunpack.c.0.s8 %v3312
    %v3314 = vlaneseq
    %v3315 = vshrl.u32 %v3314, 7
    %v3316 = vsub.s32 %v3313, %v3315
    %v3317 = vrot.slane %v3303, %v3316
    %v3318 = vcombine.high %v3310, %v3310
    %v3319 = vcombine.high %v3317, %v3317
    %v3320 = vcombine.high %v2898, %v2898
    %v3322 = vunpack.c.l.s4 1983009808
    %v3323 = vunpack.c.0.s8 %v3322
    %v3324 = vlaneseq
    %v3325 = vshrl.u32 %v3324, 7
    %v3326 = vsub.s32 %v3323, %v3325
    %v3327 = vrot.slane %v2898, %v3326
    %v3329 = vunpack.c.l.s4 1983009808
    %v3330 = vunpack.c.0.s8 %v3329
    %v3331 = vlaneseq
    %v3332 = vshrl.u32 %v3331, 7
    %v3333 = vsub.s32 %v3330, %v3332
    %v3334 = vrot.slane %v3320, %v3333
    %v3335 = vcombine.high %v3327, %v3327
    %v3336 = vcombine.high %v3334, %v3334
    %v3337 = vcombine.high %v2901, %v2901
    %v3339 = vunpack.c.l.s4 1983009808
    %v3340 = vunpack.c.0.s8 %v3339
    %v3341 = vlaneseq
    %v3342 = vshrl.u32 %v3341, 7
    %v3343 = vsub.s32 %v3340, %v3342
    %v3344 = vrot.slane %v2901, %v3343
    %v3346 = vunpack.c.l.s4 1983009808
    %v3347 = vunpack.c.0.s8 %v3346
    %v3348 = vlaneseq
    %v3349 = vshrl.u32 %v3348, 7
    %v3350 = vsub.s32 %v3347, %v3349
    %v3351 = vrot.slane %v3337, %v3350
    %v3352 = vcombine.high %v3344, %v3344
    %v3353 = vcombine.high %v3351, %v3351
    %v3354 = vcombine.high %v2906, %v2906
    %v3356 = vunpack.c.l.s4 1983009808
    %v3357 = vunpack.c.0.s8 %v3356
    %v3358 = vlaneseq
    %v3359 = vshrl.u32 %v3358, 7
    %v3360 = vsub.s32 %v3357, %v3359
    %v3361 = vrot.slane %v2906, %v3360
    %v3363 = vunpack.c.l.s4 1983009808
    %v3364 = vunpack.c.0.s8 %v3363
    %v3365 = vlaneseq
    %v3366 = vshrl.u32 %v3365, 7
    %v3367 = vsub.s32 %v3364, %v3366
    %v3368 = vrot.slane %v3354, %v3367
    %v3369 = vcombine.high %v3361, %v3361
    %v3370 = vcombine.high %v3368, %v3368
    %v3371 = vcombine.high %v2909, %v2909
    %v3373 = vunpack.c.l.s4 1983009808
    %v3374 = vunpack.c.0.s8 %v3373
    %v3375 = vlaneseq
    %v3376 = vshrl.u32 %v3375, 7
    %v3377 = vsub.s32 %v3374, %v3376
    %v3378 = vrot.slane %v2909, %v3377
    %v3380 = vunpack.c.l.s4 1983009808
    %v3381 = vunpack.c.0.s8 %v3380
    %v3382 = vlaneseq
    %v3383 = vshrl.u32 %v3382, 7
    %v3384 = vsub.s32 %v3381, %v3383
    %v3385 = vrot.slane %v3371, %v3384
    %v3386 = vcombine.high %v3378, %v3378
    %v3387 = vcombine.high %v3385, %v3385
    %v3388 = vcombine.high %v2914, %v2914
    %v3390 = vunpack.c.l.s4 1983009808
    %v3391 = vunpack.c.0.s8 %v3390
    %v3392 = vlaneseq
    %v3393 = vshrl.u32 %v3392, 7
    %v3394 = vsub.s32 %v3391, %v3393
    %v3395 = vrot.slane %v2914, %v3394
    %v3397 = vunpack.c.l.s4 1983009808
    %v3398 = vunpack.c.0.s8 %v3397
    %v3399 = vlaneseq
    %v3400 = vshrl.u32 %v3399, 7
    %v3401 = vsub.s32 %v3398, %v3400
    %v3402 = vrot.slane %v3388, %v3401
    %v3403 = vcombine.high %v3395, %v3395
    %v3404 = vcombine.high %v3402, %v3402
    %v3405 = vcombine.high %v2917, %v2917
    %v3407 = vunpack.c.l.s4 1983009808
    %v3408 = vunpack.c.0.s8 %v3407
    %v3409 = vlaneseq
    %v3410 = vshrl.u32 %v3409, 7
    %v3411 = vsub.s32 %v3408, %v3410
    %v3412 = vrot.slane %v2917, %v3411
    %v3414 = vunpack.c.l.s4 1983009808
    %v3415 = vunpack.c.0.s8 %v3414
    %v3416 = vlaneseq
    %v3417 = vshrl.u32 %v3416, 7
    %v3418 = vsub.s32 %v3415, %v3417
    %v3419 = vrot.slane %v3405, %v3418
    %v3420 = vcombine.high %v3412, %v3412
    %v3421 = vcombine.high %v3419, %v3419
    %v3422 = vcombine.high %v2922, %v2922
    %v3424 = vunpack.c.l.s4 1983009808
    %v3425 = vunpack.c.0.s8 %v3424
    %v3426 = vlaneseq
    %v3427 = vshrl.u32 %v3426, 7
    %v3428 = vsub.s32 %v3425, %v3427
    %v3429 = vrot.slane %v2922, %v3428
    %v3431 = vunpack.c.l.s4 1983009808
    %v3432 = vunpack.c.0.s8 %v3431
    %v3433 = vlaneseq
    %v3434 = vshrl.u32 %v3433, 7
    %v3435 = vsub.s32 %v3432, %v3434
    %v3436 = vrot.slane %v3422, %v3435
    %v3437 = vcombine.high %v3429, %v3429
    %v3438 = vcombine.high %v3436, %v3436
    %v3439 = vcombine.high %v2925, %v2925
    %v3441 = vunpack.c.l.s4 1983009808
    %v3442 = vunpack.c.0.s8 %v3441
    %v3443 = vlaneseq
    %v3444 = vshrl.u32 %v3443, 7
    %v3445 = vsub.s32 %v3442, %v3444
    %v3446 = vrot.slane %v2925, %v3445
    %v3448 = vunpack.c.l.s4 1983009808
    %v3449 = vunpack.c.0.s8 %v3448
    %v3450 = vlaneseq
    %v3451 = vshrl.u32 %v3450, 7
    %v3452 = vsub.s32 %v3449, %v3451
    %v3453 = vrot.slane %v3439, %v3452
    %v3454 = vcombine.high %v3446, %v3446
    %v3455 = vcombine.high %v3453, %v3453
    %v3456 = vcombine.high %v2930, %v2930
    %v3458 = vunpack.c.l.s4 1983009808
    %v3459 = vunpack.c.0.s8 %v3458
    %v3460 = vlaneseq
    %v3461 = vshrl.u32 %v3460, 7
    %v3462 = vsub.s32 %v3459, %v3461
    %v3463 = vrot.slane %v2930, %v3462
    %v3465 = vunpack.c.l.s4 1983009808
    %v3466 = vunpack.c.0.s8 %v3465
    %v3467 = vlaneseq
    %v3468 = vshrl.u32 %v3467, 7
    %v3469 = vsub.s32 %v3466, %v3468
    %v3470 = vrot.slane %v3456, %v3469
    %v3471 = vcombine.high %v3463, %v3463
    %v3472 = vcombine.high %v3470, %v3470
    %v3473 = vcombine.high %v2933, %v2933
    %v3475 = vunpack.c.l.s4 1983009808
    %v3476 = vunpack.c.0.s8 %v3475
    %v3477 = vlaneseq
    %v3478 = vshrl.u32 %v3477, 7
    %v3479 = vsub.s32 %v3476, %v3478
    %v3480 = vrot.slane %v2933, %v3479
    %v3482 = vunpack.c.l.s4 1983009808
    %v3483 = vunpack.c.0.s8 %v3482
    %v3484 = vlaneseq
    %v3485 = vshrl.u32 %v3484, 7
    %v3486 = vsub.s32 %v3483, %v3485
    %v3487 = vrot.slane %v3473, %v3486
    %v3488 = vcombine.high %v3480, %v3480
    %v3489 = vcombine.high %v3487, %v3487
    %v3490 = vcombine.high %v2938, %v2938
    %v3492 = vunpack.c.l.s4 1983009808
    %v3493 = vunpack.c.0.s8 %v3492
    %v3494 = vlaneseq
    %v3495 = vshrl.u32 %v3494, 7
    %v3496 = vsub.s32 %v3493, %v3495
    %v3497 = vrot.slane %v2938, %v3496
    %v3499 = vunpack.c.l.s4 1983009808
    %v3500 = vunpack.c.0.s8 %v3499
    %v3501 = vlaneseq
    %v3502 = vshrl.u32 %v3501, 7
    %v3503 = vsub.s32 %v3500, %v3502
    %v3504 = vrot.slane %v3490, %v3503
    %v3505 = vcombine.high %v3497, %v3497
    %v3506 = vcombine.high %v3504, %v3504
    %v3507 = vcombine.high %v2941, %v2941
    %v3509 = vunpack.c.l.s4 1983009808
    %v3510 = vunpack.c.0.s8 %v3509
    %v3511 = vlaneseq
    %v3512 = vshrl.u32 %v3511, 7
    %v3513 = vsub.s32 %v3510, %v3512
    %v3514 = vrot.slane %v2941, %v3513
    %v3516 = vunpack.c.l.s4 1983009808
    %v3517 = vunpack.c.0.s8 %v3516
    %v3518 = vlaneseq
    %v3519 = vshrl.u32 %v3518, 7
    %v3520 = vsub.s32 %v3517, %v3519
    %v3521 = vrot.slane %v3507, %v3520
    %v3522 = vcombine.high %v3514, %v3514
    %v3523 = vcombine.high %v3521, %v3521
    %v3524 = vcombine.high %v2946, %v2946
    %v3526 = vunpack.c.l.s4 1983009808
    %v3527 = vunpack.c.0.s8 %v3526
    %v3528 = vlaneseq
    %v3529 = vshrl.u32 %v3528, 7
    %v3530 = vsub.s32 %v3527, %v3529
    %v3531 = vrot.slane %v2946, %v3530
    %v3533 = vunpack.c.l.s4 1983009808
    %v3534 = vunpack.c.0.s8 %v3533
    %v3535 = vlaneseq
    %v3536 = vshrl.u32 %v3535, 7
    %v3537 = vsub.s32 %v3534, %v3536
    %v3538 = vrot.slane %v3524, %v3537
    %v3539 = vcombine.high %v3531, %v3531
    %v3540 = vcombine.high %v3538, %v3538
    %v3541 = vcombine.high %v2949, %v2949
    %v3543 = vunpack.c.l.s4 1983009808
    %v3544 = vunpack.c.0.s8 %v3543
    %v3545 = vlaneseq
    %v3546 = vshrl.u32 %v3545, 7
    %v3547 = vsub.s32 %v3544, %v3546
    %v3548 = vrot.slane %v2949, %v3547
    %v3550 = vunpack.c.l.s4 1983009808
    %v3551 = vunpack.c.0.s8 %v3550
    %v3552 = vlaneseq
    %v3553 = vshrl.u32 %v3552, 7
    %v3554 = vsub.s32 %v3551, %v3553
    %v3555 = vrot.slane %v3541, %v3554
    %v3556 = vcombine.high %v3548, %v3548
    %v3557 = vcombine.high %v3555, %v3555
    %v3558 = vcombine.high %v2954, %v2954
    %v3560 = vunpack.c.l.s4 1983009808
    %v3561 = vunpack.c.0.s8 %v3560
    %v3562 = vlaneseq
    %v3563 = vshrl.u32 %v3562, 7
    %v3564 = vsub.s32 %v3561, %v3563
    %v3565 = vrot.slane %v2954, %v3564
    %v3567 = vunpack.c.l.s4 1983009808
    %v3568 = vunpack.c.0.s8 %v3567
    %v3569 = vlaneseq
    %v3570 = vshrl.u32 %v3569, 7
    %v3571 = vsub.s32 %v3568, %v3570
    %v3572 = vrot.slane %v3558, %v3571
    %v3573 = vcombine.high %v3565, %v3565
    %v3574 = vcombine.high %v3572, %v3572
    %v3575 = vcombine.high %v2957, %v2957
    %v3577 = vunpack.c.l.s4 1983009808
    %v3578 = vunpack.c.0.s8 %v3577
    %v3579 = vlaneseq
    %v3580 = vshrl.u32 %v3579, 7
    %v3581 = vsub.s32 %v3578, %v3580
    %v3582 = vrot.slane %v2957, %v3581
    %v3584 = vunpack.c.l.s4 1983009808
    %v3585 = vunpack.c.0.s8 %v3584
    %v3586 = vlaneseq
    %v3587 = vshrl.u32 %v3586, 7
    %v3588 = vsub.s32 %v3585, %v3587
    %v3589 = vrot.slane %v3575, %v3588
    %v3590 = vcombine.high %v3582, %v3582
    %v3591 = vcombine.high %v3589, %v3589
    %v3592 = vcombine.high %v2962, %v2962
    %v3594 = vunpack.c.l.s4 1983009808
    %v3595 = vunpack.c.0.s8 %v3594
    %v3596 = vlaneseq
    %v3597 = vshrl.u32 %v3596, 7
    %v3598 = vsub.s32 %v3595, %v3597
    %v3599 = vrot.slane %v2962, %v3598
    %v3601 = vunpack.c.l.s4 1983009808
    %v3602 = vunpack.c.0.s8 %v3601
    %v3603 = vlaneseq
    %v3604 = vshrl.u32 %v3603, 7
    %v3605 = vsub.s32 %v3602, %v3604
    %v3606 = vrot.slane %v3592, %v3605
    %v3607 = vcombine.high %v3599, %v3599
    %v3608 = vcombine.high %v3606, %v3606
    %v3609 = vcombine.high %v2965, %v2965
    %v3611 = vunpack.c.l.s4 1983009808
    %v3612 = vunpack.c.0.s8 %v3611
    %v3613 = vlaneseq
    %v3614 = vshrl.u32 %v3613, 7
    %v3615 = vsub.s32 %v3612, %v3614
    %v3616 = vrot.slane %v2965, %v3615
    %v3618 = vunpack.c.l.s4 1983009808
    %v3619 = vunpack.c.0.s8 %v3618
    %v3620 = vlaneseq
    %v3621 = vshrl.u32 %v3620, 7
    %v3622 = vsub.s32 %v3619, %v3621
    %v3623 = vrot.slane %v3609, %v3622
    %v3624 = vcombine.high %v3616, %v3616
    %v3625 = vcombine.high %v3623, %v3623
    %v3626 = vcombine.high %v2970, %v2970
    %v3628 = vunpack.c.l.s4 1983009808
    %v3629 = vunpack.c.0.s8 %v3628
    %v3630 = vlaneseq
    %v3631 = vshrl.u32 %v3630, 7
    %v3632 = vsub.s32 %v3629, %v3631
    %v3633 = vrot.slane %v2970, %v3632
    %v3635 = vunpack.c.l.s4 1983009808
    %v3636 = vunpack.c.0.s8 %v3635
    %v3637 = vlaneseq
    %v3638 = vshrl.u32 %v3637, 7
    %v3639 = vsub.s32 %v3636, %v3638
    %v3640 = vrot.slane %v3626, %v3639
    %v3641 = vcombine.high %v3633, %v3633
    %v3642 = vcombine.high %v3640, %v3640
    %v3643 = vcombine.high %v2973, %v2973
    %v3645 = vunpack.c.l.s4 1983009808
    %v3646 = vunpack.c.0.s8 %v3645
    %v3647 = vlaneseq
    %v3648 = vshrl.u32 %v3647, 7
    %v3649 = vsub.s32 %v3646, %v3648
    %v3650 = vrot.slane %v2973, %v3649
    %v3652 = vunpack.c.l.s4 1983009808
    %v3653 = vunpack.c.0.s8 %v3652
    %v3654 = vlaneseq
    %v3655 = vshrl.u32 %v3654, 7
    %v3656 = vsub.s32 %v3653, %v3655
    %v3657 = vrot.slane %v3643, %v3656
    %v3658 = vcombine.high %v3650, %v3650
    %v3659 = vcombine.high %v3657, %v3657
    %v3660 = vcombine.high %v2978, %v2978
    %v3662 = vunpack.c.l.s4 1983009808
    %v3663 = vunpack.c.0.s8 %v3662
    %v3664 = vlaneseq
    %v3665 = vshrl.u32 %v3664, 7
    %v3666 = vsub.s32 %v3663, %v3665
    %v3667 = vrot.slane %v2978, %v3666
    %v3669 = vunpack.c.l.s4 1983009808
    %v3670 = vunpack.c.0.s8 %v3669
    %v3671 = vlaneseq
    %v3672 = vshrl.u32 %v3671, 7
    %v3673 = vsub.s32 %v3670, %v3672
    %v3674 = vrot.slane %v3660, %v3673
    %v3675 = vcombine.high %v3667, %v3667
    %v3676 = vcombine.high %v3674, %v3674
    %v3677 = vcombine.high %v2981, %v2981
    %v3679 = vunpack.c.l.s4 1983009808
    %v3680 = vunpack.c.0.s8 %v3679
    %v3681 = vlaneseq
    %v3682 = vshrl.u32 %v3681, 7
    %v3683 = vsub.s32 %v3680, %v3682
    %v3684 = vrot.slane %v2981, %v3683
    %v3686 = vunpack.c.l.s4 1983009808
    %v3687 = vunpack.c.0.s8 %v3686
    %v3688 = vlaneseq
    %v3689 = vshrl.u32 %v3688, 7
    %v3690 = vsub.s32 %v3687, %v3689
    %v3691 = vrot.slane %v3677, %v3690
    %v3692 = vcombine.high %v3684, %v3684
    %v3693 = vcombine.high %v3691, %v3691
    %v3694 = vcombine.high %v2986, %v2986
    %v3696 = vunpack.c.l.s4 1983009808
    %v3697 = vunpack.c.0.s8 %v3696
    %v3698 = vlaneseq
    %v3699 = vshrl.u32 %v3698, 7
    %v3700 = vsub.s32 %v3697, %v3699
    %v3701 = vrot.slane %v2986, %v3700
    %v3703 = vunpack.c.l.s4 1983009808
    %v3704 = vunpack.c.0.s8 %v3703
    %v3705 = vlaneseq
    %v3706 = vshrl.u32 %v3705, 7
    %v3707 = vsub.s32 %v3704, %v3706
    %v3708 = vrot.slane %v3694, %v3707
    %v3709 = vcombine.high %v3701, %v3701
    %v3710 = vcombine.high %v3708, %v3708
    %v3711 = vcombine.high %v2989, %v2989
    %v3713 = vunpack.c.l.s4 1983009808
    %v3714 = vunpack.c.0.s8 %v3713
    %v3715 = vlaneseq
    %v3716 = vshrl.u32 %v3715, 7
    %v3717 = vsub.s32 %v3714, %v3716
    %v3718 = vrot.slane %v2989, %v3717
    %v3720 = vunpack.c.l.s4 1983009808
    %v3721 = vunpack.c.0.s8 %v3720
    %v3722 = vlaneseq
    %v3723 = vshrl.u32 %v3722, 7
    %v3724 = vsub.s32 %v3721, %v3723
    %v3725 = vrot.slane %v3711, %v3724
    %v3726 = vcombine.high %v3718, %v3718
    %v3727 = vcombine.high %v3725, %v3725
    %v3728 = vcombine.high %v2994, %v2994
    %v3730 = vunpack.c.l.s4 1983009808
    %v3731 = vunpack.c.0.s8 %v3730
    %v3732 = vlaneseq
    %v3733 = vshrl.u32 %v3732, 7
    %v3734 = vsub.s32 %v3731, %v3733
    %v3735 = vrot.slane %v2994, %v3734
    %v3737 = vunpack.c.l.s4 1983009808
    %v3738 = vunpack.c.0.s8 %v3737
    %v3739 = vlaneseq
    %v3740 = vshrl.u32 %v3739, 7
    %v3741 = vsub.s32 %v3738, %v3740
    %v3742 = vrot.slane %v3728, %v3741
    %v3743 = vcombine.high %v3735, %v3735
    %v3744 = vcombine.high %v3742, %v3742
    %v3745 = vcombine.high %v2997, %v2997
    %v3747 = vunpack.c.l.s4 1983009808
    %v3748 = vunpack.c.0.s8 %v3747
    %v3749 = vlaneseq
    %v3750 = vshrl.u32 %v3749, 7
    %v3751 = vsub.s32 %v3748, %v3750
    %v3752 = vrot.slane %v2997, %v3751
    %v3754 = vunpack.c.l.s4 1983009808
    %v3755 = vunpack.c.0.s8 %v3754
    %v3756 = vlaneseq
    %v3757 = vshrl.u32 %v3756, 7
    %v3758 = vsub.s32 %v3755, %v3757
    %v3759 = vrot.slane %v3745, %v3758
    %v3760 = vcombine.high %v3752, %v3752
    %v3761 = vcombine.high %v3759, %v3759
    %v3762 = vcombine.high %v3002, %v3002
    %v3764 = vunpack.c.l.s4 1983009808
    %v3765 = vunpack.c.0.s8 %v3764
    %v3766 = vlaneseq
    %v3767 = vshrl.u32 %v3766, 7
    %v3768 = vsub.s32 %v3765, %v3767
    %v3769 = vrot.slane %v3002, %v3768
    %v3771 = vunpack.c.l.s4 1983009808
    %v3772 = vunpack.c.0.s8 %v3771
    %v3773 = vlaneseq
    %v3774 = vshrl.u32 %v3773, 7
    %v3775 = vsub.s32 %v3772, %v3774
    %v3776 = vrot.slane %v3762, %v3775
    %v3777 = vcombine.high %v3769, %v3769
    %v3778 = vcombine.high %v3776, %v3776
    %v3779 = vcombine.high %v3005, %v3005
    %v3781 = vunpack.c.l.s4 1983009808
    %v3782 = vunpack.c.0.s8 %v3781
    %v3783 = vlaneseq
    %v3784 = vshrl.u32 %v3783, 7
    %v3785 = vsub.s32 %v3782, %v3784
    %v3786 = vrot.slane %v3005, %v3785
    %v3788 = vunpack.c.l.s4 1983009808
    %v3789 = vunpack.c.0.s8 %v3788
    %v3790 = vlaneseq
    %v3791 = vshrl.u32 %v3790, 7
    %v3792 = vsub.s32 %v3789, %v3791
    %v3793 = vrot.slane %v3779, %v3792
    %v3794 = vcombine.high %v3786, %v3786
    %v3795 = vcombine.high %v3793, %v3793
    %v3796 = vcombine.high %v3010, %v3010
    %v3798 = vunpack.c.l.s4 1983009808
    %v3799 = vunpack.c.0.s8 %v3798
    %v3800 = vlaneseq
    %v3801 = vshrl.u32 %v3800, 7
    %v3802 = vsub.s32 %v3799, %v3801
    %v3803 = vrot.slane %v3010, %v3802
    %v3805 = vunpack.c.l.s4 1983009808
    %v3806 = vunpack.c.0.s8 %v3805
    %v3807 = vlaneseq
    %v3808 = vshrl.u32 %v3807, 7
    %v3809 = vsub.s32 %v3806, %v3808
    %v3810 = vrot.slane %v3796, %v3809
    %v3811 = vcombine.high %v3803, %v3803
    %v3812 = vcombine.high %v3810, %v3810
    %v3813 = vcombine.high %v3013, %v3013
    %v3815 = vunpack.c.l.s4 1983009808
    %v3816 = vunpack.c.0.s8 %v3815
    %v3817 = vlaneseq
    %v3818 = vshrl.u32 %v3817, 7
    %v3819 = vsub.s32 %v3816, %v3818
    %v3820 = vrot.slane %v3013, %v3819
    %v3822 = vunpack.c.l.s4 1983009808
    %v3823 = vunpack.c.0.s8 %v3822
    %v3824 = vlaneseq
    %v3825 = vshrl.u32 %v3824, 7
    %v3826 = vsub.s32 %v3823, %v3825
    %v3827 = vrot.slane %v3813, %v3826
    %v3828 = vcombine.high %v3820, %v3820
    %v3829 = vcombine.high %v3827, %v3827
    %v3830 = vcombine.high %v3018, %v3018
    %v3832 = vunpack.c.l.s4 1983009808
    %v3833 = vunpack.c.0.s8 %v3832
    %v3834 = vlaneseq
    %v3835 = vshrl.u32 %v3834, 7
    %v3836 = vsub.s32 %v3833, %v3835
    %v3837 = vrot.slane %v3018, %v3836
    %v3839 = vunpack.c.l.s4 1983009808
    %v3840 = vunpack.c.0.s8 %v3839
    %v3841 = vlaneseq
    %v3842 = vshrl.u32 %v3841, 7
    %v3843 = vsub.s32 %v3840, %v3842
    %v3844 = vrot.slane %v3830, %v3843
    %v3845 = vcombine.high %v3837, %v3837
    %v3846 = vcombine.high %v3844, %v3844
    %v3847 = vcombine.high %v3021, %v3021
    %v3849 = vunpack.c.l.s4 1983009808
    %v3850 = vunpack.c.0.s8 %v3849
    %v3851 = vlaneseq
    %v3852 = vshrl.u32 %v3851, 7
    %v3853 = vsub.s32 %v3850, %v3852
    %v3854 = vrot.slane %v3021, %v3853
    %v3856 = vunpack.c.l.s4 1983009808
    %v3857 = vunpack.c.0.s8 %v3856
    %v3858 = vlaneseq
    %v3859 = vshrl.u32 %v3858, 7
    %v3860 = vsub.s32 %v3857, %v3859
    %v3861 = vrot.slane %v3847, %v3860
    %v3862 = vcombine.high %v3854, %v3854
    %v3863 = vcombine.high %v3861, %v3861
    %v3864 = vcombine.high %v3026, %v3026
    %v3866 = vunpack.c.l.s4 1983009808
    %v3867 = vunpack.c.0.s8 %v3866
    %v3868 = vlaneseq
    %v3869 = vshrl.u32 %v3868, 7
    %v3870 = vsub.s32 %v3867, %v3869
    %v3871 = vrot.slane %v3026, %v3870
    %v3873 = vunpack.c.l.s4 1983009808
    %v3874 = vunpack.c.0.s8 %v3873
    %v3875 = vlaneseq
    %v3876 = vshrl.u32 %v3875, 7
    %v3877 = vsub.s32 %v3874, %v3876
    %v3878 = vrot.slane %v3864, %v3877
    %v3879 = vcombine.high %v3871, %v3871
    %v3880 = vcombine.high %v3878, %v3878
    %v3881 = vcombine.high %v3029, %v3029
    %v3883 = vunpack.c.l.s4 1983009808
    %v3884 = vunpack.c.0.s8 %v3883
    %v3885 = vlaneseq
    %v3886 = vshrl.u32 %v3885, 7
    %v3887 = vsub.s32 %v3884, %v3886
    %v3888 = vrot.slane %v3029, %v3887
    %v3890 = vunpack.c.l.s4 1983009808
    %v3891 = vunpack.c.0.s8 %v3890
    %v3892 = vlaneseq
    %v3893 = vshrl.u32 %v3892, 7
    %v3894 = vsub.s32 %v3891, %v3893
    %v3895 = vrot.slane %v3881, %v3894
    %v3896 = vcombine.high %v3888, %v3888
    %v3897 = vcombine.high %v3895, %v3895
    %v3898 = vcombine.high %v3034, %v3034
    %v3900 = vunpack.c.l.s4 1983009808
    %v3901 = vunpack.c.0.s8 %v3900
    %v3902 = vlaneseq
    %v3903 = vshrl.u32 %v3902, 7
    %v3904 = vsub.s32 %v3901, %v3903
    %v3905 = vrot.slane %v3034, %v3904
    %v3907 = vunpack.c.l.s4 1983009808
    %v3908 = vunpack.c.0.s8 %v3907
    %v3909 = vlaneseq
    %v3910 = vshrl.u32 %v3909, 7
    %v3911 = vsub.s32 %v3908, %v3910
    %v3912 = vrot.slane %v3898, %v3911
    %v3913 = vcombine.high %v3905, %v3905
    %v3914 = vcombine.high %v3912, %v3912
    %v3915 = vcombine.high %v3037, %v3037
    %v3917 = vunpack.c.l.s4 1983009808
    %v3918 = vunpack.c.0.s8 %v3917
    %v3919 = vlaneseq
    %v3920 = vshrl.u32 %v3919, 7
    %v3921 = vsub.s32 %v3918, %v3920
    %v3922 = vrot.slane %v3037, %v3921
    %v3924 = vunpack.c.l.s4 1983009808
    %v3925 = vunpack.c.0.s8 %v3924
    %v3926 = vlaneseq
    %v3927 = vshrl.u32 %v3926, 7
    %v3928 = vsub.s32 %v3925, %v3927
    %v3929 = vrot.slane %v3915, %v3928
    %v3930 = vcombine.high %v3922, %v3922
    %v3931 = vcombine.high %v3929, %v3929
    %v3932 = vcombine.high %v3042, %v3042
    %v3934 = vunpack.c.l.s4 1983009808
    %v3935 = vunpack.c.0.s8 %v3934
    %v3936 = vlaneseq
    %v3937 = vshrl.u32 %v3936, 7
    %v3938 = vsub.s32 %v3935, %v3937
    %v3939 = vrot.slane %v3042, %v3938
    %v3941 = vunpack.c.l.s4 1983009808
    %v3942 = vunpack.c.0.s8 %v3941
    %v3943 = vlaneseq
    %v3944 = vshrl.u32 %v3943, 7
    %v3945 = vsub.s32 %v3942, %v3944
    %v3946 = vrot.slane %v3932, %v3945
    %v3947 = vcombine.high %v3939, %v3939
    %v3948 = vcombine.high %v3946, %v3946
    %v3949 = vcombine.high %v3045, %v3045
    %v3951 = vunpack.c.l.s4 1983009808
    %v3952 = vunpack.c.0.s8 %v3951
    %v3953 = vlaneseq
    %v3954 = vshrl.u32 %v3953, 7
    %v3955 = vsub.s32 %v3952, %v3954
    %v3956 = vrot.slane %v3045, %v3955
    %v3958 = vunpack.c.l.s4 1983009808
    %v3959 = vunpack.c.0.s8 %v3958
    %v3960 = vlaneseq
    %v3961 = vshrl.u32 %v3960, 7
    %v3962 = vsub.s32 %v3959, %v3961
    %v3963 = vrot.slane %v3949, %v3962
    %v3964 = vcombine.high %v3956, %v3956
    %v3965 = vcombine.high %v3963, %v3963
    %v3966 = vcombine.high %v3050, %v3050
    %v3968 = vunpack.c.l.s4 1983009808
    %v3969 = vunpack.c.0.s8 %v3968
    %v3970 = vlaneseq
    %v3971 = vshrl.u32 %v3970, 7
    %v3972 = vsub.s32 %v3969, %v3971
    %v3973 = vrot.slane %v3050, %v3972
    %v3975 = vunpack.c.l.s4 1983009808
    %v3976 = vunpack.c.0.s8 %v3975
    %v3977 = vlaneseq
    %v3978 = vshrl.u32 %v3977, 7
    %v3979 = vsub.s32 %v3976, %v3978
    %v3980 = vrot.slane %v3966, %v3979
    %v3981 = vcombine.high %v3973, %v3973
    %v3982 = vcombine.high %v3980, %v3980
    %v3983 = vcombine.high %v3053, %v3053
    %v3985 = vunpack.c.l.s4 1983009808
    %v3986 = vunpack.c.0.s8 %v3985
    %v3987 = vlaneseq
    %v3988 = vshrl.u32 %v3987, 7
    %v3989 = vsub.s32 %v3986, %v3988
    %v3990 = vrot.slane %v3053, %v3989
    %v3992 = vunpack.c.l.s4 1983009808
    %v3993 = vunpack.c.0.s8 %v3992
    %v3994 = vlaneseq
    %v3995 = vshrl.u32 %v3994, 7
    %v3996 = vsub.s32 %v3993, %v3995
    %v3997 = vrot.slane %v3983, %v3996
    %v3998 = vcombine.high %v3990, %v3990
    %v3999 = vcombine.high %v3997, %v3997
    %v4000 = vcombine.high %v3058, %v3058
    %v4002 = vunpack.c.l.s4 1983009808
    %v4003 = vunpack.c.0.s8 %v4002
    %v4004 = vlaneseq
    %v4005 = vshrl.u32 %v4004, 7
    %v4006 = vsub.s32 %v4003, %v4005
    %v4007 = vrot.slane %v3058, %v4006
    %v4009 = vunpack.c.l.s4 1983009808
    %v4010 = vunpack.c.0.s8 %v4009
    %v4011 = vlaneseq
    %v4012 = vshrl.u32 %v4011, 7
    %v4013 = vsub.s32 %v4010, %v4012
    %v4014 = vrot.slane %v4000, %v4013
    %v4015 = vcombine.high %v4007, %v4007
    %v4016 = vcombine.high %v4014, %v4014
    %v4017 = vcombine.high %v3061, %v3061
    %v4019 = vunpack.c.l.s4 1983009808
    %v4020 = vunpack.c.0.s8 %v4019
    %v4021 = vlaneseq
    %v4022 = vshrl.u32 %v4021, 7
    %v4023 = vsub.s32 %v4020, %v4022
    %v4024 = vrot.slane %v3061, %v4023
    %v4026 = vunpack.c.l.s4 1983009808
    %v4027 = vunpack.c.0.s8 %v4026
    %v4028 = vlaneseq
    %v4029 = vshrl.u32 %v4028, 7
    %v4030 = vsub.s32 %v4027, %v4029
    %v4031 = vrot.slane %v4017, %v4030
    %v4032 = vcombine.high %v4024, %v4024
    %v4033 = vcombine.high %v4031, %v4031
    %v4034 = vcombine.high %v3066, %v3066
    %v4036 = vunpack.c.l.s4 1983009808
    %v4037 = vunpack.c.0.s8 %v4036
    %v4038 = vlaneseq
    %v4039 = vshrl.u32 %v4038, 7
    %v4040 = vsub.s32 %v4037, %v4039
    %v4041 = vrot.slane %v3066, %v4040
    %v4043 = vunpack.c.l.s4 1983009808
    %v4044 = vunpack.c.0.s8 %v4043
    %v4045 = vlaneseq
    %v4046 = vshrl.u32 %v4045, 7
    %v4047 = vsub.s32 %v4044, %v4046
    %v4048 = vrot.slane %v4034, %v4047
    %v4049 = vcombine.high %v4041, %v4041
    %v4050 = vcombine.high %v4048, %v4048
    %v4051 = vcombine.high %v3069, %v3069
    %v4053 = vunpack.c.l.s4 1983009808
    %v4054 = vunpack.c.0.s8 %v4053
    %v4055 = vlaneseq
    %v4056 = vshrl.u32 %v4055, 7
    %v4057 = vsub.s32 %v4054, %v4056
    %v4058 = vrot.slane %v3069, %v4057
    %v4060 = vunpack.c.l.s4 1983009808
    %v4061 = vunpack.c.0.s8 %v4060
    %v4062 = vlaneseq
    %v4063 = vshrl.u32 %v4062, 7
    %v4064 = vsub.s32 %v4061, %v4063
    %v4065 = vrot.slane %v4051, %v4064
    %v4066 = vcombine.high %v4058, %v4058
    %v4067 = vcombine.high %v4065, %v4065
    %v4068 = vcombine.high %v3074, %v3074
    %v4070 = vunpack.c.l.s4 1983009808
    %v4071 = vunpack.c.0.s8 %v4070
    %v4072 = vlaneseq
    %v4073 = vshrl.u32 %v4072, 7
    %v4074 = vsub.s32 %v4071, %v4073
    %v4075 = vrot.slane %v3074, %v4074
    %v4077 = vunpack.c.l.s4 1983009808
    %v4078 = vunpack.c.0.s8 %v4077
    %v4079 = vlaneseq
    %v4080 = vshrl.u32 %v4079, 7
    %v4081 = vsub.s32 %v4078, %v4080
    %v4082 = vrot.slane %v4068, %v4081
    %v4083 = vcombine.high %v4075, %v4075
    %v4084 = vcombine.high %v4082, %v4082
    %v4085 = vcombine.high %v3077, %v3077
    %v4087 = vunpack.c.l.s4 1983009808
    %v4088 = vunpack.c.0.s8 %v4087
    %v4089 = vlaneseq
    %v4090 = vshrl.u32 %v4089, 7
    %v4091 = vsub.s32 %v4088, %v4090
    %v4092 = vrot.slane %v3077, %v4091
    %v4094 = vunpack.c.l.s4 1983009808
    %v4095 = vunpack.c.0.s8 %v4094
    %v4096 = vlaneseq
    %v4097 = vshrl.u32 %v4096, 7
    %v4098 = vsub.s32 %v4095, %v4097
    %v4099 = vrot.slane %v4085, %v4098
    %v4100 = vcombine.high %v4092, %v4092
    %v4101 = vcombine.high %v4099, %v4099
    %v4102 = vcombine.high %v3082, %v3082
    %v4104 = vunpack.c.l.s4 1983009808
    %v4105 = vunpack.c.0.s8 %v4104
    %v4106 = vlaneseq
    %v4107 = vshrl.u32 %v4106, 7
    %v4108 = vsub.s32 %v4105, %v4107
    %v4109 = vrot.slane %v3082, %v4108
    %v4111 = vunpack.c.l.s4 1983009808
    %v4112 = vunpack.c.0.s8 %v4111
    %v4113 = vlaneseq
    %v4114 = vshrl.u32 %v4113, 7
    %v4115 = vsub.s32 %v4112, %v4114
    %v4116 = vrot.slane %v4102, %v4115
    %v4117 = vcombine.high %v4109, %v4109
    %v4118 = vcombine.high %v4116, %v4116
    %v4119 = vcombine.high %v3085, %v3085
    %v4121 = vunpack.c.l.s4 1983009808
    %v4122 = vunpack.c.0.s8 %v4121
    %v4123 = vlaneseq
    %v4124 = vshrl.u32 %v4123, 7
    %v4125 = vsub.s32 %v4122, %v4124
    %v4126 = vrot.slane %v3085, %v4125
    %v4128 = vunpack.c.l.s4 1983009808
    %v4129 = vunpack.c.0.s8 %v4128
    %v4130 = vlaneseq
    %v4131 = vshrl.u32 %v4130, 7
    %v4132 = vsub.s32 %v4129, %v4131
    %v4133 = vrot.slane %v4119, %v4132
    %v4134 = vcombine.high %v4126, %v4126
    %v4135 = vcombine.high %v4133, %v4133
    %v4136 = vcombine.high %v3090, %v3090
    %v4138 = vunpack.c.l.s4 1983009808
    %v4139 = vunpack.c.0.s8 %v4138
    %v4140 = vlaneseq
    %v4141 = vshrl.u32 %v4140, 7
    %v4142 = vsub.s32 %v4139, %v4141
    %v4143 = vrot.slane %v3090, %v4142
    %v4145 = vunpack.c.l.s4 1983009808
    %v4146 = vunpack.c.0.s8 %v4145
    %v4147 = vlaneseq
    %v4148 = vshrl.u32 %v4147, 7
    %v4149 = vsub.s32 %v4146, %v4148
    %v4150 = vrot.slane %v4136, %v4149
    %v4151 = vcombine.high %v4143, %v4143
    %v4152 = vcombine.high %v4150, %v4150
    %v4153 = vcombine.high %v3093, %v3093
    %v4155 = vunpack.c.l.s4 1983009808
    %v4156 = vunpack.c.0.s8 %v4155
    %v4157 = vlaneseq
    %v4158 = vshrl.u32 %v4157, 7
    %v4159 = vsub.s32 %v4156, %v4158
    %v4160 = vrot.slane %v3093, %v4159
    %v4162 = vunpack.c.l.s4 1983009808
    %v4163 = vunpack.c.0.s8 %v4162
    %v4164 = vlaneseq
    %v4165 = vshrl.u32 %v4164, 7
    %v4166 = vsub.s32 %v4163, %v4165
    %v4167 = vrot.slane %v4153, %v4166
    %v4168 = vcombine.high %v4160, %v4160
    %v4169 = vcombine.high %v4167, %v4167
    %v4170 = vcombine.high %v3098, %v3098
    %v4172 = vunpack.c.l.s4 1983009808
    %v4173 = vunpack.c.0.s8 %v4172
    %v4174 = vlaneseq
    %v4175 = vshrl.u32 %v4174, 7
    %v4176 = vsub.s32 %v4173, %v4175
    %v4177 = vrot.slane %v3098, %v4176
    %v4179 = vunpack.c.l.s4 1983009808
    %v4180 = vunpack.c.0.s8 %v4179
    %v4181 = vlaneseq
    %v4182 = vshrl.u32 %v4181, 7
    %v4183 = vsub.s32 %v4180, %v4182
    %v4184 = vrot.slane %v4170, %v4183
    %v4185 = vcombine.high %v4177, %v4177
    %v4186 = vcombine.high %v4184, %v4184
    %v4187 = vcombine.high %v3101, %v3101
    %v4189 = vunpack.c.l.s4 1983009808
    %v4190 = vunpack.c.0.s8 %v4189
    %v4191 = vlaneseq
    %v4192 = vshrl.u32 %v4191, 7
    %v4193 = vsub.s32 %v4190, %v4192
    %v4194 = vrot.slane %v3101, %v4193
    %v4196 = vunpack.c.l.s4 1983009808
    %v4197 = vunpack.c.0.s8 %v4196
    %v4198 = vlaneseq
    %v4199 = vshrl.u32 %v4198, 7
    %v4200 = vsub.s32 %v4197, %v4199
    %v4201 = vrot.slane %v4187, %v4200
    %v4202 = vcombine.high %v4194, %v4194
    %v4203 = vcombine.high %v4201, %v4201
    %v4204 = vcombine.high %v3106, %v3106
    %v4206 = vunpack.c.l.s4 1983009808
    %v4207 = vunpack.c.0.s8 %v4206
    %v4208 = vlaneseq
    %v4209 = vshrl.u32 %v4208, 7
    %v4210 = vsub.s32 %v4207, %v4209
    %v4211 = vrot.slane %v3106, %v4210
    %v4213 = vunpack.c.l.s4 1983009808
    %v4214 = vunpack.c.0.s8 %v4213
    %v4215 = vlaneseq
    %v4216 = vshrl.u32 %v4215, 7
    %v4217 = vsub.s32 %v4214, %v4216
    %v4218 = vrot.slane %v4204, %v4217
    %v4219 = vcombine.high %v4211, %v4211
    %v4220 = vcombine.high %v4218, %v4218
    %v4221 = vcombine.high %v3109, %v3109
    %v4223 = vunpack.c.l.s4 1983009808
    %v4224 = vunpack.c.0.s8 %v4223
    %v4225 = vlaneseq
    %v4226 = vshrl.u32 %v4225, 7
    %v4227 = vsub.s32 %v4224, %v4226
    %v4228 = vrot.slane %v3109, %v4227
    %v4230 = vunpack.c.l.s4 1983009808
    %v4231 = vunpack.c.0.s8 %v4230
    %v4232 = vlaneseq
    %v4233 = vshrl.u32 %v4232, 7
    %v4234 = vsub.s32 %v4231, %v4233
    %v4235 = vrot.slane %v4221, %v4234
    %v4236 = vcombine.high %v4228, %v4228
    %v4237 = vcombine.high %v4235, %v4235
    %v4238 = vcombine.high %v3114, %v3114
    %v4240 = vunpack.c.l.s4 1983009808
    %v4241 = vunpack.c.0.s8 %v4240
    %v4242 = vlaneseq
    %v4243 = vshrl.u32 %v4242, 7
    %v4244 = vsub.s32 %v4241, %v4243
    %v4245 = vrot.slane %v3114, %v4244
    %v4247 = vunpack.c.l.s4 1983009808
    %v4248 = vunpack.c.0.s8 %v4247
    %v4249 = vlaneseq
    %v4250 = vshrl.u32 %v4249, 7
    %v4251 = vsub.s32 %v4248, %v4250
    %v4252 = vrot.slane %v4238, %v4251
    %v4253 = vcombine.high %v4245, %v4245
    %v4254 = vcombine.high %v4252, %v4252
    %v4255 = vcombine.high %v3117, %v3117
    %v4257 = vunpack.c.l.s4 1983009808
    %v4258 = vunpack.c.0.s8 %v4257
    %v4259 = vlaneseq
    %v4260 = vshrl.u32 %v4259, 7
    %v4261 = vsub.s32 %v4258, %v4260
    %v4262 = vrot.slane %v3117, %v4261
    %v4264 = vunpack.c.l.s4 1983009808
    %v4265 = vunpack.c.0.s8 %v4264
    %v4266 = vlaneseq
    %v4267 = vshrl.u32 %v4266, 7
    %v4268 = vsub.s32 %v4265, %v4267
    %v4269 = vrot.slane %v4255, %v4268
    %v4270 = vcombine.high %v4262, %v4262
    %v4271 = vcombine.high %v4269, %v4269
    %v4528 = vmax.f32 %v3191, %v3225
    %v4529 = vmax.f32 %v3199, %v3233
    %v4530 = vmax.f32 %v3198, %v3232
    %v4531 = vmax.f32 %v3200, %v3234
    %v4532 = vmax.f32 %v3208, %v3242
    %v4533 = vmax.f32 %v3216, %v3250
    %v4534 = vmax.f32 %v3215, %v3249
    %v4535 = vmax.f32 %v3217, %v3251
    %v4536 = vmax.f32 %v3259, %v3293
    %v4537 = vmax.f32 %v3267, %v3301
    %v4538 = vmax.f32 %v3266, %v3300
    %v4539 = vmax.f32 %v3268, %v3302
    %v4540 = vmax.f32 %v3276, %v3310
    %v4541 = vmax.f32 %v3284, %v3318
    %v4542 = vmax.f32 %v3283, %v3317
    %v4543 = vmax.f32 %v3285, %v3319
    %v4544 = vmax.f32 %v3327, %v3361
    %v4545 = vmax.f32 %v3335, %v3369
    %v4546 = vmax.f32 %v3334, %v3368
    %v4547 = vmax.f32 %v3336, %v3370
    %v4548 = vmax.f32 %v3344, %v3378
    %v4549 = vmax.f32 %v3352, %v3386
    %v4550 = vmax.f32 %v3351, %v3385
    %v4551 = vmax.f32 %v3353, %v3387
    %v4552 = vmax.f32 %v3395, %v3429
    %v4553 = vmax.f32 %v3403, %v3437
    %v4554 = vmax.f32 %v3402, %v3436
    %v4555 = vmax.f32 %v3404, %v3438
    %v4556 = vmax.f32 %v3412, %v3446
    %v4557 = vmax.f32 %v3420, %v3454
    %v4558 = vmax.f32 %v3419, %v3453
    %v4559 = vmax.f32 %v3421, %v3455
    %v4560 = vmax.f32 %v3463, %v3497
    %v4561 = vmax.f32 %v3471, %v3505
    %v4562 = vmax.f32 %v3470, %v3504
    %v4563 = vmax.f32 %v3472, %v3506
    %v4564 = vmax.f32 %v3480, %v3514
    %v4565 = vmax.f32 %v3488, %v3522
    %v4566 = vmax.f32 %v3487, %v3521
    %v4567 = vmax.f32 %v3489, %v3523
    %v4568 = vmax.f32 %v3531, %v3565
    %v4569 = vmax.f32 %v3539, %v3573
    %v4570 = vmax.f32 %v3538, %v3572
    %v4571 = vmax.f32 %v3540, %v3574
    %v4572 = vmax.f32 %v3548, %v3582
    %v4573 = vmax.f32 %v3556, %v3590
    %v4574 = vmax.f32 %v3555, %v3589
    %v4575 = vmax.f32 %v3557, %v3591
    %v4576 = vmax.f32 %v3599, %v3633
    %v4577 = vmax.f32 %v3607, %v3641
    %v4578 = vmax.f32 %v3606, %v3640
    %v4579 = vmax.f32 %v3608, %v3642
    %v4580 = vmax.f32 %v3616, %v3650
    %v4581 = vmax.f32 %v3624, %v3658
    %v4582 = vmax.f32 %v3623, %v3657
    %v4583 = vmax.f32 %v3625, %v3659
    %v4584 = vmax.f32 %v3667, %v3701
    %v4585 = vmax.f32 %v3675, %v3709
    %v4586 = vmax.f32 %v3674, %v3708
    %v4587 = vmax.f32 %v3676, %v3710
    %v4588 = vmax.f32 %v3684, %v3718
    %v4589 = vmax.f32 %v3692, %v3726
    %v4590 = vmax.f32 %v3691, %v3725
    %v4591 = vmax.f32 %v3693, %v3727
    %v4592 = vmax.f32 %v3735, %v3769
    %v4593 = vmax.f32 %v3743, %v3777
    %v4594 = vmax.f32 %v3742, %v3776
    %v4595 = vmax.f32 %v3744, %v3778
    %v4596 = vmax.f32 %v3752, %v3786
    %v4597 = vmax.f32 %v3760, %v3794
    %v4598 = vmax.f32 %v3759, %v3793
    %v4599 = vmax.f32 %v3761, %v3795
    %v4600 = vmax.f32 %v3803, %v3837
    %v4601 = vmax.f32 %v3811, %v3845
    %v4602 = vmax.f32 %v3810, %v3844
    %v4603 = vmax.f32 %v3812, %v3846
    %v4604 = vmax.f32 %v3820, %v3854
    %v4605 = vmax.f32 %v3828, %v3862
    %v4606 = vmax.f32 %v3827, %v3861
    %v4607 = vmax.f32 %v3829, %v3863
    %v4608 = vmax.f32 %v3871, %v3905
    %v4609 = vmax.f32 %v3879, %v3913
    %v4610 = vmax.f32 %v3878, %v3912
    %v4611 = vmax.f32 %v3880, %v3914
    %v4612 = vmax.f32 %v3888, %v3922
    %v4613 = vmax.f32 %v3896, %v3930
    %v4614 = vmax.f32 %v3895, %v3929
    %v4615 = vmax.f32 %v3897, %v3931
    %v4616 = vmax.f32 %v3939, %v3973
    %v4617 = vmax.f32 %v3947, %v3981
    %v4618 = vmax.f32 %v3946, %v3980
    %v4619 = vmax.f32 %v3948, %v3982
    %v4620 = vmax.f32 %v3956, %v3990
    %v4621 = vmax.f32 %v3964, %v3998
    %v4622 = vmax.f32 %v3963, %v3997
    %v4623 = vmax.f32 %v3965, %v3999
    %v4624 = vmax.f32 %v4007, %v4041
    %v4625 = vmax.f32 %v4015, %v4049
    %v4626 = vmax.f32 %v4014, %v4048
    %v4627 = vmax.f32 %v4016, %v4050
    %v4628 = vmax.f32 %v4024, %v4058
    %v4629 = vmax.f32 %v4032, %v4066
    %v4630 = vmax.f32 %v4031, %v4065
    %v4631 = vmax.f32 %v4033, %v4067
    %v4632 = vmax.f32 %v4075, %v4109
    %v4633 = vmax.f32 %v4083, %v4117
    %v4634 = vmax.f32 %v4082, %v4116
    %v4635 = vmax.f32 %v4084, %v4118
    %v4636 = vmax.f32 %v4092, %v4126
    %v4637 = vmax.f32 %v4100, %v4134
    %v4638 = vmax.f32 %v4099, %v4133
    %v4639 = vmax.f32 %v4101, %v4135
    %v4640 = vmax.f32 %v4143, %v4177
    %v4641 = vmax.f32 %v4151, %v4185
    %v4642 = vmax.f32 %v4150, %v4184
    %v4643 = vmax.f32 %v4152, %v4186
    %v4644 = vmax.f32 %v4160, %v4194
    %v4645 = vmax.f32 %v4168, %v4202
    %v4646 = vmax.f32 %v4167, %v4201
    %v4647 = vmax.f32 %v4169, %v4203
    %v4648 = vmax.f32 %v4211, %v4245
    %v4649 = vmax.f32 %v4219, %v4253
    %v4650 = vmax.f32 %v4218, %v4252
    %v4651 = vmax.f32 %v4220, %v4254
    %v4652 = vmax.f32 %v4228, %v4262
    %v4653 = vmax.f32 %v4236, %v4270
    %v4654 = vmax.f32 %v4235, %v4269
    %v4655 = vmax.f32 %v4237, %v4271
    %v4784 = vrot.slane %v4528, 7
    %v4785 = vrot.slane %v4784, 2
    %v4786 = vrot.slane %v4529, 7
    %v4787 = vrot.slane %v4786, 2
    %v4788 = vrot.slane %v4530, 7
    %v4789 = vrot.slane %v4788, 2
    %v4790 = vrot.slane %v4531, 7
    %v4791 = vrot.slane %v4790, 2
    %v4792 = vrot.slane %v4532, 7
    %v4793 = vrot.slane %v4792, 2
    %v4794 = vrot.slane %v4533, 7
    %v4795 = vrot.slane %v4794, 2
    %v4796 = vrot.slane %v4534, 7
    %v4797 = vrot.slane %v4796, 2
    %v4798 = vrot.slane %v4535, 7
    %v4799 = vrot.slane %v4798, 2
    %v4800 = vrot.slane %v4536, 7
    %v4801 = vrot.slane %v4800, 2
    %v4802 = vrot.slane %v4537, 7
    %v4803 = vrot.slane %v4802, 2
    %v4804 = vrot.slane %v4538, 7
    %v4805 = vrot.slane %v4804, 2
    %v4806 = vrot.slane %v4539, 7
    %v4807 = vrot.slane %v4806, 2
    %v4808 = vrot.slane %v4540, 7
    %v4809 = vrot.slane %v4808, 2
    %v4810 = vrot.slane %v4541, 7
    %v4811 = vrot.slane %v4810, 2
    %v4812 = vrot.slane %v4542, 7
    %v4813 = vrot.slane %v4812, 2
    %v4814 = vrot.slane %v4543, 7
    %v4815 = vrot.slane %v4814, 2
    %v4816 = vrot.slane %v4544, 7
    %v4817 = vrot.slane %v4816, 2
    %v4818 = vrot.slane %v4545, 7
    %v4819 = vrot.slane %v4818, 2
    %v4820 = vrot.slane %v4546, 7
    %v4821 = vrot.slane %v4820, 2
    %v4822 = vrot.slane %v4547, 7
    %v4823 = vrot.slane %v4822, 2
    %v4824 = vrot.slane %v4548, 7
    %v4825 = vrot.slane %v4824, 2
    %v4826 = vrot.slane %v4549, 7
    %v4827 = vrot.slane %v4826, 2
    %v4828 = vrot.slane %v4550, 7
    %v4829 = vrot.slane %v4828, 2
    %v4830 = vrot.slane %v4551, 7
    %v4831 = vrot.slane %v4830, 2
    %v4832 = vrot.slane %v4552, 7
    %v4833 = vrot.slane %v4832, 2
    %v4834 = vrot.slane %v4553, 7
    %v4835 = vrot.slane %v4834, 2
    %v4836 = vrot.slane %v4554, 7
    %v4837 = vrot.slane %v4836, 2
    %v4838 = vrot.slane %v4555, 7
    %v4839 = vrot.slane %v4838, 2
    %v4840 = vrot.slane %v4556, 7
    %v4841 = vrot.slane %v4840, 2
    %v4842 = vrot.slane %v4557, 7
    %v4843 = vrot.slane %v4842, 2
    %v4844 = vrot.slane %v4558, 7
    %v4845 = vrot.slane %v4844, 2
    %v4846 = vrot.slane %v4559, 7
    %v4847 = vrot.slane %v4846, 2
    %v4848 = vrot.slane %v4560, 7
    %v4849 = vrot.slane %v4848, 2
    %v4850 = vrot.slane %v4561, 7
    %v4851 = vrot.slane %v4850, 2
    %v4852 = vrot.slane %v4562, 7
    %v4853 = vrot.slane %v4852, 2
    %v4854 = vrot.slane %v4563, 7
    %v4855 = vrot.slane %v4854, 2
    %v4856 = vrot.slane %v4564, 7
    %v4857 = vrot.slane %v4856, 2
    %v4858 = vrot.slane %v4565, 7
    %v4859 = vrot.slane %v4858, 2
    %v4860 = vrot.slane %v4566, 7
    %v4861 = vrot.slane %v4860, 2
    %v4862 = vrot.slane %v4567, 7
    %v4863 = vrot.slane %v4862, 2
    %v4864 = vrot.slane %v4568, 7
    %v4865 = vrot.slane %v4864, 2
    %v4866 = vrot.slane %v4569, 7
    %v4867 = vrot.slane %v4866, 2
    %v4868 = vrot.slane %v4570, 7
    %v4869 = vrot.slane %v4868, 2
    %v4870 = vrot.slane %v4571, 7
    %v4871 = vrot.slane %v4870, 2
    %v4872 = vrot.slane %v4572, 7
    %v4873 = vrot.slane %v4872, 2
    %v4874 = vrot.slane %v4573, 7
    %v4875 = vrot.slane %v4874, 2
    %v4876 = vrot.slane %v4574, 7
    %v4877 = vrot.slane %v4876, 2
    %v4878 = vrot.slane %v4575, 7
    %v4879 = vrot.slane %v4878, 2
    %v4880 = vrot.slane %v4576, 7
    %v4881 = vrot.slane %v4880, 2
    %v4882 = vrot.slane %v4577, 7
    %v4883 = vrot.slane %v4882, 2
    %v4884 = vrot.slane %v4578, 7
    %v4885 = vrot.slane %v4884, 2
    %v4886 = vrot.slane %v4579, 7
    %v4887 = vrot.slane %v4886, 2
    %v4888 = vrot.slane %v4580, 7
    %v4889 = vrot.slane %v4888, 2
    %v4890 = vrot.slane %v4581, 7
    %v4891 = vrot.slane %v4890, 2
    %v4892 = vrot.slane %v4582, 7
    %v4893 = vrot.slane %v4892, 2
    %v4894 = vrot.slane %v4583, 7
    %v4895 = vrot.slane %v4894, 2
    %v4896 = vrot.slane %v4584, 7
    %v4897 = vrot.slane %v4896, 2
    %v4898 = vrot.slane %v4585, 7
    %v4899 = vrot.slane %v4898, 2
    %v4900 = vrot.slane %v4586, 7
    %v4901 = vrot.slane %v4900, 2
    %v4902 = vrot.slane %v4587, 7
    %v4903 = vrot.slane %v4902, 2
    %v4904 = vrot.slane %v4588, 7
    %v4905 = vrot.slane %v4904, 2
    %v4906 = vrot.slane %v4589, 7
    %v4907 = vrot.slane %v4906, 2
    %v4908 = vrot.slane %v4590, 7
    %v4909 = vrot.slane %v4908, 2
    %v4910 = vrot.slane %v4591, 7
    %v4911 = vrot.slane %v4910, 2
    %v4912 = vrot.slane %v4592, 7
    %v4913 = vrot.slane %v4912, 2
    %v4914 = vrot.slane %v4593, 7
    %v4915 = vrot.slane %v4914, 2
    %v4916 = vrot.slane %v4594, 7
    %v4917 = vrot.slane %v4916, 2
    %v4918 = vrot.slane %v4595, 7
    %v4919 = vrot.slane %v4918, 2
    %v4920 = vrot.slane %v4596, 7
    %v4921 = vrot.slane %v4920, 2
    %v4922 = vrot.slane %v4597, 7
    %v4923 = vrot.slane %v4922, 2
    %v4924 = vrot.slane %v4598, 7
    %v4925 = vrot.slane %v4924, 2
    %v4926 = vrot.slane %v4599, 7
    %v4927 = vrot.slane %v4926, 2
    %v4928 = vrot.slane %v4600, 7
    %v4929 = vrot.slane %v4928, 2
    %v4930 = vrot.slane %v4601, 7
    %v4931 = vrot.slane %v4930, 2
    %v4932 = vrot.slane %v4602, 7
    %v4933 = vrot.slane %v4932, 2
    %v4934 = vrot.slane %v4603, 7
    %v4935 = vrot.slane %v4934, 2
    %v4936 = vrot.slane %v4604, 7
    %v4937 = vrot.slane %v4936, 2
    %v4938 = vrot.slane %v4605, 7
    %v4939 = vrot.slane %v4938, 2
    %v4940 = vrot.slane %v4606, 7
    %v4941 = vrot.slane %v4940, 2
    %v4942 = vrot.slane %v4607, 7
    %v4943 = vrot.slane %v4942, 2
    %v4944 = vrot.slane %v4608, 7
    %v4945 = vrot.slane %v4944, 2
    %v4946 = vrot.slane %v4609, 7
    %v4947 = vrot.slane %v4946, 2
    %v4948 = vrot.slane %v4610, 7
    %v4949 = vrot.slane %v4948, 2
    %v4950 = vrot.slane %v4611, 7
    %v4951 = vrot.slane %v4950, 2
    %v4952 = vrot.slane %v4612, 7
    %v4953 = vrot.slane %v4952, 2
    %v4954 = vrot.slane %v4613, 7
    %v4955 = vrot.slane %v4954, 2
    %v4956 = vrot.slane %v4614, 7
    %v4957 = vrot.slane %v4956, 2
    %v4958 = vrot.slane %v4615, 7
    %v4959 = vrot.slane %v4958, 2
    %v4960 = vrot.slane %v4616, 7
    %v4961 = vrot.slane %v4960, 2
    %v4962 = vrot.slane %v4617, 7
    %v4963 = vrot.slane %v4962, 2
    %v4964 = vrot.slane %v4618, 7
    %v4965 = vrot.slane %v4964, 2
    %v4966 = vrot.slane %v4619, 7
    %v4967 = vrot.slane %v4966, 2
    %v4968 = vrot.slane %v4620, 7
    %v4969 = vrot.slane %v4968, 2
    %v4970 = vrot.slane %v4621, 7
    %v4971 = vrot.slane %v4970, 2
    %v4972 = vrot.slane %v4622, 7
    %v4973 = vrot.slane %v4972, 2
    %v4974 = vrot.slane %v4623, 7
    %v4975 = vrot.slane %v4974, 2
    %v4976 = vrot.slane %v4624, 7
    %v4977 = vrot.slane %v4976, 2
    %v4978 = vrot.slane %v4625, 7
    %v4979 = vrot.slane %v4978, 2
    %v4980 = vrot.slane %v4626, 7
    %v4981 = vrot.slane %v4980, 2
    %v4982 = vrot.slane %v4627, 7
    %v4983 = vrot.slane %v4982, 2
    %v4984 = vrot.slane %v4628, 7
    %v4985 = vrot.slane %v4984, 2
    %v4986 = vrot.slane %v4629, 7
    %v4987 = vrot.slane %v4986, 2
    %v4988 = vrot.slane %v4630, 7
    %v4989 = vrot.slane %v4988, 2
    %v4990 = vrot.slane %v4631, 7
    %v4991 = vrot.slane %v4990, 2
    %v4992 = vrot.slane %v4632, 7
    %v4993 = vrot.slane %v4992, 2
    %v4994 = vrot.slane %v4633, 7
    %v4995 = vrot.slane %v4994, 2
    %v4996 = vrot.slane %v4634, 7
    %v4997 = vrot.slane %v4996, 2
    %v4998 = vrot.slane %v4635, 7
    %v4999 = vrot.slane %v4998, 2
    %v5000 = vrot.slane %v4636, 7
    %v5001 = vrot.slane %v5000, 2
    %v5002 = vrot.slane %v4637, 7
    %v5003 = vrot.slane %v5002, 2
    %v5004 = vrot.slane %v4638, 7
    %v5005 = vrot.slane %v5004, 2
    %v5006 = vrot.slane %v4639, 7
    %v5007 = vrot.slane %v5006, 2
    %v5008 = vrot.slane %v4640, 7
    %v5009 = vrot.slane %v5008, 2
    %v5010 = vrot.slane %v4641, 7
    %v5011 = vrot.slane %v5010, 2
    %v5012 = vrot.slane %v4642, 7
    %v5013 = vrot.slane %v5012, 2
    %v5014 = vrot.slane %v4643, 7
    %v5015 = vrot.slane %v5014, 2
    %v5016 = vrot.slane %v4644, 7
    %v5017 = vrot.slane %v5016, 2
    %v5018 = vrot.slane %v4645, 7
    %v5019 = vrot.slane %v5018, 2
    %v5020 = vrot.slane %v4646, 7
    %v5021 = vrot.slane %v5020, 2
    %v5022 = vrot.slane %v4647, 7
    %v5023 = vrot.slane %v5022, 2
    %v5024 = vrot.slane %v4648, 7
    %v5025 = vrot.slane %v5024, 2
    %v5026 = vrot.slane %v4649, 7
    %v5027 = vrot.slane %v5026, 2
    %v5028 = vrot.slane %v4650, 7
    %v5029 = vrot.slane %v5028, 2
    %v5030 = vrot.slane %v4651, 7
    %v5031 = vrot.slane %v5030, 2
    %v5032 = vrot.slane %v4652, 7
    %v5033 = vrot.slane %v5032, 2
    %v5034 = vrot.slane %v4653, 7
    %v5035 = vrot.slane %v5034, 2
    %v5036 = vrot.slane %v4654, 7
    %v5037 = vrot.slane %v5036, 2
    %v5038 = vrot.slane %v4655, 7
    %v5039 = vrot.slane %v5038, 2
    %v5168 = vmax.f32 %v4528, %v4785
    %v5169 = vmax.f32 %v4529, %v4787
    %v5170 = vmax.f32 %v4530, %v4789
    %v5171 = vmax.f32 %v4531, %v4791
    %v5172 = vmax.f32 %v4532, %v4793
    %v5173 = vmax.f32 %v4533, %v4795
    %v5174 = vmax.f32 %v4534, %v4797
    %v5175 = vmax.f32 %v4535, %v4799
    %v5176 = vmax.f32 %v4536, %v4801
    %v5177 = vmax.f32 %v4537, %v4803
    %v5178 = vmax.f32 %v4538, %v4805
    %v5179 = vmax.f32 %v4539, %v4807
    %v5180 = vmax.f32 %v4540, %v4809
    %v5181 = vmax.f32 %v4541, %v4811
    %v5182 = vmax.f32 %v4542, %v4813
    %v5183 = vmax.f32 %v4543, %v4815
    %v5184 = vmax.f32 %v4544, %v4817
    %v5185 = vmax.f32 %v4545, %v4819
    %v5186 = vmax.f32 %v4546, %v4821
    %v5187 = vmax.f32 %v4547, %v4823
    %v5188 = vmax.f32 %v4548, %v4825
    %v5189 = vmax.f32 %v4549, %v4827
    %v5190 = vmax.f32 %v4550, %v4829
    %v5191 = vmax.f32 %v4551, %v4831
    %v5192 = vmax.f32 %v4552, %v4833
    %v5193 = vmax.f32 %v4553, %v4835
    %v5194 = vmax.f32 %v4554, %v4837
    %v5195 = vmax.f32 %v4555, %v4839
    %v5196 = vmax.f32 %v4556, %v4841
    %v5197 = vmax.f32 %v4557, %v4843
    %v5198 = vmax.f32 %v4558, %v4845
    %v5199 = vmax.f32 %v4559, %v4847
    %v5200 = vmax.f32 %v4560, %v4849
    %v5201 = vmax.f32 %v4561, %v4851
    %v5202 = vmax.f32 %v4562, %v4853
    %v5203 = vmax.f32 %v4563, %v4855
    %v5204 = vmax.f32 %v4564, %v4857
    %v5205 = vmax.f32 %v4565, %v4859
    %v5206 = vmax.f32 %v4566, %v4861
    %v5207 = vmax.f32 %v4567, %v4863
    %v5208 = vmax.f32 %v4568, %v4865
    %v5209 = vmax.f32 %v4569, %v4867
    %v5210 = vmax.f32 %v4570, %v4869
    %v5211 = vmax.f32 %v4571, %v4871
    %v5212 = vmax.f32 %v4572, %v4873
    %v5213 = vmax.f32 %v4573, %v4875
    %v5214 = vmax.f32 %v4574, %v4877
    %v5215 = vmax.f32 %v4575, %v4879
    %v5216 = vmax.f32 %v4576, %v4881
    %v5217 = vmax.f32 %v4577, %v4883
    %v5218 = vmax.f32 %v4578, %v4885
    %v5219 = vmax.f32 %v4579, %v4887
    %v5220 = vmax.f32 %v4580, %v4889
    %v5221 = vmax.f32 %v4581, %v4891
    %v5222 = vmax.f32 %v4582, %v4893
    %v5223 = vmax.f32 %v4583, %v4895
    %v5224 = vmax.f32 %v4584, %v4897
    %v5225 = vmax.f32 %v4585, %v4899
    %v5226 = vmax.f32 %v4586, %v4901
    %v5227 = vmax.f32 %v4587, %v4903
    %v5228 = vmax.f32 %v4588, %v4905
    %v5229 = vmax.f32 %v4589, %v4907
    %v5230 = vmax.f32 %v4590, %v4909
    %v5231 = vmax.f32 %v4591, %v4911
    %v5232 = vmax.f32 %v4592, %v4913
    %v5233 = vmax.f32 %v4593, %v4915
    %v5234 = vmax.f32 %v4594, %v4917
    %v5235 = vmax.f32 %v4595, %v4919
    %v5236 = vmax.f32 %v4596, %v4921
    %v5237 = vmax.f32 %v4597, %v4923
    %v5238 = vmax.f32 %v4598, %v4925
    %v5239 = vmax.f32 %v4599, %v4927
    %v5240 = vmax.f32 %v4600, %v4929
    %v5241 = vmax.f32 %v4601, %v4931
    %v5242 = vmax.f32 %v4602, %v4933
    %v5243 = vmax.f32 %v4603, %v4935
    %v5244 = vmax.f32 %v4604, %v4937
    %v5245 = vmax.f32 %v4605, %v4939
    %v5246 = vmax.f32 %v4606, %v4941
    %v5247 = vmax.f32 %v4607, %v4943
    %v5248 = vmax.f32 %v4608, %v4945
    %v5249 = vmax.f32 %v4609, %v4947
    %v5250 = vmax.f32 %v4610, %v4949
    %v5251 = vmax.f32 %v4611, %v4951
    %v5252 = vmax.f32 %v4612, %v4953
    %v5253 = vmax.f32 %v4613, %v4955
    %v5254 = vmax.f32 %v4614, %v4957
    %v5255 = vmax.f32 %v4615, %v4959
    %v5256 = vmax.f32 %v4616, %v4961
    %v5257 = vmax.f32 %v4617, %v4963
    %v5258 = vmax.f32 %v4618, %v4965
    %v5259 = vmax.f32 %v4619, %v4967
    %v5260 = vmax.f32 %v4620, %v4969
    %v5261 = vmax.f32 %v4621, %v4971
    %v5262 = vmax.f32 %v4622, %v4973
    %v5263 = vmax.f32 %v4623, %v4975
    %v5264 = vmax.f32 %v4624, %v4977
    %v5265 = vmax.f32 %v4625, %v4979
    %v5266 = vmax.f32 %v4626, %v4981
    %v5267 = vmax.f32 %v4627, %v4983
    %v5268 = vmax.f32 %v4628, %v4985
    %v5269 = vmax.f32 %v4629, %v4987
    %v5270 = vmax.f32 %v4630, %v4989
    %v5271 = vmax.f32 %v4631, %v4991
    %v5272 = vmax.f32 %v4632, %v4993
    %v5273 = vmax.f32 %v4633, %v4995
    %v5274 = vmax.f32 %v4634, %v4997
    %v5275 = vmax.f32 %v4635, %v4999
    %v5276 = vmax.f32 %v4636, %v5001
    %v5277 = vmax.f32 %v4637, %v5003
    %v5278 = vmax.f32 %v4638, %v5005
    %v5279 = vmax.f32 %v4639, %v5007
    %v5280 = vmax.f32 %v4640, %v5009
    %v5281 = vmax.f32 %v4641, %v5011
    %v5282 = vmax.f32 %v4642, %v5013
    %v5283 = vmax.f32 %v4643, %v5015
    %v5284 = vmax.f32 %v4644, %v5017
    %v5285 = vmax.f32 %v4645, %v5019
    %v5286 = vmax.f32 %v4646, %v5021
    %v5287 = vmax.f32 %v4647, %v5023
    %v5288 = vmax.f32 %v4648, %v5025
    %v5289 = vmax.f32 %v4649, %v5027
    %v5290 = vmax.f32 %v4650, %v5029
    %v5291 = vmax.f32 %v4651, %v5031
    %v5292 = vmax.f32 %v4652, %v5033
    %v5293 = vmax.f32 %v4653, %v5035
    %v5294 = vmax.f32 %v4654, %v5037
    %v5295 = vmax.f32 %v4655, %v5039
    %v5296 = vmax.f32 %v5168, 0.0
    %v5297 = vmax.f32 %v5169, 0.0
    %v5298 = vmax.f32 %v5170, 0.0
    %v5299 = vmax.f32 %v5171, 0.0
    %v5300 = vmax.f32 %v5172, 0.0
    %v5301 = vmax.f32 %v5173, 0.0
    %v5302 = vmax.f32 %v5174, 0.0
    %v5303 = vmax.f32 %v5175, 0.0
    %v5304 = vmax.f32 %v5176, 0.0
    %v5305 = vmax.f32 %v5177, 0.0
    %v5306 = vmax.f32 %v5178, 0.0
    %v5307 = vmax.f32 %v5179, 0.0
    %v5308 = vmax.f32 %v5180, 0.0
    %v5309 = vmax.f32 %v5181, 0.0
    %v5310 = vmax.f32 %v5182, 0.0
    %v5311 = vmax.f32 %v5183, 0.0
    %v5312 = vmax.f32 %v5184, 0.0
    %v5313 = vmax.f32 %v5185, 0.0
    %v5314 = vmax.f32 %v5186, 0.0
    %v5315 = vmax.f32 %v5187, 0.0
    %v5316 = vmax.f32 %v5188, 0.0
    %v5317 = vmax.f32 %v5189, 0.0
    %v5318 = vmax.f32 %v5190, 0.0
    %v5319 = vmax.f32 %v5191, 0.0
    %v5320 = vmax.f32 %v5192, 0.0
    %v5321 = vmax.f32 %v5193, 0.0
    %v5322 = vmax.f32 %v5194, 0.0
    %v5323 = vmax.f32 %v5195, 0.0
    %v5324 = vmax.f32 %v5196, 0.0
    %v5325 = vmax.f32 %v5197, 0.0
    %v5326 = vmax.f32 %v5198, 0.0
    %v5327 = vmax.f32 %v5199, 0.0
    %v5328 = vmax.f32 %v5200, 0.0
    %v5329 = vmax.f32 %v5201, 0.0
    %v5330 = vmax.f32 %v5202, 0.0
    %v5331 = vmax.f32 %v5203, 0.0
    %v5332 = vmax.f32 %v5204, 0.0
    %v5333 = vmax.f32 %v5205, 0.0
    %v5334 = vmax.f32 %v5206, 0.0
    %v5335 = vmax.f32 %v5207, 0.0
    %v5336 = vmax.f32 %v5208, 0.0
    %v5337 = vmax.f32 %v5209, 0.0
    %v5338 = vmax.f32 %v5210, 0.0
    %v5339 = vmax.f32 %v5211, 0.0
    %v5340 = vmax.f32 %v5212, 0.0
    %v5341 = vmax.f32 %v5213, 0.0
    %v5342 = vmax.f32 %v5214, 0.0
    %v5343 = vmax.f32 %v5215, 0.0
    %v5344 = vmax.f32 %v5216, 0.0
    %v5345 = vmax.f32 %v5217, 0.0
    %v5346 = vmax.f32 %v5218, 0.0
    %v5347 = vmax.f32 %v5219, 0.0
    %v5348 = vmax.f32 %v5220, 0.0
    %v5349 = vmax.f32 %v5221, 0.0
    %v5350 = vmax.f32 %v5222, 0.0
    %v5351 = vmax.f32 %v5223, 0.0
    %v5352 = vmax.f32 %v5224, 0.0
    %v5353 = vmax.f32 %v5225, 0.0
    %v5354 = vmax.f32 %v5226, 0.0
    %v5355 = vmax.f32 %v5227, 0.0
    %v5356 = vmax.f32 %v5228, 0.0
    %v5357 = vmax.f32 %v5229, 0.0
    %v5358 = vmax.f32 %v5230, 0.0
    %v5359 = vmax.f32 %v5231, 0.0
    %v5360 = vmax.f32 %v5232, 0.0
    %v5361 = vmax.f32 %v5233, 0.0
    %v5362 = vmax.f32 %v5234, 0.0
    %v5363 = vmax.f32 %v5235, 0.0
    %v5364 = vmax.f32 %v5236, 0.0
    %v5365 = vmax.f32 %v5237, 0.0
    %v5366 = vmax.f32 %v5238, 0.0
    %v5367 = vmax.f32 %v5239, 0.0
    %v5368 = vmax.f32 %v5240, 0.0
    %v5369 = vmax.f32 %v5241, 0.0
    %v5370 = vmax.f32 %v5242, 0.0
    %v5371 = vmax.f32 %v5243, 0.0
    %v5372 = vmax.f32 %v5244, 0.0
    %v5373 = vmax.f32 %v5245, 0.0
    %v5374 = vmax.f32 %v5246, 0.0
    %v5375 = vmax.f32 %v5247, 0.0
    %v5376 = vmax.f32 %v5248, 0.0
    %v5377 = vmax.f32 %v5249, 0.0
    %v5378 = vmax.f32 %v5250, 0.0
    %v5379 = vmax.f32 %v5251, 0.0
    %v5380 = vmax.f32 %v5252, 0.0
    %v5381 = vmax.f32 %v5253, 0.0
    %v5382 = vmax.f32 %v5254, 0.0
    %v5383 = vmax.f32 %v5255, 0.0
    %v5384 = vmax.f32 %v5256, 0.0
    %v5385 = vmax.f32 %v5257, 0.0
    %v5386 = vmax.f32 %v5258, 0.0
    %v5387 = vmax.f32 %v5259, 0.0
    %v5388 = vmax.f32 %v5260, 0.0
    %v5389 = vmax.f32 %v5261, 0.0
    %v5390 = vmax.f32 %v5262, 0.0
    %v5391 = vmax.f32 %v5263, 0.0
    %v5392 = vmax.f32 %v5264, 0.0
    %v5393 = vmax.f32 %v5265, 0.0
    %v5394 = vmax.f32 %v5266, 0.0
    %v5395 = vmax.f32 %v5267, 0.0
    %v5396 = vmax.f32 %v5268, 0.0
    %v5397 = vmax.f32 %v5269, 0.0
    %v5398 = vmax.f32 %v5270, 0.0
    %v5399 = vmax.f32 %v5271, 0.0
    %v5400 = vmax.f32 %v5272, 0.0
    %v5401 = vmax.f32 %v5273, 0.0
    %v5402 = vmax.f32 %v5274, 0.0
    %v5403 = vmax.f32 %v5275, 0.0
    %v5404 = vmax.f32 %v5276, 0.0
    %v5405 = vmax.f32 %v5277, 0.0
    %v5406 = vmax.f32 %v5278, 0.0
    %v5407 = vmax.f32 %v5279, 0.0
    %v5408 = vmax.f32 %v5280, 0.0
    %v5409 = vmax.f32 %v5281, 0.0
    %v5410 = vmax.f32 %v5282, 0.0
    %v5411 = vmax.f32 %v5283, 0.0
    %v5412 = vmax.f32 %v5284, 0.0
    %v5413 = vmax.f32 %v5285, 0.0
    %v5414 = vmax.f32 %v5286, 0.0
    %v5415 = vmax.f32 %v5287, 0.0
    %v5416 = vmax.f32 %v5288, 0.0
    %v5417 = vmax.f32 %v5289, 0.0
    %v5418 = vmax.f32 %v5290, 0.0
    %v5419 = vmax.f32 %v5291, 0.0
    %v5420 = vmax.f32 %v5292, 0.0
    %v5421 = vmax.f32 %v5293, 0.0
    %v5422 = vmax.f32 %v5294, 0.0
    %v5423 = vmax.f32 %v5295, 0.0
    %v5424 = vld [vmem:[%s3] sm:$0xf]
    %v5425 = vld [vmem:[%s3 + $0x4] sm:$0xf]
    %v5426 = vld [vmem:[%s3 + $0x8] sm:$0xf]
    %v5427 = vld [vmem:[%s3 + $0xc] sm:$0xf]
    %v5428 = vld [vmem:[%s3 + $0x10] sm:$0xf]
    %v5429 = vld [vmem:[%s3 + $0x14] sm:$0xf]
    %v5430 = vld [vmem:[%s3 + $0x18] sm:$0xf]
    %v5431 = vld [vmem:[%s3 + $0x1c] sm:$0xf]
    %v5432 = vld [vmem:[%s3 + $0x20] sm:$0xf]
    %v5433 = vld [vmem:[%s3 + $0x24] sm:$0xf]
    %v5434 = vld [vmem:[%s3 + $0x28] sm:$0xf]
    %v5435 = vld [vmem:[%s3 + $0x2c] sm:$0xf]
    %v5436 = vld [vmem:[%s3 + $0x30] sm:$0xf]
    %v5437 = vld [vmem:[%s3 + $0x34] sm:$0xf]
    %v5438 = vld [vmem:[%s3 + $0x38] sm:$0xf]
    %v5439 = vld [vmem:[%s3 + $0x3c] sm:$0xf]
    %v5440 = vld [vmem:[%s3 + $0x40] sm:$0xf]
    %v5441 = vld [vmem:[%s3 + $0x44] sm:$0xf]
    %v5442 = vld [vmem:[%s4] sm:$0x1]
    %v5515 = vlaneseq
    %v5516 = vshrl.u32 %v5515, 7
    %v5517 = vsub.s32 0, %v5516
    %v5518 = vrot.slane %v5296, %v5517
    %v5519 = vlaneseq
    %v5520 = vshrl.u32 %v5519, 7
    %v5521 = vsub.s32 0, %v5520
    %v5522 = vrot.slane %v5297, %v5521
    %v5523 = vlaneseq
    %v5524 = vshrl.u32 %v5523, 7
    %v5525 = vsub.s32 0, %v5524
    %v5526 = vrot.slane %v5298, %v5525
    %v5527 = vlaneseq
    %v5528 = vshrl.u32 %v5527, 7
    %v5529 = vsub.s32 0, %v5528
    %v5530 = vrot.slane %v5299, %v5529
    %v5531 = vlaneseq
    %v5532 = vshrl.u32 %v5531, 7
    %v5533 = vsub.s32 0, %v5532
    %v5534 = vrot.slane %v5300, %v5533
    %v5535 = vlaneseq
    %v5536 = vshrl.u32 %v5535, 7
    %v5537 = vsub.s32 0, %v5536
    %v5538 = vrot.slane %v5301, %v5537
    %v5539 = vlaneseq
    %v5540 = vshrl.u32 %v5539, 7
    %v5541 = vsub.s32 0, %v5540
    %v5542 = vrot.slane %v5304, %v5541
    %v5543 = vlaneseq
    %v5544 = vshrl.u32 %v5543, 7
    %v5545 = vsub.s32 0, %v5544
    %v5546 = vrot.slane %v5305, %v5545
    %v5547 = vlaneseq
    %v5548 = vshrl.u32 %v5547, 7
    %v5549 = vsub.s32 0, %v5548
    %v5550 = vrot.slane %v5306, %v5549
    %v5551 = vlaneseq
    %v5552 = vshrl.u32 %v5551, 7
    %v5553 = vsub.s32 0, %v5552
    %v5554 = vrot.slane %v5307, %v5553
    %v5555 = vlaneseq
    %v5556 = vshrl.u32 %v5555, 7
    %v5557 = vsub.s32 0, %v5556
    %v5558 = vrot.slane %v5308, %v5557
    %v5559 = vlaneseq
    %v5560 = vshrl.u32 %v5559, 7
    %v5561 = vsub.s32 0, %v5560
    %v5562 = vrot.slane %v5309, %v5561
    %v5563 = vlaneseq
    %v5564 = vshrl.u32 %v5563, 7
    %v5565 = vsub.s32 0, %v5564
    %v5566 = vrot.slane %v5312, %v5565
    %v5567 = vlaneseq
    %v5568 = vshrl.u32 %v5567, 7
    %v5569 = vsub.s32 0, %v5568
    %v5570 = vrot.slane %v5313, %v5569
    %v5571 = vlaneseq
    %v5572 = vshrl.u32 %v5571, 7
    %v5573 = vsub.s32 0, %v5572
    %v5574 = vrot.slane %v5314, %v5573
    %v5575 = vlaneseq
    %v5576 = vshrl.u32 %v5575, 7
    %v5577 = vsub.s32 0, %v5576
    %v5578 = vrot.slane %v5315, %v5577
    %v5579 = vlaneseq
    %v5580 = vshrl.u32 %v5579, 7
    %v5581 = vsub.s32 0, %v5580
    %v5582 = vrot.slane %v5316, %v5581
    %v5583 = vlaneseq
    %v5584 = vshrl.u32 %v5583, 7
    %v5585 = vsub.s32 0, %v5584
    %v5586 = vrot.slane %v5317, %v5585
    %v5587 = vlaneseq
    %v5588 = vshrl.u32 %v5587, 7
    %v5589 = vsub.s32 0, %v5588
    %v5590 = vrot.slane %v5320, %v5589
    %v5591 = vlaneseq
    %v5592 = vshrl.u32 %v5591, 7
    %v5593 = vsub.s32 0, %v5592
    %v5594 = vrot.slane %v5321, %v5593
    %v5595 = vlaneseq
    %v5596 = vshrl.u32 %v5595, 7
    %v5597 = vsub.s32 0, %v5596
    %v5598 = vrot.slane %v5322, %v5597
    %v5599 = vlaneseq
    %v5600 = vshrl.u32 %v5599, 7
    %v5601 = vsub.s32 0, %v5600
    %v5602 = vrot.slane %v5323, %v5601
    %v5603 = vlaneseq
    %v5604 = vshrl.u32 %v5603, 7
    %v5605 = vsub.s32 0, %v5604
    %v5606 = vrot.slane %v5324, %v5605
    %v5607 = vlaneseq
    %v5608 = vshrl.u32 %v5607, 7
    %v5609 = vsub.s32 0, %v5608
    %v5610 = vrot.slane %v5325, %v5609
    %v5611 = vlaneseq
    %v5612 = vshrl.u32 %v5611, 7
    %v5613 = vsub.s32 0, %v5612
    %v5614 = vrot.slane %v5328, %v5613
    %v5615 = vlaneseq
    %v5616 = vshrl.u32 %v5615, 7
    %v5617 = vsub.s32 0, %v5616
    %v5618 = vrot.slane %v5329, %v5617
    %v5619 = vlaneseq
    %v5620 = vshrl.u32 %v5619, 7
    %v5621 = vsub.s32 0, %v5620
    %v5622 = vrot.slane %v5330, %v5621
    %v5623 = vlaneseq
    %v5624 = vshrl.u32 %v5623, 7
    %v5625 = vsub.s32 0, %v5624
    %v5626 = vrot.slane %v5331, %v5625
    %v5627 = vlaneseq
    %v5628 = vshrl.u32 %v5627, 7
    %v5629 = vsub.s32 0, %v5628
    %v5630 = vrot.slane %v5332, %v5629
    %v5631 = vlaneseq
    %v5632 = vshrl.u32 %v5631, 7
    %v5633 = vsub.s32 0, %v5632
    %v5634 = vrot.slane %v5333, %v5633
    %v5635 = vlaneseq
    %v5636 = vshrl.u32 %v5635, 7
    %v5637 = vsub.s32 0, %v5636
    %v5638 = vrot.slane %v5336, %v5637
    %v5639 = vlaneseq
    %v5640 = vshrl.u32 %v5639, 7
    %v5641 = vsub.s32 0, %v5640
    %v5642 = vrot.slane %v5337, %v5641
    %v5643 = vlaneseq
    %v5644 = vshrl.u32 %v5643, 7
    %v5645 = vsub.s32 0, %v5644
    %v5646 = vrot.slane %v5338, %v5645
    %v5647 = vlaneseq
    %v5648 = vshrl.u32 %v5647, 7
    %v5649 = vsub.s32 0, %v5648
    %v5650 = vrot.slane %v5339, %v5649
    %v5651 = vlaneseq
    %v5652 = vshrl.u32 %v5651, 7
    %v5653 = vsub.s32 0, %v5652
    %v5654 = vrot.slane %v5340, %v5653
    %v5655 = vlaneseq
    %v5656 = vshrl.u32 %v5655, 7
    %v5657 = vsub.s32 0, %v5656
    %v5658 = vrot.slane %v5341, %v5657
    %v5659 = vlaneseq
    %v5660 = vshrl.u32 %v5659, 7
    %v5661 = vsub.s32 0, %v5660
    %v5662 = vrot.slane %v5360, %v5661
    %v5663 = vlaneseq
    %v5664 = vshrl.u32 %v5663, 7
    %v5665 = vsub.s32 0, %v5664
    %v5666 = vrot.slane %v5361, %v5665
    %v5667 = vlaneseq
    %v5668 = vshrl.u32 %v5667, 7
    %v5669 = vsub.s32 0, %v5668
    %v5670 = vrot.slane %v5362, %v5669
    %v5671 = vlaneseq
    %v5672 = vshrl.u32 %v5671, 7
    %v5673 = vsub.s32 0, %v5672
    %v5674 = vrot.slane %v5363, %v5673
    %v5675 = vlaneseq
    %v5676 = vshrl.u32 %v5675, 7
    %v5677 = vsub.s32 0, %v5676
    %v5678 = vrot.slane %v5364, %v5677
    %v5679 = vlaneseq
    %v5680 = vshrl.u32 %v5679, 7
    %v5681 = vsub.s32 0, %v5680
    %v5682 = vrot.slane %v5365, %v5681
    %v5683 = vlaneseq
    %v5684 = vshrl.u32 %v5683, 7
    %v5685 = vsub.s32 0, %v5684
    %v5686 = vrot.slane %v5368, %v5685
    %v5687 = vlaneseq
    %v5688 = vshrl.u32 %v5687, 7
    %v5689 = vsub.s32 0, %v5688
    %v5690 = vrot.slane %v5369, %v5689
    %v5691 = vlaneseq
    %v5692 = vshrl.u32 %v5691, 7
    %v5693 = vsub.s32 0, %v5692
    %v5694 = vrot.slane %v5370, %v5693
    %v5695 = vlaneseq
    %v5696 = vshrl.u32 %v5695, 7
    %v5697 = vsub.s32 0, %v5696
    %v5698 = vrot.slane %v5371, %v5697
    %v5699 = vlaneseq
    %v5700 = vshrl.u32 %v5699, 7
    %v5701 = vsub.s32 0, %v5700
    %v5702 = vrot.slane %v5372, %v5701
    %v5703 = vlaneseq
    %v5704 = vshrl.u32 %v5703, 7
    %v5705 = vsub.s32 0, %v5704
    %v5706 = vrot.slane %v5373, %v5705
    %v5707 = vlaneseq
    %v5708 = vshrl.u32 %v5707, 7
    %v5709 = vsub.s32 0, %v5708
    %v5710 = vrot.slane %v5376, %v5709
    %v5711 = vlaneseq
    %v5712 = vshrl.u32 %v5711, 7
    %v5713 = vsub.s32 0, %v5712
    %v5714 = vrot.slane %v5377, %v5713
    %v5715 = vlaneseq
    %v5716 = vshrl.u32 %v5715, 7
    %v5717 = vsub.s32 0, %v5716
    %v5718 = vrot.slane %v5378, %v5717
    %v5719 = vlaneseq
    %v5720 = vshrl.u32 %v5719, 7
    %v5721 = vsub.s32 0, %v5720
    %v5722 = vrot.slane %v5379, %v5721
    %v5723 = vlaneseq
    %v5724 = vshrl.u32 %v5723, 7
    %v5725 = vsub.s32 0, %v5724
    %v5726 = vrot.slane %v5380, %v5725
    %v5727 = vlaneseq
    %v5728 = vshrl.u32 %v5727, 7
    %v5729 = vsub.s32 0, %v5728
    %v5730 = vrot.slane %v5381, %v5729
    %v5731 = vlaneseq
    %v5732 = vshrl.u32 %v5731, 7
    %v5733 = vsub.s32 0, %v5732
    %v5734 = vrot.slane %v5384, %v5733
    %v5735 = vlaneseq
    %v5736 = vshrl.u32 %v5735, 7
    %v5737 = vsub.s32 0, %v5736
    %v5738 = vrot.slane %v5385, %v5737
    %v5739 = vlaneseq
    %v5740 = vshrl.u32 %v5739, 7
    %v5741 = vsub.s32 0, %v5740
    %v5742 = vrot.slane %v5386, %v5741
    %v5743 = vlaneseq
    %v5744 = vshrl.u32 %v5743, 7
    %v5745 = vsub.s32 0, %v5744
    %v5746 = vrot.slane %v5387, %v5745
    %v5747 = vlaneseq
    %v5748 = vshrl.u32 %v5747, 7
    %v5749 = vsub.s32 0, %v5748
    %v5750 = vrot.slane %v5388, %v5749
    %v5751 = vlaneseq
    %v5752 = vshrl.u32 %v5751, 7
    %v5753 = vsub.s32 0, %v5752
    %v5754 = vrot.slane %v5389, %v5753
    %v5755 = vlaneseq
    %v5756 = vshrl.u32 %v5755, 7
    %v5757 = vsub.s32 0, %v5756
    %v5758 = vrot.slane %v5392, %v5757
    %v5759 = vlaneseq
    %v5760 = vshrl.u32 %v5759, 7
    %v5761 = vsub.s32 0, %v5760
    %v5762 = vrot.slane %v5393, %v5761
    %v5763 = vlaneseq
    %v5764 = vshrl.u32 %v5763, 7
    %v5765 = vsub.s32 0, %v5764
    %v5766 = vrot.slane %v5394, %v5765
    %v5767 = vlaneseq
    %v5768 = vshrl.u32 %v5767, 7
    %v5769 = vsub.s32 0, %v5768
    %v5770 = vrot.slane %v5395, %v5769
    %v5771 = vlaneseq
    %v5772 = vshrl.u32 %v5771, 7
    %v5773 = vsub.s32 0, %v5772
    %v5774 = vrot.slane %v5396, %v5773
    %v5775 = vlaneseq
    %v5776 = vshrl.u32 %v5775, 7
    %v5777 = vsub.s32 0, %v5776
    %v5778 = vrot.slane %v5397, %v5777
    %v5779 = vlaneseq
    %v5780 = vshrl.u32 %v5779, 7
    %v5781 = vsub.s32 0, %v5780
    %v5782 = vrot.slane %v5400, %v5781
    %v5783 = vlaneseq
    %v5784 = vshrl.u32 %v5783, 7
    %v5785 = vsub.s32 0, %v5784
    %v5786 = vrot.slane %v5401, %v5785
    %v5787 = vlaneseq
    %v5788 = vshrl.u32 %v5787, 7
    %v5789 = vsub.s32 0, %v5788
    %v5790 = vrot.slane %v5402, %v5789
    %v5791 = vlaneseq
    %v5792 = vshrl.u32 %v5791, 7
    %v5793 = vsub.s32 0, %v5792
    %v5794 = vrot.slane %v5403, %v5793
    %v5795 = vlaneseq
    %v5796 = vshrl.u32 %v5795, 7
    %v5797 = vsub.s32 0, %v5796
    %v5798 = vrot.slane %v5404, %v5797
    %v5799 = vlaneseq
    %v5800 = vshrl.u32 %v5799, 7
    %v5801 = vsub.s32 0, %v5800
    %v5802 = vrot.slane %v5405, %v5801
    %vm5803 = vcmask 1041409
    %v5804 = vsel %vm5803, %v5522, %v5518
    %vm5805 = vcmask 1042434
    %v5806 = vsel %vm5805, %v5526, %v5804
    %vm5807 = vcmask 1043459
    %v5808 = vsel %vm5807, %v5530, %v5806
    %vm5809 = vcmask 1044484
    %v5810 = vsel %vm5809, %v5534, %v5808
    %vm5811 = vcmask 1045509
    %v5812 = vsel %vm5811, %v5538, %v5810
    %v5813 = vsel %vm5803, %v5546, %v5542
    %v5814 = vsel %vm5805, %v5550, %v5813
    %v5815 = vsel %vm5807, %v5554, %v5814
    %v5816 = vsel %vm5809, %v5558, %v5815
    %v5817 = vsel %vm5811, %v5562, %v5816
    %v5818 = vsel %vm5803, %v5570, %v5566
    %v5819 = vsel %vm5805, %v5574, %v5818
    %v5820 = vsel %vm5807, %v5578, %v5819
    %v5821 = vsel %vm5809, %v5582, %v5820
    %v5822 = vsel %vm5811, %v5586, %v5821
    %v5823 = vsel %vm5803, %v5594, %v5590
    %v5824 = vsel %vm5805, %v5598, %v5823
    %v5825 = vsel %vm5807, %v5602, %v5824
    %v5826 = vsel %vm5809, %v5606, %v5825
    %v5827 = vsel %vm5811, %v5610, %v5826
    %v5828 = vsel %vm5803, %v5618, %v5614
    %v5829 = vsel %vm5805, %v5622, %v5828
    %v5830 = vsel %vm5807, %v5626, %v5829
    %v5831 = vsel %vm5809, %v5630, %v5830
    %v5832 = vsel %vm5811, %v5634, %v5831
    %v5833 = vsel %vm5803, %v5642, %v5638
    %v5834 = vsel %vm5805, %v5646, %v5833
    %v5835 = vsel %vm5807, %v5650, %v5834
    %v5836 = vsel %vm5809, %v5654, %v5835
    %v5837 = vsel %vm5811, %v5658, %v5836
    %v5838 = vsel %vm5803, %v5666, %v5662
    %v5839 = vsel %vm5805, %v5670, %v5838
    %v5840 = vsel %vm5807, %v5674, %v5839
    %v5841 = vsel %vm5809, %v5678, %v5840
    %v5842 = vsel %vm5811, %v5682, %v5841
    %v5843 = vsel %vm5803, %v5690, %v5686
    %v5844 = vsel %vm5805, %v5694, %v5843
    %v5845 = vsel %vm5807, %v5698, %v5844
    %v5846 = vsel %vm5809, %v5702, %v5845
    %v5847 = vsel %vm5811, %v5706, %v5846
    %v5848 = vsel %vm5803, %v5714, %v5710
    %v5849 = vsel %vm5805, %v5718, %v5848
    %v5850 = vsel %vm5807, %v5722, %v5849
    %v5851 = vsel %vm5809, %v5726, %v5850
    %v5852 = vsel %vm5811, %v5730, %v5851
    %v5853 = vsel %vm5803, %v5738, %v5734
    %v5854 = vsel %vm5805, %v5742, %v5853
    %v5855 = vsel %vm5807, %v5746, %v5854
    %v5856 = vsel %vm5809, %v5750, %v5855
    %v5857 = vsel %vm5811, %v5754, %v5856
    %v5858 = vsel %vm5803, %v5762, %v5758
    %v5859 = vsel %vm5805, %v5766, %v5858
    %v5860 = vsel %vm5807, %v5770, %v5859
    %v5861 = vsel %vm5809, %v5774, %v5860
    %v5862 = vsel %vm5811, %v5778, %v5861
    %v5863 = vsel %vm5803, %v5786, %v5782
    %v5864 = vsel %vm5805, %v5790, %v5863
    %v5865 = vsel %vm5807, %v5794, %v5864
    %v5866 = vsel %vm5809, %v5798, %v5865
    %v5867 = vsel %vm5811, %v5802, %v5866
    %v5892 = vlaneseq
    %v5893 = vshrl.u32 %v5892, 7
    %v5894 = vsub.s32 0, %v5893
    %v5895 = vrot.slane %v5302, %v5894
    %v5896 = vlaneseq
    %v5897 = vshrl.u32 %v5896, 7
    %v5898 = vsub.s32 0, %v5897
    %v5899 = vrot.slane %v5310, %v5898
    %v5900 = vlaneseq
    %v5901 = vshrl.u32 %v5900, 7
    %v5902 = vsub.s32 0, %v5901
    %v5903 = vrot.slane %v5318, %v5902
    %v5904 = vlaneseq
    %v5905 = vshrl.u32 %v5904, 7
    %v5906 = vsub.s32 0, %v5905
    %v5907 = vrot.slane %v5326, %v5906
    %v5908 = vlaneseq
    %v5909 = vshrl.u32 %v5908, 7
    %v5910 = vsub.s32 0, %v5909
    %v5911 = vrot.slane %v5334, %v5910
    %v5912 = vlaneseq
    %v5913 = vshrl.u32 %v5912, 7
    %v5914 = vsub.s32 0, %v5913
    %v5915 = vrot.slane %v5342, %v5914
    %v5916 = vlaneseq
    %v5917 = vshrl.u32 %v5916, 7
    %v5918 = vsub.s32 0, %v5917
    %v5919 = vrot.slane %v5366, %v5918
    %v5920 = vlaneseq
    %v5921 = vshrl.u32 %v5920, 7
    %v5922 = vsub.s32 0, %v5921
    %v5923 = vrot.slane %v5374, %v5922
    %v5924 = vlaneseq
    %v5925 = vshrl.u32 %v5924, 7
    %v5926 = vsub.s32 0, %v5925
    %v5927 = vrot.slane %v5382, %v5926
    %v5928 = vlaneseq
    %v5929 = vshrl.u32 %v5928, 7
    %v5930 = vsub.s32 0, %v5929
    %v5931 = vrot.slane %v5390, %v5930
    %v5932 = vlaneseq
    %v5933 = vshrl.u32 %v5932, 7
    %v5934 = vsub.s32 0, %v5933
    %v5935 = vrot.slane %v5398, %v5934
    %v5936 = vlaneseq
    %v5937 = vshrl.u32 %v5936, 7
    %v5938 = vsub.s32 0, %v5937
    %v5939 = vrot.slane %v5406, %v5938
    %v5940 = vsel %vm5803, %v5526, %v5522
    %v5941 = vsel %vm5805, %v5530, %v5940
    %v5942 = vsel %vm5807, %v5534, %v5941
    %v5943 = vsel %vm5809, %v5538, %v5942
    %v5944 = vsel %vm5811, %v5895, %v5943
    %v5945 = vsel %vm5803, %v5550, %v5546
    %v5946 = vsel %vm5805, %v5554, %v5945
    %v5947 = vsel %vm5807, %v5558, %v5946
    %v5948 = vsel %vm5809, %v5562, %v5947
    %v5949 = vsel %vm5811, %v5899, %v5948
    %v5950 = vsel %vm5803, %v5574, %v5570
    %v5951 = vsel %vm5805, %v5578, %v5950
    %v5952 = vsel %vm5807, %v5582, %v5951
    %v5953 = vsel %vm5809, %v5586, %v5952
    %v5954 = vsel %vm5811, %v5903, %v5953
    %v5955 = vsel %vm5803, %v5598, %v5594
    %v5956 = vsel %vm5805, %v5602, %v5955
    %v5957 = vsel %vm5807, %v5606, %v5956
    %v5958 = vsel %vm5809, %v5610, %v5957
    %v5959 = vsel %vm5811, %v5907, %v5958
    %v5960 = vsel %vm5803, %v5622, %v5618
    %v5961 = vsel %vm5805, %v5626, %v5960
    %v5962 = vsel %vm5807, %v5630, %v5961
    %v5963 = vsel %vm5809, %v5634, %v5962
    %v5964 = vsel %vm5811, %v5911, %v5963
    %v5965 = vsel %vm5803, %v5646, %v5642
    %v5966 = vsel %vm5805, %v5650, %v5965
    %v5967 = vsel %vm5807, %v5654, %v5966
    %v5968 = vsel %vm5809, %v5658, %v5967
    %v5969 = vsel %vm5811, %v5915, %v5968
    %v5970 = vsel %vm5803, %v5670, %v5666
    %v5971 = vsel %vm5805, %v5674, %v5970
    %v5972 = vsel %vm5807, %v5678, %v5971
    %v5973 = vsel %vm5809, %v5682, %v5972
    %v5974 = vsel %vm5811, %v5919, %v5973
    %v5975 = vsel %vm5803, %v5694, %v5690
    %v5976 = vsel %vm5805, %v5698, %v5975
    %v5977 = vsel %vm5807, %v5702, %v5976
    %v5978 = vsel %vm5809, %v5706, %v5977
    %v5979 = vsel %vm5811, %v5923, %v5978
    %v5980 = vsel %vm5803, %v5718, %v5714
    %v5981 = vsel %vm5805, %v5722, %v5980
    %v5982 = vsel %vm5807, %v5726, %v5981
    %v5983 = vsel %vm5809, %v5730, %v5982
    %v5984 = vsel %vm5811, %v5927, %v5983
    %v5985 = vsel %vm5803, %v5742, %v5738
    %v5986 = vsel %vm5805, %v5746, %v5985
    %v5987 = vsel %vm5807, %v5750, %v5986
    %v5988 = vsel %vm5809, %v5754, %v5987
    %v5989 = vsel %vm5811, %v5931, %v5988
    %v5990 = vsel %vm5803, %v5766, %v5762
    %v5991 = vsel %vm5805, %v5770, %v5990
    %v5992 = vsel %vm5807, %v5774, %v5991
    %v5993 = vsel %vm5809, %v5778, %v5992
    %v5994 = vsel %vm5811, %v5935, %v5993
    %v5995 = vsel %vm5803, %v5790, %v5786
    %v5996 = vsel %vm5805, %v5794, %v5995
    %v5997 = vsel %vm5807, %v5798, %v5996
    %v5998 = vsel %vm5809, %v5802, %v5997
    %v5999 = vsel %vm5811, %v5939, %v5998
    %6000 = vrot.lane.b32.xlu0 %v5944, 16
    %v6001 = vpop.permute.xlu0 %6000
    %6002 = vrot.lane.b32.xlu0 %v5949, 16
    %v6003 = vpop.permute.xlu0 %6002
    %6004 = vrot.lane.b32.xlu0 %v5954, 16
    %v6005 = vpop.permute.xlu0 %6004
    %6006 = vrot.lane.b32.xlu0 %v5959, 16
    %v6007 = vpop.permute.xlu0 %6006
    %6008 = vrot.lane.b32.xlu0 %v5964, 16
    %v6009 = vpop.permute.xlu0 %6008
    %6010 = vrot.lane.b32.xlu0 %v5969, 16
    %v6011 = vpop.permute.xlu0 %6010
    %6012 = vrot.lane.b32.xlu0 %v5974, 16
    %v6013 = vpop.permute.xlu0 %6012
    %6014 = vrot.lane.b32.xlu0 %v5979, 16
    %v6015 = vpop.permute.xlu0 %6014
    %6016 = vrot.lane.b32.xlu0 %v5984, 16
    %v6017 = vpop.permute.xlu0 %6016
    %6018 = vrot.lane.b32.xlu0 %v5989, 16
    %v6019 = vpop.permute.xlu0 %6018
    %6020 = vrot.lane.b32.xlu0 %v5994, 16
    %v6021 = vpop.permute.xlu0 %6020
    %6022 = vrot.lane.b32.xlu0 %v5999, 16
    %v6023 = vpop.permute.xlu0 %6022
    %v6048 = vlaneseq
    %v6049 = vshrl.u32 %v6048, 7
    %v6050 = vsub.s32 0, %v6049
    %v6051 = vrot.slane %v5303, %v6050
    %v6052 = vlaneseq
    %v6053 = vshrl.u32 %v6052, 7
    %v6054 = vsub.s32 0, %v6053
    %v6055 = vrot.slane %v5311, %v6054
    %v6056 = vlaneseq
    %v6057 = vshrl.u32 %v6056, 7
    %v6058 = vsub.s32 0, %v6057
    %v6059 = vrot.slane %v5319, %v6058
    %v6060 = vlaneseq
    %v6061 = vshrl.u32 %v6060, 7
    %v6062 = vsub.s32 0, %v6061
    %v6063 = vrot.slane %v5327, %v6062
    %v6064 = vlaneseq
    %v6065 = vshrl.u32 %v6064, 7
    %v6066 = vsub.s32 0, %v6065
    %v6067 = vrot.slane %v5335, %v6066
    %v6068 = vlaneseq
    %v6069 = vshrl.u32 %v6068, 7
    %v6070 = vsub.s32 0, %v6069
    %v6071 = vrot.slane %v5343, %v6070
    %v6072 = vlaneseq
    %v6073 = vshrl.u32 %v6072, 7
    %v6074 = vsub.s32 0, %v6073
    %v6075 = vrot.slane %v5367, %v6074
    %v6076 = vlaneseq
    %v6077 = vshrl.u32 %v6076, 7
    %v6078 = vsub.s32 0, %v6077
    %v6079 = vrot.slane %v5375, %v6078
    %v6080 = vlaneseq
    %v6081 = vshrl.u32 %v6080, 7
    %v6082 = vsub.s32 0, %v6081
    %v6083 = vrot.slane %v5383, %v6082
    %v6084 = vlaneseq
    %v6085 = vshrl.u32 %v6084, 7
    %v6086 = vsub.s32 0, %v6085
    %v6087 = vrot.slane %v5391, %v6086
    %v6088 = vlaneseq
    %v6089 = vshrl.u32 %v6088, 7
    %v6090 = vsub.s32 0, %v6089
    %v6091 = vrot.slane %v5399, %v6090
    %v6092 = vlaneseq
    %v6093 = vshrl.u32 %v6092, 7
    %v6094 = vsub.s32 0, %v6093
    %v6095 = vrot.slane %v5407, %v6094
    %v6096 = vsel %vm5803, %v5530, %v5526
    %v6097 = vsel %vm5805, %v5534, %v6096
    %v6098 = vsel %vm5807, %v5538, %v6097
    %v6099 = vsel %vm5809, %v5895, %v6098
    %v6100 = vsel %vm5811, %v6051, %v6099
    %v6101 = vsel %vm5803, %v5554, %v5550
    %v6102 = vsel %vm5805, %v5558, %v6101
    %v6103 = vsel %vm5807, %v5562, %v6102
    %v6104 = vsel %vm5809, %v5899, %v6103
    %v6105 = vsel %vm5811, %v6055, %v6104
    %v6106 = vsel %vm5803, %v5578, %v5574
    %v6107 = vsel %vm5805, %v5582, %v6106
    %v6108 = vsel %vm5807, %v5586, %v6107
    %v6109 = vsel %vm5809, %v5903, %v6108
    %v6110 = vsel %vm5811, %v6059, %v6109
    %v6111 = vsel %vm5803, %v5602, %v5598
    %v6112 = vsel %vm5805, %v5606, %v6111
    %v6113 = vsel %vm5807, %v5610, %v6112
    %v6114 = vsel %vm5809, %v5907, %v6113
    %v6115 = vsel %vm5811, %v6063, %v6114
    %v6116 = vsel %vm5803, %v5626, %v5622
    %v6117 = vsel %vm5805, %v5630, %v6116
    %v6118 = vsel %vm5807, %v5634, %v6117
    %v6119 = vsel %vm5809, %v5911, %v6118
    %v6120 = vsel %vm5811, %v6067, %v6119
    %v6121 = vsel %vm5803, %v5650, %v5646
    %v6122 = vsel %vm5805, %v5654, %v6121
    %v6123 = vsel %vm5807, %v5658, %v6122
    %v6124 = vsel %vm5809, %v5915, %v6123
    %v6125 = vsel %vm5811, %v6071, %v6124
    %v6126 = vsel %vm5803, %v5674, %v5670
    %v6127 = vsel %vm5805, %v5678, %v6126
    %v6128 = vsel %vm5807, %v5682, %v6127
    %v6129 = vsel %vm5809, %v5919, %v6128
    %v6130 = vsel %vm5811, %v6075, %v6129
    %v6131 = vsel %vm5803, %v5698, %v5694
    %v6132 = vsel %vm5805, %v5702, %v6131
    %v6133 = vsel %vm5807, %v5706, %v6132
    %v6134 = vsel %vm5809, %v5923, %v6133
    %v6135 = vsel %vm5811, %v6079, %v6134
    %v6136 = vsel %vm5803, %v5722, %v5718
    %v6137 = vsel %vm5805, %v5726, %v6136
    %v6138 = vsel %vm5807, %v5730, %v6137
    %v6139 = vsel %vm5809, %v5927, %v6138
    %v6140 = vsel %vm5811, %v6083, %v6139
    %v6141 = vsel %vm5803, %v5746, %v5742
    %v6142 = vsel %vm5805, %v5750, %v6141
    %v6143 = vsel %vm5807, %v5754, %v6142
    %v6144 = vsel %vm5809, %v5931, %v6143
    %v6145 = vsel %vm5811, %v6087, %v6144
    %v6146 = vsel %vm5803, %v5770, %v5766
    %v6147 = vsel %vm5805, %v5774, %v6146
    %v6148 = vsel %vm5807, %v5778, %v6147
    %v6149 = vsel %vm5809, %v5935, %v6148
    %v6150 = vsel %vm5811, %v6091, %v6149
    %v6151 = vsel %vm5803, %v5794, %v5790
    %v6152 = vsel %vm5805, %v5798, %v6151
    %v6153 = vsel %vm5807, %v5802, %v6152
    %v6154 = vsel %vm5809, %v5939, %v6153
    %v6155 = vsel %vm5811, %v6095, %v6154
    %6156 = vrot.lane.b32.xlu0 %v6100, 32
    %v6157 = vpop.permute.xlu0 %6156
    %6158 = vrot.lane.b32.xlu0 %v6105, 32
    %v6159 = vpop.permute.xlu0 %6158
    %6160 = vrot.lane.b32.xlu0 %v6110, 32
    %v6161 = vpop.permute.xlu0 %6160
    %6162 = vrot.lane.b32.xlu0 %v6115, 32
    %v6163 = vpop.permute.xlu0 %6162
    %6164 = vrot.lane.b32.xlu0 %v6120, 32
    %v6165 = vpop.permute.xlu0 %6164
    %6166 = vrot.lane.b32.xlu0 %v6125, 32
    %v6167 = vpop.permute.xlu0 %6166
    %6168 = vrot.lane.b32.xlu0 %v6130, 32
    %v6169 = vpop.permute.xlu0 %6168
    %6170 = vrot.lane.b32.xlu0 %v6135, 32
    %v6171 = vpop.permute.xlu0 %6170
    %6172 = vrot.lane.b32.xlu0 %v6140, 32
    %v6173 = vpop.permute.xlu0 %6172
    %6174 = vrot.lane.b32.xlu0 %v6145, 32
    %v6175 = vpop.permute.xlu0 %6174
    %6176 = vrot.lane.b32.xlu0 %v6150, 32
    %v6177 = vpop.permute.xlu0 %6176
    %6178 = vrot.lane.b32.xlu0 %v6155, 32
    %v6179 = vpop.permute.xlu0 %6178
    %v6204 = vlaneseq
    %v6205 = vshrl.u32 %v6204, 7
    %v6206 = vsub.s32 0, %v6205
    %v6207 = vrot.slane %v5344, %v6206
    %v6208 = vlaneseq
    %v6209 = vshrl.u32 %v6208, 7
    %v6210 = vsub.s32 0, %v6209
    %v6211 = vrot.slane %v5345, %v6210
    %v6212 = vlaneseq
    %v6213 = vshrl.u32 %v6212, 7
    %v6214 = vsub.s32 0, %v6213
    %v6215 = vrot.slane %v5346, %v6214
    %v6216 = vlaneseq
    %v6217 = vshrl.u32 %v6216, 7
    %v6218 = vsub.s32 0, %v6217
    %v6219 = vrot.slane %v5347, %v6218
    %v6220 = vlaneseq
    %v6221 = vshrl.u32 %v6220, 7
    %v6222 = vsub.s32 0, %v6221
    %v6223 = vrot.slane %v5348, %v6222
    %v6224 = vlaneseq
    %v6225 = vshrl.u32 %v6224, 7
    %v6226 = vsub.s32 0, %v6225
    %v6227 = vrot.slane %v5349, %v6226
    %v6228 = vlaneseq
    %v6229 = vshrl.u32 %v6228, 7
    %v6230 = vsub.s32 0, %v6229
    %v6231 = vrot.slane %v5408, %v6230
    %v6232 = vlaneseq
    %v6233 = vshrl.u32 %v6232, 7
    %v6234 = vsub.s32 0, %v6233
    %v6235 = vrot.slane %v5409, %v6234
    %v6236 = vlaneseq
    %v6237 = vshrl.u32 %v6236, 7
    %v6238 = vsub.s32 0, %v6237
    %v6239 = vrot.slane %v5410, %v6238
    %v6240 = vlaneseq
    %v6241 = vshrl.u32 %v6240, 7
    %v6242 = vsub.s32 0, %v6241
    %v6243 = vrot.slane %v5411, %v6242
    %v6244 = vlaneseq
    %v6245 = vshrl.u32 %v6244, 7
    %v6246 = vsub.s32 0, %v6245
    %v6247 = vrot.slane %v5412, %v6246
    %v6248 = vlaneseq
    %v6249 = vshrl.u32 %v6248, 7
    %v6250 = vsub.s32 0, %v6249
    %v6251 = vrot.slane %v5413, %v6250
    %v6252 = vsel %vm5803, %v6211, %v6207
    %v6253 = vsel %vm5805, %v6215, %v6252
    %v6254 = vsel %vm5807, %v6219, %v6253
    %v6255 = vsel %vm5809, %v6223, %v6254
    %v6256 = vsel %vm5811, %v6227, %v6255
    %v6257 = vsel %vm5803, %v6235, %v6231
    %v6258 = vsel %vm5805, %v6239, %v6257
    %v6259 = vsel %vm5807, %v6243, %v6258
    %v6260 = vsel %vm5809, %v6247, %v6259
    %v6261 = vsel %vm5811, %v6251, %v6260
    %6262 = vrot.lane.b32.xlu0 %v5817, 48
    %v6263 = vpop.permute.xlu0 %6262
    %6264 = vrot.lane.b32.xlu0 %v5822, 48
    %v6265 = vpop.permute.xlu0 %6264
    %6266 = vrot.lane.b32.xlu0 %v5827, 48
    %v6267 = vpop.permute.xlu0 %6266
    %6268 = vrot.lane.b32.xlu0 %v5832, 48
    %v6269 = vpop.permute.xlu0 %6268
    %6270 = vrot.lane.b32.xlu0 %v5837, 48
    %v6271 = vpop.permute.xlu0 %6270
    %6272 = vrot.lane.b32.xlu0 %v6256, 48
    %v6273 = vpop.permute.xlu0 %6272
    %6274 = vrot.lane.b32.xlu0 %v5847, 48
    %v6275 = vpop.permute.xlu0 %6274
    %6276 = vrot.lane.b32.xlu0 %v5852, 48
    %v6277 = vpop.permute.xlu0 %6276
    %6278 = vrot.lane.b32.xlu0 %v5857, 48
    %v6279 = vpop.permute.xlu0 %6278
    %6280 = vrot.lane.b32.xlu0 %v5862, 48
    %v6281 = vpop.permute.xlu0 %6280
    %6282 = vrot.lane.b32.xlu0 %v5867, 48
    %v6283 = vpop.permute.xlu0 %6282
    %6284 = vrot.lane.b32.xlu0 %v6261, 48
    %v6285 = vpop.permute.xlu0 %6284
    %v6300 = vlaneseq
    %v6301 = vshrl.u32 %v6300, 7
    %v6302 = vsub.s32 0, %v6301
    %v6303 = vrot.slane %v5350, %v6302
    %v6304 = vlaneseq
    %v6305 = vshrl.u32 %v6304, 7
    %v6306 = vsub.s32 0, %v6305
    %v6307 = vrot.slane %v5414, %v6306
    %v6308 = vsel %vm5803, %v6215, %v6211
    %v6309 = vsel %vm5805, %v6219, %v6308
    %v6310 = vsel %vm5807, %v6223, %v6309
    %v6311 = vsel %vm5809, %v6227, %v6310
    %v6312 = vsel %vm5811, %v6303, %v6311
    %v6313 = vsel %vm5803, %v6239, %v6235
    %v6314 = vsel %vm5805, %v6243, %v6313
    %v6315 = vsel %vm5807, %v6247, %v6314
    %v6316 = vsel %vm5809, %v6251, %v6315
    %v6317 = vsel %vm5811, %v6307, %v6316
    %6318 = vrot.lane.b32.xlu0 %v5949, 64
    %v6319 = vpop.permute.xlu0 %6318
    %6320 = vrot.lane.b32.xlu0 %v5954, 64
    %v6321 = vpop.permute.xlu0 %6320
    %6322 = vrot.lane.b32.xlu0 %v5959, 64
    %v6323 = vpop.permute.xlu0 %6322
    %6324 = vrot.lane.b32.xlu0 %v5964, 64
    %v6325 = vpop.permute.xlu0 %6324
    %6326 = vrot.lane.b32.xlu0 %v5969, 64
    %v6327 = vpop.permute.xlu0 %6326
    %6328 = vrot.lane.b32.xlu0 %v6312, 64
    %v6329 = vpop.permute.xlu0 %6328
    %6330 = vrot.lane.b32.xlu0 %v5979, 64
    %v6331 = vpop.permute.xlu0 %6330
    %6332 = vrot.lane.b32.xlu0 %v5984, 64
    %v6333 = vpop.permute.xlu0 %6332
    %6334 = vrot.lane.b32.xlu0 %v5989, 64
    %v6335 = vpop.permute.xlu0 %6334
    %6336 = vrot.lane.b32.xlu0 %v5994, 64
    %v6337 = vpop.permute.xlu0 %6336
    %6338 = vrot.lane.b32.xlu0 %v5999, 64
    %v6339 = vpop.permute.xlu0 %6338
    %6340 = vrot.lane.b32.xlu0 %v6317, 64
    %v6341 = vpop.permute.xlu0 %6340
    %v6356 = vlaneseq
    %v6357 = vshrl.u32 %v6356, 7
    %v6358 = vsub.s32 0, %v6357
    %v6359 = vrot.slane %v5351, %v6358
    %v6360 = vlaneseq
    %v6361 = vshrl.u32 %v6360, 7
    %v6362 = vsub.s32 0, %v6361
    %v6363 = vrot.slane %v5415, %v6362
    %v6364 = vsel %vm5803, %v6219, %v6215
    %v6365 = vsel %vm5805, %v6223, %v6364
    %v6366 = vsel %vm5807, %v6227, %v6365
    %v6367 = vsel %vm5809, %v6303, %v6366
    %v6368 = vsel %vm5811, %v6359, %v6367
    %v6369 = vsel %vm5803, %v6243, %v6239
    %v6370 = vsel %vm5805, %v6247, %v6369
    %v6371 = vsel %vm5807, %v6251, %v6370
    %v6372 = vsel %vm5809, %v6307, %v6371
    %v6373 = vsel %vm5811, %v6363, %v6372
    %6374 = vrot.lane.b32.xlu0 %v6105, 80
    %v6375 = vpop.permute.xlu0 %6374
    %6376 = vrot.lane.b32.xlu0 %v6110, 80
    %v6377 = vpop.permute.xlu0 %6376
    %6378 = vrot.lane.b32.xlu0 %v6115, 80
    %v6379 = vpop.permute.xlu0 %6378
    %6380 = vrot.lane.b32.xlu0 %v6120, 80
    %v6381 = vpop.permute.xlu0 %6380
    %6382 = vrot.lane.b32.xlu0 %v6125, 80
    %v6383 = vpop.permute.xlu0 %6382
    %6384 = vrot.lane.b32.xlu0 %v6368, 80
    %v6385 = vpop.permute.xlu0 %6384
    %6386 = vrot.lane.b32.xlu0 %v6135, 80
    %v6387 = vpop.permute.xlu0 %6386
    %6388 = vrot.lane.b32.xlu0 %v6140, 80
    %v6389 = vpop.permute.xlu0 %6388
    %6390 = vrot.lane.b32.xlu0 %v6145, 80
    %v6391 = vpop.permute.xlu0 %6390
    %6392 = vrot.lane.b32.xlu0 %v6150, 80
    %v6393 = vpop.permute.xlu0 %6392
    %6394 = vrot.lane.b32.xlu0 %v6155, 80
    %v6395 = vpop.permute.xlu0 %6394
    %6396 = vrot.lane.b32.xlu0 %v6373, 80
    %v6397 = vpop.permute.xlu0 %6396
    %v6422 = vlaneseq
    %v6423 = vshrl.u32 %v6422, 7
    %v6424 = vsub.s32 0, %v6423
    %v6425 = vrot.slane %v5352, %v6424
    %v6426 = vlaneseq
    %v6427 = vshrl.u32 %v6426, 7
    %v6428 = vsub.s32 0, %v6427
    %v6429 = vrot.slane %v5353, %v6428
    %v6430 = vlaneseq
    %v6431 = vshrl.u32 %v6430, 7
    %v6432 = vsub.s32 0, %v6431
    %v6433 = vrot.slane %v5354, %v6432
    %v6434 = vlaneseq
    %v6435 = vshrl.u32 %v6434, 7
    %v6436 = vsub.s32 0, %v6435
    %v6437 = vrot.slane %v5355, %v6436
    %v6438 = vlaneseq
    %v6439 = vshrl.u32 %v6438, 7
    %v6440 = vsub.s32 0, %v6439
    %v6441 = vrot.slane %v5356, %v6440
    %v6442 = vlaneseq
    %v6443 = vshrl.u32 %v6442, 7
    %v6444 = vsub.s32 0, %v6443
    %v6445 = vrot.slane %v5357, %v6444
    %v6446 = vlaneseq
    %v6447 = vshrl.u32 %v6446, 7
    %v6448 = vsub.s32 0, %v6447
    %v6449 = vrot.slane %v5416, %v6448
    %v6450 = vlaneseq
    %v6451 = vshrl.u32 %v6450, 7
    %v6452 = vsub.s32 0, %v6451
    %v6453 = vrot.slane %v5417, %v6452
    %v6454 = vlaneseq
    %v6455 = vshrl.u32 %v6454, 7
    %v6456 = vsub.s32 0, %v6455
    %v6457 = vrot.slane %v5418, %v6456
    %v6458 = vlaneseq
    %v6459 = vshrl.u32 %v6458, 7
    %v6460 = vsub.s32 0, %v6459
    %v6461 = vrot.slane %v5419, %v6460
    %v6462 = vlaneseq
    %v6463 = vshrl.u32 %v6462, 7
    %v6464 = vsub.s32 0, %v6463
    %v6465 = vrot.slane %v5420, %v6464
    %v6466 = vlaneseq
    %v6467 = vshrl.u32 %v6466, 7
    %v6468 = vsub.s32 0, %v6467
    %v6469 = vrot.slane %v5421, %v6468
    %v6470 = vsel %vm5803, %v6429, %v6425
    %v6471 = vsel %vm5805, %v6433, %v6470
    %v6472 = vsel %vm5807, %v6437, %v6471
    %v6473 = vsel %vm5809, %v6441, %v6472
    %v6474 = vsel %vm5811, %v6445, %v6473
    %v6475 = vsel %vm5803, %v6453, %v6449
    %v6476 = vsel %vm5805, %v6457, %v6475
    %v6477 = vsel %vm5807, %v6461, %v6476
    %v6478 = vsel %vm5809, %v6465, %v6477
    %v6479 = vsel %vm5811, %v6469, %v6478
    %6480 = vrot.lane.b32.xlu0 %v5822, 96
    %v6481 = vpop.permute.xlu0 %6480
    %6482 = vrot.lane.b32.xlu0 %v5827, 96
    %v6483 = vpop.permute.xlu0 %6482
    %6484 = vrot.lane.b32.xlu0 %v5832, 96
    %v6485 = vpop.permute.xlu0 %6484
    %6486 = vrot.lane.b32.xlu0 %v5837, 96
    %v6487 = vpop.permute.xlu0 %6486
    %6488 = vrot.lane.b32.xlu0 %v6256, 96
    %v6489 = vpop.permute.xlu0 %6488
    %6490 = vrot.lane.b32.xlu0 %v6474, 96
    %v6491 = vpop.permute.xlu0 %6490
    %6492 = vrot.lane.b32.xlu0 %v5852, 96
    %v6493 = vpop.permute.xlu0 %6492
    %6494 = vrot.lane.b32.xlu0 %v5857, 96
    %v6495 = vpop.permute.xlu0 %6494
    %6496 = vrot.lane.b32.xlu0 %v5862, 96
    %v6497 = vpop.permute.xlu0 %6496
    %6498 = vrot.lane.b32.xlu0 %v5867, 96
    %v6499 = vpop.permute.xlu0 %6498
    %6500 = vrot.lane.b32.xlu0 %v6261, 96
    %v6501 = vpop.permute.xlu0 %6500
    %6502 = vrot.lane.b32.xlu0 %v6479, 96
    %v6503 = vpop.permute.xlu0 %6502
    %v6518 = vlaneseq
    %v6519 = vshrl.u32 %v6518, 7
    %v6520 = vsub.s32 0, %v6519
    %v6521 = vrot.slane %v5358, %v6520
    %v6522 = vlaneseq
    %v6523 = vshrl.u32 %v6522, 7
    %v6524 = vsub.s32 0, %v6523
    %v6525 = vrot.slane %v5422, %v6524
    %v6526 = vsel %vm5803, %v6433, %v6429
    %v6527 = vsel %vm5805, %v6437, %v6526
    %v6528 = vsel %vm5807, %v6441, %v6527
    %v6529 = vsel %vm5809, %v6445, %v6528
    %v6530 = vsel %vm5811, %v6521, %v6529
    %v6531 = vsel %vm5803, %v6457, %v6453
    %v6532 = vsel %vm5805, %v6461, %v6531
    %v6533 = vsel %vm5807, %v6465, %v6532
    %v6534 = vsel %vm5809, %v6469, %v6533
    %v6535 = vsel %vm5811, %v6525, %v6534
    %6536 = vrot.lane.b32.xlu0 %v5954, 112
    %v6537 = vpop.permute.xlu0 %6536
    %6538 = vrot.lane.b32.xlu0 %v5959, 112
    %v6539 = vpop.permute.xlu0 %6538
    %6540 = vrot.lane.b32.xlu0 %v5964, 112
    %v6541 = vpop.permute.xlu0 %6540
    %6542 = vrot.lane.b32.xlu0 %v5969, 112
    %v6543 = vpop.permute.xlu0 %6542
    %6544 = vrot.lane.b32.xlu0 %v6312, 112
    %v6545 = vpop.permute.xlu0 %6544
    %6546 = vrot.lane.b32.xlu0 %v6530, 112
    %v6547 = vpop.permute.xlu0 %6546
    %6548 = vrot.lane.b32.xlu0 %v5984, 112
    %v6549 = vpop.permute.xlu0 %6548
    %6550 = vrot.lane.b32.xlu0 %v5989, 112
    %v6551 = vpop.permute.xlu0 %6550
    %6552 = vrot.lane.b32.xlu0 %v5994, 112
    %v6553 = vpop.permute.xlu0 %6552
    %6554 = vrot.lane.b32.xlu0 %v5999, 112
    %v6555 = vpop.permute.xlu0 %6554
    %6556 = vrot.lane.b32.xlu0 %v6317, 112
    %v6557 = vpop.permute.xlu0 %6556
    %6558 = vrot.lane.b32.xlu0 %v6535, 112
    %v6559 = vpop.permute.xlu0 %6558
    %v6574 = vlaneseq
    %v6575 = vshrl.u32 %v6574, 7
    %v6576 = vsub.s32 0, %v6575
    %v6577 = vrot.slane %v5359, %v6576
    %v6578 = vlaneseq
    %v6579 = vshrl.u32 %v6578, 7
    %v6580 = vsub.s32 0, %v6579
    %v6581 = vrot.slane %v5423, %v6580
    %v6582 = vsel %vm5803, %v6437, %v6433
    %v6583 = vsel %vm5805, %v6441, %v6582
    %v6584 = vsel %vm5807, %v6445, %v6583
    %v6585 = vsel %vm5809, %v6521, %v6584
    %v6586 = vsel %vm5811, %v6577, %v6585
    %v6587 = vsel %vm5803, %v6461, %v6457
    %v6588 = vsel %vm5805, %v6465, %v6587
    %v6589 = vsel %vm5807, %v6469, %v6588
    %v6590 = vsel %vm5809, %v6525, %v6589
    %v6591 = vsel %vm5811, %v6581, %v6590
    %vm6592 = vcmask 130048
    %v6593 = vsel %vm6592, %v5812, %v6001
    %v6594 = vsel %vm6592, %v5817, %v6003
    %v6595 = vsel %vm6592, %v5822, %v6005
    %v6596 = vsel %vm6592, %v5827, %v6007
    %v6597 = vsel %vm6592, %v5832, %v6009
    %v6598 = vsel %vm6592, %v5837, %v6011
    %v6599 = vsel %vm6592, %v5842, %v6013
    %v6600 = vsel %vm6592, %v5847, %v6015
    %v6601 = vsel %vm6592, %v5852, %v6017
    %v6602 = vsel %vm6592, %v5857, %v6019
    %v6603 = vsel %vm6592, %v5862, %v6021
    %v6604 = vsel %vm6592, %v5867, %v6023
    %vm6605 = vcmask 261120
    %v6606 = vsel %vm6605, %v6593, %v6157
    %v6607 = vsel %vm6605, %v6594, %v6159
    %v6608 = vsel %vm6605, %v6595, %v6161
    %v6609 = vsel %vm6605, %v6596, %v6163
    %v6610 = vsel %vm6605, %v6597, %v6165
    %v6611 = vsel %vm6605, %v6598, %v6167
    %v6612 = vsel %vm6605, %v6599, %v6169
    %v6613 = vsel %vm6605, %v6600, %v6171
    %v6614 = vsel %vm6605, %v6601, %v6173
    %v6615 = vsel %vm6605, %v6602, %v6175
    %v6616 = vsel %vm6605, %v6603, %v6177
    %v6617 = vsel %vm6605, %v6604, %v6179
    %vm6618 = vcmask 392192
    %v6619 = vsel %vm6618, %v6606, %v6263
    %v6620 = vsel %vm6618, %v6607, %v6265
    %v6621 = vsel %vm6618, %v6608, %v6267
    %v6622 = vsel %vm6618, %v6609, %v6269
    %v6623 = vsel %vm6618, %v6610, %v6271
    %v6624 = vsel %vm6618, %v6611, %v6273
    %v6625 = vsel %vm6618, %v6612, %v6275
    %v6626 = vsel %vm6618, %v6613, %v6277
    %v6627 = vsel %vm6618, %v6614, %v6279
    %v6628 = vsel %vm6618, %v6615, %v6281
    %v6629 = vsel %vm6618, %v6616, %v6283
    %v6630 = vsel %vm6618, %v6617, %v6285
    %vm6631 = vcmask 523264
    %v6632 = vsel %vm6631, %v6619, %v6319
    %v6633 = vsel %vm6631, %v6620, %v6321
    %v6634 = vsel %vm6631, %v6621, %v6323
    %v6635 = vsel %vm6631, %v6622, %v6325
    %v6636 = vsel %vm6631, %v6623, %v6327
    %v6637 = vsel %vm6631, %v6624, %v6329
    %v6638 = vsel %vm6631, %v6625, %v6331
    %v6639 = vsel %vm6631, %v6626, %v6333
    %v6640 = vsel %vm6631, %v6627, %v6335
    %v6641 = vsel %vm6631, %v6628, %v6337
    %v6642 = vsel %vm6631, %v6629, %v6339
    %v6643 = vsel %vm6631, %v6630, %v6341
    %vm6644 = vcmask 654336
    %v6645 = vsel %vm6644, %v6632, %v6375
    %v6646 = vsel %vm6644, %v6633, %v6377
    %v6647 = vsel %vm6644, %v6634, %v6379
    %v6648 = vsel %vm6644, %v6635, %v6381
    %v6649 = vsel %vm6644, %v6636, %v6383
    %v6650 = vsel %vm6644, %v6637, %v6385
    %v6651 = vsel %vm6644, %v6638, %v6387
    %v6652 = vsel %vm6644, %v6639, %v6389
    %v6653 = vsel %vm6644, %v6640, %v6391
    %v6654 = vsel %vm6644, %v6641, %v6393
    %v6655 = vsel %vm6644, %v6642, %v6395
    %v6656 = vsel %vm6644, %v6643, %v6397
    %vm6657 = vcmask 785408
    %v6658 = vsel %vm6657, %v6645, %v6481
    %v6659 = vsel %vm6657, %v6646, %v6483
    %v6660 = vsel %vm6657, %v6647, %v6485
    %v6661 = vsel %vm6657, %v6648, %v6487
    %v6662 = vsel %vm6657, %v6649, %v6489
    %v6663 = vsel %vm6657, %v6650, %v6491
    %v6664 = vsel %vm6657, %v6651, %v6493
    %v6665 = vsel %vm6657, %v6652, %v6495
    %v6666 = vsel %vm6657, %v6653, %v6497
    %v6667 = vsel %vm6657, %v6654, %v6499
    %v6668 = vsel %vm6657, %v6655, %v6501
    %v6669 = vsel %vm6657, %v6656, %v6503
    %vm6670 = vcmask 916480
    %v6671 = vsel %vm6670, %v6658, %v6537
    %v6672 = vsel %vm6670, %v6659, %v6539
    %v6673 = vsel %vm6670, %v6660, %v6541
    %v6674 = vsel %vm6670, %v6661, %v6543
    %v6675 = vsel %vm6670, %v6662, %v6545
    %v6676 = vsel %vm6670, %v6663, %v6547
    %v6677 = vsel %vm6670, %v6664, %v6549
    %v6678 = vsel %vm6670, %v6665, %v6551
    %v6679 = vsel %vm6670, %v6666, %v6553
    %v6680 = vsel %vm6670, %v6667, %v6555
    %v6681 = vsel %vm6670, %v6668, %v6557
    %v6682 = vsel %vm6670, %v6669, %v6559
    %v6695 = vcombine.low %v6671, %v6110
    %v6696 = vcombine.high %v6671, %v6110
    %v6698 = vunpack.c.l.s4 1983009808
    %v6699 = vunpack.c.0.s8 %v6698
    %v6700 = vlaneseq
    %v6701 = vshrl.u32 %v6700, 7
    %v6702 = vsub.s32 %v6699, %v6701
    %v6703 = vrot.slane %v6695, %v6702
    %v6705 = vunpack.c.l.s4 1983009808
    %v6706 = vunpack.c.0.s8 %v6705
    %v6707 = vlaneseq
    %v6708 = vshrl.u32 %v6707, 7
    %v6709 = vsub.s32 %v6706, %v6708
    %v6710 = vrot.slane %v6696, %v6709
    %v6711 = vcombine.high %v6703, %v6703
    %v6712 = vcombine.low %v6672, %v6115
    %v6713 = vcombine.high %v6672, %v6115
    %v6715 = vunpack.c.l.s4 1983009808
    %v6716 = vunpack.c.0.s8 %v6715
    %v6717 = vlaneseq
    %v6718 = vshrl.u32 %v6717, 7
    %v6719 = vsub.s32 %v6716, %v6718
    %v6720 = vrot.slane %v6712, %v6719
    %v6722 = vunpack.c.l.s4 1983009808
    %v6723 = vunpack.c.0.s8 %v6722
    %v6724 = vlaneseq
    %v6725 = vshrl.u32 %v6724, 7
    %v6726 = vsub.s32 %v6723, %v6725
    %v6727 = vrot.slane %v6713, %v6726
    %v6728 = vcombine.high %v6720, %v6720
    %v6729 = vcombine.low %v6673, %v6120
    %v6730 = vcombine.high %v6673, %v6120
    %v6732 = vunpack.c.l.s4 1983009808
    %v6733 = vunpack.c.0.s8 %v6732
    %v6734 = vlaneseq
    %v6735 = vshrl.u32 %v6734, 7
    %v6736 = vsub.s32 %v6733, %v6735
    %v6737 = vrot.slane %v6729, %v6736
    %v6739 = vunpack.c.l.s4 1983009808
    %v6740 = vunpack.c.0.s8 %v6739
    %v6741 = vlaneseq
    %v6742 = vshrl.u32 %v6741, 7
    %v6743 = vsub.s32 %v6740, %v6742
    %v6744 = vrot.slane %v6730, %v6743
    %v6745 = vcombine.high %v6737, %v6737
    %v6746 = vcombine.low %v6674, %v6125
    %v6747 = vcombine.high %v6674, %v6125
    %v6749 = vunpack.c.l.s4 1983009808
    %v6750 = vunpack.c.0.s8 %v6749
    %v6751 = vlaneseq
    %v6752 = vshrl.u32 %v6751, 7
    %v6753 = vsub.s32 %v6750, %v6752
    %v6754 = vrot.slane %v6746, %v6753
    %v6756 = vunpack.c.l.s4 1983009808
    %v6757 = vunpack.c.0.s8 %v6756
    %v6758 = vlaneseq
    %v6759 = vshrl.u32 %v6758, 7
    %v6760 = vsub.s32 %v6757, %v6759
    %v6761 = vrot.slane %v6747, %v6760
    %v6762 = vcombine.high %v6754, %v6754
    %v6763 = vcombine.low %v6675, %v6368
    %v6764 = vcombine.high %v6675, %v6368
    %v6766 = vunpack.c.l.s4 1983009808
    %v6767 = vunpack.c.0.s8 %v6766
    %v6768 = vlaneseq
    %v6769 = vshrl.u32 %v6768, 7
    %v6770 = vsub.s32 %v6767, %v6769
    %v6771 = vrot.slane %v6763, %v6770
    %v6773 = vunpack.c.l.s4 1983009808
    %v6774 = vunpack.c.0.s8 %v6773
    %v6775 = vlaneseq
    %v6776 = vshrl.u32 %v6775, 7
    %v6777 = vsub.s32 %v6774, %v6776
    %v6778 = vrot.slane %v6764, %v6777
    %v6779 = vcombine.high %v6771, %v6771
    %v6780 = vcombine.low %v6676, %v6586
    %v6781 = vcombine.high %v6676, %v6586
    %v6783 = vunpack.c.l.s4 1983009808
    %v6784 = vunpack.c.0.s8 %v6783
    %v6785 = vlaneseq
    %v6786 = vshrl.u32 %v6785, 7
    %v6787 = vsub.s32 %v6784, %v6786
    %v6788 = vrot.slane %v6780, %v6787
    %v6790 = vunpack.c.l.s4 1983009808
    %v6791 = vunpack.c.0.s8 %v6790
    %v6792 = vlaneseq
    %v6793 = vshrl.u32 %v6792, 7
    %v6794 = vsub.s32 %v6791, %v6793
    %v6795 = vrot.slane %v6781, %v6794
    %v6796 = vcombine.high %v6788, %v6788
    %v6797 = vcombine.low %v6677, %v6140
    %v6798 = vcombine.high %v6677, %v6140
    %v6800 = vunpack.c.l.s4 1983009808
    %v6801 = vunpack.c.0.s8 %v6800
    %v6802 = vlaneseq
    %v6803 = vshrl.u32 %v6802, 7
    %v6804 = vsub.s32 %v6801, %v6803
    %v6805 = vrot.slane %v6797, %v6804
    %v6807 = vunpack.c.l.s4 1983009808
    %v6808 = vunpack.c.0.s8 %v6807
    %v6809 = vlaneseq
    %v6810 = vshrl.u32 %v6809, 7
    %v6811 = vsub.s32 %v6808, %v6810
    %v6812 = vrot.slane %v6798, %v6811
    %v6813 = vcombine.high %v6805, %v6805
    %v6814 = vcombine.low %v6678, %v6145
    %v6815 = vcombine.high %v6678, %v6145
    %v6817 = vunpack.c.l.s4 1983009808
    %v6818 = vunpack.c.0.s8 %v6817
    %v6819 = vlaneseq
    %v6820 = vshrl.u32 %v6819, 7
    %v6821 = vsub.s32 %v6818, %v6820
    %v6822 = vrot.slane %v6814, %v6821
    %v6824 = vunpack.c.l.s4 1983009808
    %v6825 = vunpack.c.0.s8 %v6824
    %v6826 = vlaneseq
    %v6827 = vshrl.u32 %v6826, 7
    %v6828 = vsub.s32 %v6825, %v6827
    %v6829 = vrot.slane %v6815, %v6828
    %v6830 = vcombine.high %v6822, %v6822
    %v6831 = vcombine.low %v6679, %v6150
    %v6832 = vcombine.high %v6679, %v6150
    %v6834 = vunpack.c.l.s4 1983009808
    %v6835 = vunpack.c.0.s8 %v6834
    %v6836 = vlaneseq
    %v6837 = vshrl.u32 %v6836, 7
    %v6838 = vsub.s32 %v6835, %v6837
    %v6839 = vrot.slane %v6831, %v6838
    %v6841 = vunpack.c.l.s4 1983009808
    %v6842 = vunpack.c.0.s8 %v6841
    %v6843 = vlaneseq
    %v6844 = vshrl.u32 %v6843, 7
    %v6845 = vsub.s32 %v6842, %v6844
    %v6846 = vrot.slane %v6832, %v6845
    %v6847 = vcombine.high %v6839, %v6839
    %v6848 = vcombine.low %v6680, %v6155
    %v6849 = vcombine.high %v6680, %v6155
    %v6851 = vunpack.c.l.s4 1983009808
    %v6852 = vunpack.c.0.s8 %v6851
    %v6853 = vlaneseq
    %v6854 = vshrl.u32 %v6853, 7
    %v6855 = vsub.s32 %v6852, %v6854
    %v6856 = vrot.slane %v6848, %v6855
    %v6858 = vunpack.c.l.s4 1983009808
    %v6859 = vunpack.c.0.s8 %v6858
    %v6860 = vlaneseq
    %v6861 = vshrl.u32 %v6860, 7
    %v6862 = vsub.s32 %v6859, %v6861
    %v6863 = vrot.slane %v6849, %v6862
    %v6864 = vcombine.high %v6856, %v6856
    %v6865 = vcombine.low %v6681, %v6373
    %v6866 = vcombine.high %v6681, %v6373
    %v6868 = vunpack.c.l.s4 1983009808
    %v6869 = vunpack.c.0.s8 %v6868
    %v6870 = vlaneseq
    %v6871 = vshrl.u32 %v6870, 7
    %v6872 = vsub.s32 %v6869, %v6871
    %v6873 = vrot.slane %v6865, %v6872
    %v6875 = vunpack.c.l.s4 1983009808
    %v6876 = vunpack.c.0.s8 %v6875
    %v6877 = vlaneseq
    %v6878 = vshrl.u32 %v6877, 7
    %v6879 = vsub.s32 %v6876, %v6878
    %v6880 = vrot.slane %v6866, %v6879
    %v6881 = vcombine.high %v6873, %v6873
    %v6882 = vcombine.low %v6682, %v6591
    %v6883 = vcombine.high %v6682, %v6591
    %v6885 = vunpack.c.l.s4 1983009808
    %v6886 = vunpack.c.0.s8 %v6885
    %v6887 = vlaneseq
    %v6888 = vshrl.u32 %v6887, 7
    %v6889 = vsub.s32 %v6886, %v6888
    %v6890 = vrot.slane %v6882, %v6889
    %v6892 = vunpack.c.l.s4 1983009808
    %v6893 = vunpack.c.0.s8 %v6892
    %v6894 = vlaneseq
    %v6895 = vshrl.u32 %v6894, 7
    %v6896 = vsub.s32 %v6893, %v6895
    %v6897 = vrot.slane %v6883, %v6896
    %v6898 = vcombine.high %v6890, %v6890
    %v6899 = vcombine.low %v6703, %v6711
    %v6900 = vcombine.low %v6710, %v6720
    %v6902 = vunpack.c.l.s4 1983009808
    %v6903 = vunpack.c.0.s8 %v6902
    %v6904 = vlaneseq
    %v6905 = vshrl.u32 %v6904, 7
    %v6906 = vsub.s32 %v6903, %v6905
    %v6907 = vrot.slane %v6899, %v6906
    %v6909 = vunpack.c.l.s4 1983009808
    %v6910 = vunpack.c.0.s8 %v6909
    %v6911 = vlaneseq
    %v6912 = vshrl.u32 %v6911, 7
    %v6913 = vsub.s32 %v6910, %v6912
    %v6914 = vrot.slane %v6900, %v6913
    %v6915 = vcombine.low %v6907, %v6914
    %v6916 = vcombine.high %v6907, %v6914
    %v6917 = vcombine.low %v6728, %v6727
    %v6918 = vcombine.low %v6737, %v6745
    %v6920 = vunpack.c.l.s4 1983009808
    %v6921 = vunpack.c.0.s8 %v6920
    %v6922 = vlaneseq
    %v6923 = vshrl.u32 %v6922, 7
    %v6924 = vsub.s32 %v6921, %v6923
    %v6925 = vrot.slane %v6917, %v6924
    %v6927 = vunpack.c.l.s4 1983009808
    %v6928 = vunpack.c.0.s8 %v6927
    %v6929 = vlaneseq
    %v6930 = vshrl.u32 %v6929, 7
    %v6931 = vsub.s32 %v6928, %v6930
    %v6932 = vrot.slane %v6918, %v6931
    %v6933 = vcombine.low %v6925, %v6932
    %v6934 = vcombine.high %v6925, %v6932
    %v6935 = vcombine.low %v6744, %v6754
    %v6936 = vcombine.low %v6762, %v6761
    %v6938 = vunpack.c.l.s4 1983009808
    %v6939 = vunpack.c.0.s8 %v6938
    %v6940 = vlaneseq
    %v6941 = vshrl.u32 %v6940, 7
    %v6942 = vsub.s32 %v6939, %v6941
    %v6943 = vrot.slane %v6935, %v6942
    %v6945 = vunpack.c.l.s4 1983009808
    %v6946 = vunpack.c.0.s8 %v6945
    %v6947 = vlaneseq
    %v6948 = vshrl.u32 %v6947, 7
    %v6949 = vsub.s32 %v6946, %v6948
    %v6950 = vrot.slane %v6936, %v6949
    %v6951 = vcombine.low %v6943, %v6950
    %v6952 = vcombine.high %v6943, %v6950
    %v6953 = vcombine.low %v6771, %v6779
    %v6954 = vcombine.low %v6778, %v6788
    %v6956 = vunpack.c.l.s4 1983009808
    %v6957 = vunpack.c.0.s8 %v6956
    %v6958 = vlaneseq
    %v6959 = vshrl.u32 %v6958, 7
    %v6960 = vsub.s32 %v6957, %v6959
    %v6961 = vrot.slane %v6953, %v6960
    %v6963 = vunpack.c.l.s4 1983009808
    %v6964 = vunpack.c.0.s8 %v6963
    %v6965 = vlaneseq
    %v6966 = vshrl.u32 %v6965, 7
    %v6967 = vsub.s32 %v6964, %v6966
    %v6968 = vrot.slane %v6954, %v6967
    %v6969 = vcombine.low %v6961, %v6968
    %v6970 = vcombine.high %v6961, %v6968
    %v6971 = vcombine.low %v6796, %v6795
    %v6972 = vcombine.low %v6805, %v6813
    %v6974 = vunpack.c.l.s4 1983009808
    %v6975 = vunpack.c.0.s8 %v6974
    %v6976 = vlaneseq
    %v6977 = vshrl.u32 %v6976, 7
    %v6978 = vsub.s32 %v6975, %v6977
    %v6979 = vrot.slane %v6971, %v6978
    %v6981 = vunpack.c.l.s4 1983009808
    %v6982 = vunpack.c.0.s8 %v6981
    %v6983 = vlaneseq
    %v6984 = vshrl.u32 %v6983, 7
    %v6985 = vsub.s32 %v6982, %v6984
    %v6986 = vrot.slane %v6972, %v6985
    %v6987 = vcombine.low %v6979, %v6986
    %v6988 = vcombine.high %v6979, %v6986
    %v6989 = vcombine.low %v6812, %v6822
    %v6990 = vcombine.low %v6830, %v6829
    %v6992 = vunpack.c.l.s4 1983009808
    %v6993 = vunpack.c.0.s8 %v6992
    %v6994 = vlaneseq
    %v6995 = vshrl.u32 %v6994, 7
    %v6996 = vsub.s32 %v6993, %v6995
    %v6997 = vrot.slane %v6989, %v6996
    %v6999 = vunpack.c.l.s4 1983009808
    %v7000 = vunpack.c.0.s8 %v6999
    %v7001 = vlaneseq
    %v7002 = vshrl.u32 %v7001, 7
    %v7003 = vsub.s32 %v7000, %v7002
    %v7004 = vrot.slane %v6990, %v7003
    %v7005 = vcombine.low %v6997, %v7004
    %v7006 = vcombine.high %v6997, %v7004
    %v7007 = vcombine.low %v6839, %v6847
    %v7008 = vcombine.low %v6846, %v6856
    %v7010 = vunpack.c.l.s4 1983009808
    %v7011 = vunpack.c.0.s8 %v7010
    %v7012 = vlaneseq
    %v7013 = vshrl.u32 %v7012, 7
    %v7014 = vsub.s32 %v7011, %v7013
    %v7015 = vrot.slane %v7007, %v7014
    %v7017 = vunpack.c.l.s4 1983009808
    %v7018 = vunpack.c.0.s8 %v7017
    %v7019 = vlaneseq
    %v7020 = vshrl.u32 %v7019, 7
    %v7021 = vsub.s32 %v7018, %v7020
    %v7022 = vrot.slane %v7008, %v7021
    %v7023 = vcombine.low %v7015, %v7022
    %v7024 = vcombine.high %v7015, %v7022
    %v7025 = vcombine.low %v6864, %v6863
    %v7026 = vcombine.low %v6873, %v6881
    %v7028 = vunpack.c.l.s4 1983009808
    %v7029 = vunpack.c.0.s8 %v7028
    %v7030 = vlaneseq
    %v7031 = vshrl.u32 %v7030, 7
    %v7032 = vsub.s32 %v7029, %v7031
    %v7033 = vrot.slane %v7025, %v7032
    %v7035 = vunpack.c.l.s4 1983009808
    %v7036 = vunpack.c.0.s8 %v7035
    %v7037 = vlaneseq
    %v7038 = vshrl.u32 %v7037, 7
    %v7039 = vsub.s32 %v7036, %v7038
    %v7040 = vrot.slane %v7026, %v7039
    %v7041 = vcombine.low %v7033, %v7040
    %v7042 = vcombine.high %v7033, %v7040
    %v7043 = vcombine.low %v6880, %v6890
    %v7044 = vcombine.low %v6898, %v6897
    %v7046 = vunpack.c.l.s4 1983009808
    %v7047 = vunpack.c.0.s8 %v7046
    %v7048 = vlaneseq
    %v7049 = vshrl.u32 %v7048, 7
    %v7050 = vsub.s32 %v7047, %v7049
    %v7051 = vrot.slane %v7043, %v7050
    %v7053 = vunpack.c.l.s4 1983009808
    %v7054 = vunpack.c.0.s8 %v7053
    %v7055 = vlaneseq
    %v7056 = vshrl.u32 %v7055, 7
    %v7057 = vsub.s32 %v7054, %v7056
    %v7058 = vrot.slane %v7044, %v7057
    %v7059 = vcombine.low %v7051, %v7058
    %v7060 = vcombine.high %v7051, %v7058
    %v7079 = vpack.c.bf16 %v6933, %v6915
    %v7080 = vpack.c.bf16 %v6934, %v6916
    %v7081 = vpack.c.bf16 %v6969, %v6951
    %v7082 = vpack.c.bf16 %v6970, %v6952
    %v7083 = vpack.c.bf16 %v7005, %v6987
    %v7084 = vpack.c.bf16 %v7006, %v6988
    %v7085 = vpack.c.bf16 %v7041, %v7023
    %v7086 = vpack.c.bf16 %v7042, %v7024
    %v7087 = vpack.c.bf16 %v7059, %v7059
    %v7088 = vpack.c.bf16 %v7060, %v7060
    %v7090 = vlaneseq
    %v7091 = vshrl.u32 %v7090, 7
    %v7092 = vsub.s32 0, %v7091
    %v7093 = vrot.slane %v5442, %v7092
    %v7113 = vunpack.c.l.b16 %v5424
    %v7114 = vunpack.c.l.b16 %v5425
    %v7115 = vunpack.c.l.b16 %v5426
    %v7116 = vunpack.c.l.b16 %v5427
    %v7117 = vunpack.c.l.b16 %v5428
    %v7118 = vunpack.c.l.b16 %v5429
    %v7119 = vunpack.c.l.b16 %v5430
    %v7120 = vunpack.c.l.b16 %v5431
    %v7121 = vunpack.c.l.b16 %v5432
    %v7122 = vunpack.c.l.b16 %v5433
    %v7123 = vunpack.c.l.b16 %v5434
    %v7124 = vunpack.c.l.b16 %v5435
    %v7125 = vunpack.c.l.b16 %v5436
    %v7126 = vunpack.c.l.b16 %v5437
    %v7127 = vunpack.c.l.b16 %v5438
    %v7128 = vunpack.c.l.b16 %v5439
    %v7129 = vunpack.c.l.b16 %v5440
    %v7130 = vunpack.c.l.b16 %v5441
    %v7131 = vpack.c.b16 %v7114, %v7113
    %v7132 = vpack.c.b16 %v7116, %v7115
    %v7133 = vpack.c.b16 %v7118, %v7117
    %v7134 = vpack.c.b16 %v7120, %v7119
    %v7135 = vpack.c.b16 %v7122, %v7121
    %v7136 = vpack.c.b16 %v7124, %v7123
    %v7137 = vpack.c.b16 %v7126, %v7125
    %v7138 = vpack.c.b16 %v7128, %v7127
    %v7139 = vpack.c.b16 %v7130, %v7129
    %v7150 = vsel %vm6592, %v7080, 0
    %v7153 = vsel %vm6592, %v7082, 0
    %v7156 = vsel %vm6592, %v7084, 0
    %v7159 = vsel %vm6592, %v7086, 0
    %v7162 = vsel %vm6592, %v7088, 0
    %7164 = vmatprep.subr.bf16.mxu0 0
    %7165 = vmatpush1.bf16.msra.mxu0 %v7138
    %7166 = vmatprep.subr.bf16.mxu0 0
    %7167 = vmatpush1.bf16.msra.mxu0 %v7137
    %7168 = vmatprep.subr.bf16.mxu0 0
    %7169 = vmatpush1.bf16.msra.mxu0 %v7136
    %7170 = vmatprep.subr.bf16.mxu0 0
    %7171 = vmatpush1.bf16.msra.mxu0 %v7135
    %7172 = vmatprep.subr.bf16.mxu0 0
    %7173 = vmatpush1.bf16.msra.mxu0 %v7134
    %7174 = vmatprep.subr.bf16.mxu0 0
    %7175 = vmatpush1.bf16.msra.mxu0 %v7133
    %7176 = vmatprep.subr.bf16.mxu0 0
    %7177 = vmatpush1.bf16.msra.mxu0 %v7132
    %7178 = vmatprep.subr.bf16.mxu0 0
    %7179 = vmatpush1.bf16.msra.mxu0 %v7131
    %7180 = vmatprep.subr.bf16.mxu0 0
    %7181 = vmatpush2.bf16.msra.mxu0 0
    %7182 = vmatprep.subr.bf16.mxu0 0
    %7183 = vmatpush2.bf16.msra.mxu0 0
    %7184 = vmatprep.subr.bf16.mxu0 0
    %7185 = vmatpush2.bf16.msra.mxu0 0
    %7186 = vmatprep.subr.bf16.mxu0 0
    %7187 = vmatpush2.bf16.msra.mxu0 0
    %7188 = vmatprep.subr.bf16.mxu0 0
    %7189 = vmatpush2.bf16.msra.mxu0 0
    %7190 = vmatprep.subr.bf16.mxu0 0
    %7191 = vmatpush2.bf16.msra.mxu0 0
    %7192 = vmatprep.subr.bf16.mxu0 0
    %7193 = vmatpush2.bf16.msra.mxu0 0
    %7194 = vmatprep.subr.bf16.mxu0 0
    %7195 = vmatpush2.bf16.msra.mxu0 %v7139
    %7196 = vmatprep.mubr.bf16.mxu0 %v7150
    %7197 = vmatmul.mubr.bf16.gmra.mxu0 %v7079
    %v7198 = vpop.f32.mrf.mxu0
    %v7199 = vadd.f32 %v7093, %v7198
    %v7200 = vpop.f32.mrf.mxu0
    %v7201 = vpop.f32.mrf.mxu0
    %v7202 = vadd.f32 %v7093, %v7201
    %v7203 = vpop.f32.mrf.mxu0
    %7204 = vmatprep.mubr.bf16.mxu0 %v7153
    %7205 = vmatmul.mubr.bf16.gmra.mxu0 %v7081
    %v7206 = vpop.f32.mrf.mxu0
    %v7207 = vadd.f32 %v7093, %v7206
    %v7208 = vpop.f32.mrf.mxu0
    %v7209 = vpop.f32.mrf.mxu0
    %v7210 = vadd.f32 %v7093, %v7209
    %v7211 = vpop.f32.mrf.mxu0
    %7212 = vmatprep.mubr.bf16.mxu0 %v7156
    %7213 = vmatmul.mubr.bf16.gmra.mxu0 %v7083
    %v7214 = vpop.f32.mrf.mxu0
    %v7215 = vadd.f32 %v7093, %v7214
    %v7216 = vpop.f32.mrf.mxu0
    %v7217 = vpop.f32.mrf.mxu0
    %v7218 = vadd.f32 %v7093, %v7217
    %v7219 = vpop.f32.mrf.mxu0
    %7220 = vmatprep.mubr.bf16.mxu0 %v7159
    %7221 = vmatmul.mubr.bf16.gmra.mxu0 %v7085
    %v7222 = vpop.f32.mrf.mxu0
    %v7223 = vadd.f32 %v7093, %v7222
    %v7224 = vpop.f32.mrf.mxu0
    %v7225 = vpop.f32.mrf.mxu0
    %v7226 = vadd.f32 %v7093, %v7225
    %v7227 = vpop.f32.mrf.mxu0
    %7228 = vmatprep.mubr.bf16.mxu0 %v7162
    %7229 = vmatmul.mubr.bf16.gmra.mxu0 %v7087
    %v7230 = vpop.f32.mrf.mxu0
    %v7231 = vadd.f32 %v7093, %v7230
    %v7232 = vpop.f32.mrf.mxu0
    %v7233 = vpop.f32.mrf.mxu0
    %v7234 = vpop.f32.mrf.mxu0
    %7235 = vdwg.mxu0
    %v7245 = vcombine.high %v7199, %v7199
    %v7247 = vunpack.c.l.s4 1983009808
    %v7248 = vunpack.c.0.s8 %v7247
    %v7249 = vlaneseq
    %v7250 = vshrl.u32 %v7249, 7
    %v7251 = vsub.s32 %v7248, %v7250
    %v7252 = vrot.slane %v7199, %v7251
    %v7254 = vunpack.c.l.s4 1983009808
    %v7255 = vunpack.c.0.s8 %v7254
    %v7256 = vlaneseq
    %v7257 = vshrl.u32 %v7256, 7
    %v7258 = vsub.s32 %v7255, %v7257
    %v7259 = vrot.slane %v7245, %v7258
    %v7260 = vcombine.high %v7252, %v7252
    %v7261 = vcombine.high %v7259, %v7259
    %v7262 = vcombine.high %v7202, %v7202
    %v7264 = vunpack.c.l.s4 1983009808
    %v7265 = vunpack.c.0.s8 %v7264
    %v7266 = vlaneseq
    %v7267 = vshrl.u32 %v7266, 7
    %v7268 = vsub.s32 %v7265, %v7267
    %v7269 = vrot.slane %v7202, %v7268
    %v7271 = vunpack.c.l.s4 1983009808
    %v7272 = vunpack.c.0.s8 %v7271
    %v7273 = vlaneseq
    %v7274 = vshrl.u32 %v7273, 7
    %v7275 = vsub.s32 %v7272, %v7274
    %v7276 = vrot.slane %v7262, %v7275
    %v7277 = vcombine.high %v7269, %v7269
    %v7278 = vcombine.high %v7276, %v7276
    %v7279 = vcombine.high %v7207, %v7207
    %v7281 = vunpack.c.l.s4 1983009808
    %v7282 = vunpack.c.0.s8 %v7281
    %v7283 = vlaneseq
    %v7284 = vshrl.u32 %v7283, 7
    %v7285 = vsub.s32 %v7282, %v7284
    %v7286 = vrot.slane %v7207, %v7285
    %v7288 = vunpack.c.l.s4 1983009808
    %v7289 = vunpack.c.0.s8 %v7288
    %v7290 = vlaneseq
    %v7291 = vshrl.u32 %v7290, 7
    %v7292 = vsub.s32 %v7289, %v7291
    %v7293 = vrot.slane %v7279, %v7292
    %v7294 = vcombine.high %v7286, %v7286
    %v7295 = vcombine.high %v7293, %v7293
    %v7296 = vcombine.high %v7210, %v7210
    %v7298 = vunpack.c.l.s4 1983009808
    %v7299 = vunpack.c.0.s8 %v7298
    %v7300 = vlaneseq
    %v7301 = vshrl.u32 %v7300, 7
    %v7302 = vsub.s32 %v7299, %v7301
    %v7303 = vrot.slane %v7210, %v7302
    %v7305 = vunpack.c.l.s4 1983009808
    %v7306 = vunpack.c.0.s8 %v7305
    %v7307 = vlaneseq
    %v7308 = vshrl.u32 %v7307, 7
    %v7309 = vsub.s32 %v7306, %v7308
    %v7310 = vrot.slane %v7296, %v7309
    %v7311 = vcombine.high %v7303, %v7303
    %v7312 = vcombine.high %v7310, %v7310
    %v7313 = vcombine.high %v7215, %v7215
    %v7315 = vunpack.c.l.s4 1983009808
    %v7316 = vunpack.c.0.s8 %v7315
    %v7317 = vlaneseq
    %v7318 = vshrl.u32 %v7317, 7
    %v7319 = vsub.s32 %v7316, %v7318
    %v7320 = vrot.slane %v7215, %v7319
    %v7322 = vunpack.c.l.s4 1983009808
    %v7323 = vunpack.c.0.s8 %v7322
    %v7324 = vlaneseq
    %v7325 = vshrl.u32 %v7324, 7
    %v7326 = vsub.s32 %v7323, %v7325
    %v7327 = vrot.slane %v7313, %v7326
    %v7328 = vcombine.high %v7320, %v7320
    %v7329 = vcombine.high %v7327, %v7327
    %v7330 = vcombine.high %v7218, %v7218
    %v7332 = vunpack.c.l.s4 1983009808
    %v7333 = vunpack.c.0.s8 %v7332
    %v7334 = vlaneseq
    %v7335 = vshrl.u32 %v7334, 7
    %v7336 = vsub.s32 %v7333, %v7335
    %v7337 = vrot.slane %v7218, %v7336
    %v7339 = vunpack.c.l.s4 1983009808
    %v7340 = vunpack.c.0.s8 %v7339
    %v7341 = vlaneseq
    %v7342 = vshrl.u32 %v7341, 7
    %v7343 = vsub.s32 %v7340, %v7342
    %v7344 = vrot.slane %v7330, %v7343
    %v7345 = vcombine.high %v7337, %v7337
    %v7346 = vcombine.high %v7344, %v7344
    %v7347 = vcombine.high %v7223, %v7223
    %v7349 = vunpack.c.l.s4 1983009808
    %v7350 = vunpack.c.0.s8 %v7349
    %v7351 = vlaneseq
    %v7352 = vshrl.u32 %v7351, 7
    %v7353 = vsub.s32 %v7350, %v7352
    %v7354 = vrot.slane %v7223, %v7353
    %v7356 = vunpack.c.l.s4 1983009808
    %v7357 = vunpack.c.0.s8 %v7356
    %v7358 = vlaneseq
    %v7359 = vshrl.u32 %v7358, 7
    %v7360 = vsub.s32 %v7357, %v7359
    %v7361 = vrot.slane %v7347, %v7360
    %v7362 = vcombine.high %v7354, %v7354
    %v7363 = vcombine.high %v7361, %v7361
    %v7364 = vcombine.high %v7226, %v7226
    %v7366 = vunpack.c.l.s4 1983009808
    %v7367 = vunpack.c.0.s8 %v7366
    %v7368 = vlaneseq
    %v7369 = vshrl.u32 %v7368, 7
    %v7370 = vsub.s32 %v7367, %v7369
    %v7371 = vrot.slane %v7226, %v7370
    %v7373 = vunpack.c.l.s4 1983009808
    %v7374 = vunpack.c.0.s8 %v7373
    %v7375 = vlaneseq
    %v7376 = vshrl.u32 %v7375, 7
    %v7377 = vsub.s32 %v7374, %v7376
    %v7378 = vrot.slane %v7364, %v7377
    %v7379 = vcombine.high %v7371, %v7371
    %v7380 = vcombine.high %v7378, %v7378
    %v7381 = vcombine.high %v7231, %v7231
    %v7383 = vunpack.c.l.s4 1983009808
    %v7384 = vunpack.c.0.s8 %v7383
    %v7385 = vlaneseq
    %v7386 = vshrl.u32 %v7385, 7
    %v7387 = vsub.s32 %v7384, %v7386
    %v7388 = vrot.slane %v7231, %v7387
    %v7390 = vunpack.c.l.s4 1983009808
    %v7391 = vunpack.c.0.s8 %v7390
    %v7392 = vlaneseq
    %v7393 = vshrl.u32 %v7392, 7
    %v7394 = vsub.s32 %v7391, %v7393
    %v7395 = vrot.slane %v7381, %v7394
    %v7396 = vcombine.high %v7388, %v7388
    %v7397 = vcombine.high %v7395, %v7395
    %v7434 = vmax.f32 %v7252, %v7261
    %v7435 = vmax.f32 %v7260, %v7269
    %v7436 = vmax.f32 %v7259, %v7277
    %v7437 = vmax.f32 %v7276, %v7294
    %v7438 = vmax.f32 %v7278, %v7293
    %v7439 = vmax.f32 %v7286, %v7295
    %v7440 = vmax.f32 %v7303, %v7312
    %v7441 = vmax.f32 %v7311, %v7320
    %v7442 = vmax.f32 %v7310, %v7328
    %v7443 = vmax.f32 %v7327, %v7345
    %v7444 = vmax.f32 %v7329, %v7344
    %v7445 = vmax.f32 %v7337, %v7346
    %v7446 = vmax.f32 %v7354, %v7363
    %v7447 = vmax.f32 %v7362, %v7371
    %v7448 = vmax.f32 %v7361, %v7379
    %v7449 = vmax.f32 %v7378, %v7396
    %v7450 = vmax.f32 %v7380, %v7395
    %v7451 = vmax.f32 %v7388, %v7397
    %v7470 = vrot.slane %v7434, 7
    %v7471 = vrot.slane %v7470, 2
    %v7472 = vrot.slane %v7435, 7
    %v7473 = vrot.slane %v7472, 2
    %v7474 = vrot.slane %v7436, 7
    %v7475 = vrot.slane %v7474, 2
    %v7476 = vrot.slane %v7437, 7
    %v7477 = vrot.slane %v7476, 2
    %v7478 = vrot.slane %v7438, 7
    %v7479 = vrot.slane %v7478, 2
    %v7480 = vrot.slane %v7439, 7
    %v7481 = vrot.slane %v7480, 2
    %v7482 = vrot.slane %v7440, 7
    %v7483 = vrot.slane %v7482, 2
    %v7484 = vrot.slane %v7441, 7
    %v7485 = vrot.slane %v7484, 2
    %v7486 = vrot.slane %v7442, 7
    %v7487 = vrot.slane %v7486, 2
    %v7488 = vrot.slane %v7443, 7
    %v7489 = vrot.slane %v7488, 2
    %v7490 = vrot.slane %v7444, 7
    %v7491 = vrot.slane %v7490, 2
    %v7492 = vrot.slane %v7445, 7
    %v7493 = vrot.slane %v7492, 2
    %v7494 = vrot.slane %v7446, 7
    %v7495 = vrot.slane %v7494, 2
    %v7496 = vrot.slane %v7447, 7
    %v7497 = vrot.slane %v7496, 2
    %v7498 = vrot.slane %v7448, 7
    %v7499 = vrot.slane %v7498, 2
    %v7500 = vrot.slane %v7449, 7
    %v7501 = vrot.slane %v7500, 2
    %v7502 = vrot.slane %v7450, 7
    %v7503 = vrot.slane %v7502, 2
    %v7504 = vrot.slane %v7451, 7
    %v7505 = vrot.slane %v7504, 2
    %v7524 = vmax.f32 %v7434, %v7471
    %v7525 = vmax.f32 %v7435, %v7473
    %v7526 = vmax.f32 %v7436, %v7475
    %v7527 = vmax.f32 %v7437, %v7477
    %v7528 = vmax.f32 %v7438, %v7479
    %v7529 = vmax.f32 %v7439, %v7481
    %v7530 = vmax.f32 %v7440, %v7483
    %v7531 = vmax.f32 %v7441, %v7485
    %v7532 = vmax.f32 %v7442, %v7487
    %v7533 = vmax.f32 %v7443, %v7489
    %v7534 = vmax.f32 %v7444, %v7491
    %v7535 = vmax.f32 %v7445, %v7493
    %v7536 = vmax.f32 %v7446, %v7495
    %v7537 = vmax.f32 %v7447, %v7497
    %v7538 = vmax.f32 %v7448, %v7499
    %v7539 = vmax.f32 %v7449, %v7501
    %v7540 = vmax.f32 %v7450, %v7503
    %v7541 = vmax.f32 %v7451, %v7505
    %v7542 = vmax.f32 %v7524, 0.0
    %v7543 = vmax.f32 %v7525, 0.0
    %v7544 = vmax.f32 %v7526, 0.0
    %v7545 = vmax.f32 %v7527, 0.0
    %v7546 = vmax.f32 %v7528, 0.0
    %v7547 = vmax.f32 %v7529, 0.0
    %v7548 = vmax.f32 %v7530, 0.0
    %v7549 = vmax.f32 %v7531, 0.0
    %v7550 = vmax.f32 %v7532, 0.0
    %v7551 = vmax.f32 %v7533, 0.0
    %v7552 = vmax.f32 %v7534, 0.0
    %v7553 = vmax.f32 %v7535, 0.0
    %v7554 = vmax.f32 %v7536, 0.0
    %v7555 = vmax.f32 %v7537, 0.0
    %v7556 = vmax.f32 %v7538, 0.0
    %v7557 = vmax.f32 %v7539, 0.0
    %v7558 = vmax.f32 %v7540, 0.0
    %v7559 = vmax.f32 %v7541, 0.0
    %v7560 = vld [vmem:[%s5] sm:$0xf]
    %v7561 = vld [vmem:[%s5 + $0x4] sm:$0xf]
    %v7562 = vld [vmem:[%s5 + $0x8] sm:$0xf]
    %v7563 = vld [vmem:[%s5 + $0xc] sm:$0xf]
    %v7564 = vld [vmem:[%s5 + $0x10] sm:$0xf]
    %v7565 = vld [vmem:[%s5 + $0x14] sm:$0xf]
    %v7566 = vld [vmem:[%s5 + $0x18] sm:$0xf]
    %v7567 = vld [vmem:[%s5 + $0x1c] sm:$0xf]
    %v7568 = vld [vmem:[%s5 + $0x20] sm:$0xf]
    %v7569 = vld [vmem:[%s5 + $0x24] sm:$0xf]
    %v7570 = vld [vmem:[%s5 + $0x28] sm:$0xf]
    %v7571 = vld [vmem:[%s5 + $0x2c] sm:$0xf]
    %v7572 = vld [vmem:[%s5 + $0x30] sm:$0xf]
    %v7573 = vld [vmem:[%s5 + $0x34] sm:$0xf]
    %v7574 = vld [vmem:[%s5 + $0x38] sm:$0xf]
    %v7575 = vld [vmem:[%s5 + $0x3c] sm:$0xf]
    %v7576 = vld [vmem:[%s6] sm:$0x1]
    %v7585 = vlaneseq
    %v7586 = vshrl.u32 %v7585, 7
    %v7587 = vsub.s32 0, %v7586
    %v7588 = vrot.slane %v7542, %v7587
    %v7589 = vlaneseq
    %v7590 = vshrl.u32 %v7589, 7
    %v7591 = vsub.s32 0, %v7590
    %v7592 = vrot.slane %v7543, %v7591
    %v7593 = vlaneseq
    %v7594 = vshrl.u32 %v7593, 7
    %v7595 = vsub.s32 0, %v7594
    %v7596 = vrot.slane %v7545, %v7595
    %v7597 = vlaneseq
    %v7598 = vshrl.u32 %v7597, 7
    %v7599 = vsub.s32 0, %v7598
    %v7600 = vrot.slane %v7546, %v7599
    %v7601 = vlaneseq
    %v7602 = vshrl.u32 %v7601, 7
    %v7603 = vsub.s32 0, %v7602
    %v7604 = vrot.slane %v7551, %v7603
    %v7605 = vlaneseq
    %v7606 = vshrl.u32 %v7605, 7
    %v7607 = vsub.s32 0, %v7606
    %v7608 = vrot.slane %v7552, %v7607
    %v7609 = vlaneseq
    %v7610 = vshrl.u32 %v7609, 7
    %v7611 = vsub.s32 0, %v7610
    %v7612 = vrot.slane %v7554, %v7611
    %v7613 = vlaneseq
    %v7614 = vshrl.u32 %v7613, 7
    %v7615 = vsub.s32 0, %v7614
    %v7616 = vrot.slane %v7555, %v7615
    %v7617 = vsel %vm5803, %v7592, %v7588
    %v7618 = vsel %vm5803, %v7600, %v7596
    %v7619 = vsel %vm5803, %v7608, %v7604
    %v7620 = vsel %vm5803, %v7616, %v7612
    %v7629 = vlaneseq
    %v7630 = vshrl.u32 %v7629, 7
    %v7631 = vsub.s32 0, %v7630
    %v7632 = vrot.slane %v7544, %v7631
    %v7633 = vlaneseq
    %v7634 = vshrl.u32 %v7633, 7
    %v7635 = vsub.s32 0, %v7634
    %v7636 = vrot.slane %v7547, %v7635
    %v7637 = vlaneseq
    %v7638 = vshrl.u32 %v7637, 7
    %v7639 = vsub.s32 0, %v7638
    %v7640 = vrot.slane %v7553, %v7639
    %v7641 = vlaneseq
    %v7642 = vshrl.u32 %v7641, 7
    %v7643 = vsub.s32 0, %v7642
    %v7644 = vrot.slane %v7556, %v7643
    %v7645 = vsel %vm5803, %v7632, %v7592
    %v7646 = vsel %vm5803, %v7636, %v7600
    %v7647 = vsel %vm5803, %v7640, %v7608
    %v7648 = vsel %vm5803, %v7644, %v7616
    %7649 = vrot.lane.b32.xlu0 %v7645, 32
    %v7650 = vpop.permute.xlu0 %7649
    %7651 = vrot.lane.b32.xlu0 %v7646, 32
    %v7652 = vpop.permute.xlu0 %7651
    %7653 = vrot.lane.b32.xlu0 %v7647, 32
    %v7654 = vpop.permute.xlu0 %7653
    %7655 = vrot.lane.b32.xlu0 %v7648, 32
    %v7656 = vpop.permute.xlu0 %7655
    %v7665 = vlaneseq
    %v7666 = vshrl.u32 %v7665, 7
    %v7667 = vsub.s32 0, %v7666
    %v7668 = vrot.slane %v7548, %v7667
    %v7669 = vlaneseq
    %v7670 = vshrl.u32 %v7669, 7
    %v7671 = vsub.s32 0, %v7670
    %v7672 = vrot.slane %v7549, %v7671
    %v7673 = vlaneseq
    %v7674 = vshrl.u32 %v7673, 7
    %v7675 = vsub.s32 0, %v7674
    %v7676 = vrot.slane %v7557, %v7675
    %v7677 = vlaneseq
    %v7678 = vshrl.u32 %v7677, 7
    %v7679 = vsub.s32 0, %v7678
    %v7680 = vrot.slane %v7558, %v7679
    %v7681 = vsel %vm5803, %v7672, %v7668
    %v7682 = vsel %vm5803, %v7680, %v7676
    %7683 = vrot.lane.b32.xlu0 %v7618, 64
    %v7684 = vpop.permute.xlu0 %7683
    %7685 = vrot.lane.b32.xlu0 %v7681, 64
    %v7686 = vpop.permute.xlu0 %7685
    %7687 = vrot.lane.b32.xlu0 %v7620, 64
    %v7688 = vpop.permute.xlu0 %7687
    %7689 = vrot.lane.b32.xlu0 %v7682, 64
    %v7690 = vpop.permute.xlu0 %7689
    %v7697 = vlaneseq
    %v7698 = vshrl.u32 %v7697, 7
    %v7699 = vsub.s32 0, %v7698
    %v7700 = vrot.slane %v7550, %v7699
    %v7701 = vlaneseq
    %v7702 = vshrl.u32 %v7701, 7
    %v7703 = vsub.s32 0, %v7702
    %v7704 = vrot.slane %v7559, %v7703
    %v7705 = vsel %vm5803, %v7700, %v7672
    %v7706 = vsel %vm5803, %v7704, %v7680
    %7707 = vrot.lane.b32.xlu0 %v7646, 96
    %v7708 = vpop.permute.xlu0 %7707
    %7709 = vrot.lane.b32.xlu0 %v7705, 96
    %v7710 = vpop.permute.xlu0 %7709
    %7711 = vrot.lane.b32.xlu0 %v7648, 96
    %v7712 = vpop.permute.xlu0 %7711
    %7713 = vrot.lane.b32.xlu0 %v7706, 96
    %v7714 = vpop.permute.xlu0 %7713
    %v7719 = vsel %vm6605, %v7617, %v7650
    %v7720 = vsel %vm6605, %v7618, %v7652
    %v7721 = vsel %vm6605, %v7619, %v7654
    %v7722 = vsel %vm6605, %v7620, %v7656
    %v7723 = vsel %vm6631, %v7719, %v7684
    %v7724 = vsel %vm6631, %v7720, %v7686
    %v7725 = vsel %vm6631, %v7721, %v7688
    %v7726 = vsel %vm6631, %v7722, %v7690
    %v7727 = vsel %vm6657, %v7723, %v7708
    %v7728 = vsel %vm6657, %v7724, %v7710
    %v7729 = vsel %vm6657, %v7725, %v7712
    %v7730 = vsel %vm6657, %v7726, %v7714
    %v7735 = vcombine.low %v7727, %v7728
    %v7736 = vcombine.low %v7729, %v7730
    %v7738 = vunpack.c.l.s4 1983009808
    %v7739 = vunpack.c.0.s8 %v7738
    %v7740 = vlaneseq
    %v7741 = vshrl.u32 %v7740, 7
    %v7742 = vsub.s32 %v7739, %v7741
    %v7743 = vrot.slane %v7735, %v7742
    %v7745 = vunpack.c.l.s4 1983009808
    %v7746 = vunpack.c.0.s8 %v7745
    %v7747 = vlaneseq
    %v7748 = vshrl.u32 %v7747, 7
    %v7749 = vsub.s32 %v7746, %v7748
    %v7750 = vrot.slane %v7736, %v7749
    %v7751 = vcombine.low %v7743, %v7750
    %v7753 = vpack.c.bf16 %v7751, %v7751
    %v7755 = vlaneseq
    %v7756 = vshrl.u32 %v7755, 7
    %v7757 = vsub.s32 0, %v7756
    %v7758 = vrot.slane %v7576, %v7757
    %v7776 = vunpack.c.l.b16 %v7560
    %v7777 = vunpack.c.l.b16 %v7561
    %v7778 = vunpack.c.l.b16 %v7562
    %v7779 = vunpack.c.l.b16 %v7563
    %v7780 = vunpack.c.l.b16 %v7564
    %v7781 = vunpack.c.l.b16 %v7565
    %v7782 = vunpack.c.l.b16 %v7566
    %v7783 = vunpack.c.l.b16 %v7567
    %v7784 = vunpack.c.l.b16 %v7568
    %v7785 = vunpack.c.l.b16 %v7569
    %v7786 = vunpack.c.l.b16 %v7570
    %v7787 = vunpack.c.l.b16 %v7571
    %v7788 = vunpack.c.l.b16 %v7572
    %v7789 = vunpack.c.l.b16 %v7573
    %v7790 = vunpack.c.l.b16 %v7574
    %v7791 = vunpack.c.l.b16 %v7575
    %v7792 = vpack.c.b16 %v7777, %v7776
    %v7793 = vpack.c.b16 %v7779, %v7778
    %v7794 = vpack.c.b16 %v7781, %v7780
    %v7795 = vpack.c.b16 %v7783, %v7782
    %v7796 = vpack.c.b16 %v7785, %v7784
    %v7797 = vpack.c.b16 %v7787, %v7786
    %v7798 = vpack.c.b16 %v7789, %v7788
    %v7799 = vpack.c.b16 %v7791, %v7790
    %7808 = vmatprep.subr.bf16.mxu0 0
    %7809 = vmatpush1.bf16.msra.mxu0 %v7799
    %7810 = vmatprep.subr.bf16.mxu0 0
    %7811 = vmatpush1.bf16.msra.mxu0 %v7798
    %7812 = vmatprep.subr.bf16.mxu0 0
    %7813 = vmatpush1.bf16.msra.mxu0 %v7797
    %7814 = vmatprep.subr.bf16.mxu0 0
    %7815 = vmatpush1.bf16.msra.mxu0 %v7796
    %7816 = vmatprep.subr.bf16.mxu0 0
    %7817 = vmatpush1.bf16.msra.mxu0 %v7795
    %7818 = vmatprep.subr.bf16.mxu0 0
    %7819 = vmatpush1.bf16.msra.mxu0 %v7794
    %7820 = vmatprep.subr.bf16.mxu0 0
    %7821 = vmatpush1.bf16.msra.mxu0 %v7793
    %7822 = vmatprep.subr.bf16.mxu0 0
    %7823 = vmatpush1.bf16.msra.mxu0 %v7792
    %7824 = vmatprep.subr.bf16.mxu0 0
    %7825 = vmatpush2.bf16.msra.mxu0 0
    %7826 = vmatprep.subr.bf16.mxu0 0
    %7827 = vmatpush2.bf16.msra.mxu0 0
    %7828 = vmatprep.subr.bf16.mxu0 0
    %7829 = vmatpush2.bf16.msra.mxu0 0
    %7830 = vmatprep.subr.bf16.mxu0 0
    %7831 = vmatpush2.bf16.msra.mxu0 0
    %7832 = vmatprep.subr.bf16.mxu0 0
    %7833 = vmatpush2.bf16.msra.mxu0 0
    %7834 = vmatprep.subr.bf16.mxu0 0
    %7835 = vmatpush2.bf16.msra.mxu0 0
    %7836 = vmatprep.subr.bf16.mxu0 0
    %7837 = vmatpush2.bf16.msra.mxu0 0
    %7838 = vmatprep.subr.bf16.mxu0 0
    %7839 = vmatpush2.bf16.msra.mxu0 0
    %7840 = vmatprep.mubr.bf16.mxu0 0
    %7841 = vmatmul.mubr.bf16.gmra.mxu0 %v7753
    %v7842 = vpop.f32.mrf.mxu0
    %v7843 = vadd.f32 %v7758, %v7842
    %v7844 = vpop.f32.mrf.mxu0
    %v7845 = vpop.f32.mrf.mxu0
    %v7846 = vpop.f32.mrf.mxu0
    %7847 = vdwg.mxu0
    %v7849 = vcombine.high %v7843, %v7843
    %v7851 = vunpack.c.l.s4 1983009808
    %v7852 = vunpack.c.0.s8 %v7851
    %v7853 = vlaneseq
    %v7854 = vshrl.u32 %v7853, 7
    %v7855 = vsub.s32 %v7852, %v7854
    %v7856 = vrot.slane %v7843, %v7855
    %v7858 = vunpack.c.l.s4 1983009808
    %v7859 = vunpack.c.0.s8 %v7858
    %v7860 = vlaneseq
    %v7861 = vshrl.u32 %v7860, 7
    %v7862 = vsub.s32 %v7859, %v7861
    %v7863 = vrot.slane %v7849, %v7862
    %v7864 = vcombine.high %v7856, %v7856
    %v7865 = vcombine.high %v7863, %v7863
    %v7870 = vmax.f32 %v7856, %v7864
    %v7871 = vmax.f32 %v7863, %v7865
    %v7874 = vrot.slane %v7870, 7
    %v7875 = vrot.slane %v7874, 2
    %v7876 = vrot.slane %v7871, 7
    %v7877 = vrot.slane %v7876, 2
    %v7880 = vmax.f32 %v7870, %v7875
    %v7881 = vmax.f32 %v7871, %v7877
    %v7882 = vmax.f32 %v7880, 0.0
    %v7883 = vmax.f32 %v7881, 0.0
    %v7884 = vpack.c.bf16 %v7882, %v7882
    %v7885 = vpack.c.bf16 %v7883, %v7883
    %v7886 = vld [vmem:[%s7] sm:$0xf]
    %v7887 = vld [vmem:[%s7 + $0x4] sm:$0xf]
    %v7888 = vld [vmem:[%s7 + $0x8] sm:$0xf]
    %v7889 = vld [vmem:[%s7 + $0xc] sm:$0xf]
    %v7890 = vld [vmem:[%s7 + $0x10] sm:$0xf]
    %v7891 = vld [vmem:[%s7 + $0x14] sm:$0xf]
    %v7892 = vld [vmem:[%s7 + $0x18] sm:$0xf]
    %v7893 = vld [vmem:[%s7 + $0x1c] sm:$0xf]
    %v7894 = vld [vmem:[%s8] sm:$0x1]
    %v7896 = vlaneseq
    %v7897 = vshrl.u32 %v7896, 7
    %v7898 = vsub.s32 0, %v7897
    %v7899 = vrot.slane %v7894, %v7898
    %v7903 = vunpack.c.l.b16 %v7884
    %v7904 = vunpack.c.l.b16 %v7885
    %v7905 = vrot.slane %v7904, 7
    %v7906 = vsel %vm5803, %v7905, %v7903
    %v7907 = vpack.c.b16 %v7906, %v7906
    %v7916 = vunpack.c.l.b16 %v7886
    %v7917 = vunpack.c.l.b16 %v7887
    %v7918 = vunpack.c.l.b16 %v7888
    %v7919 = vunpack.c.l.b16 %v7889
    %v7920 = vunpack.c.l.b16 %v7890
    %v7921 = vunpack.c.l.b16 %v7891
    %v7922 = vunpack.c.l.b16 %v7892
    %v7923 = vunpack.c.l.b16 %v7893
    %v7924 = vpack.c.b16 %v7917, %v7916
    %v7925 = vpack.c.b16 %v7919, %v7918
    %v7926 = vpack.c.b16 %v7921, %v7920
    %v7927 = vpack.c.b16 %v7923, %v7922
    %v7933 = vsel %vm6631, %v7907, 0
    %7935 = vmatprep.subr.bf16.mxu0 0
    %7936 = vmatpush1.bf16.msra.mxu0 0
    %7937 = vmatprep.subr.bf16.mxu0 0
    %7938 = vmatpush1.bf16.msra.mxu0 0
    %7939 = vmatprep.subr.bf16.mxu0 0
    %7940 = vmatpush1.bf16.msra.mxu0 0
    %7941 = vmatprep.subr.bf16.mxu0 0
    %7942 = vmatpush1.bf16.msra.mxu0 0
    %7943 = vmatprep.subr.bf16.mxu0 0
    %7944 = vmatpush1.bf16.msra.mxu0 %v7927
    %7945 = vmatprep.subr.bf16.mxu0 0
    %7946 = vmatpush1.bf16.msra.mxu0 %v7926
    %7947 = vmatprep.subr.bf16.mxu0 0
    %7948 = vmatpush1.bf16.msra.mxu0 %v7925
    %7949 = vmatprep.subr.bf16.mxu0 0
    %7950 = vmatpush1.bf16.msra.mxu0 %v7924
    %7951 = vmatprep.subr.bf16.mxu0 0
    %7952 = vmatpush2.bf16.msra.mxu0 0
    %7953 = vmatprep.subr.bf16.mxu0 0
    %7954 = vmatpush2.bf16.msra.mxu0 0
    %7955 = vmatprep.subr.bf16.mxu0 0
    %7956 = vmatpush2.bf16.msra.mxu0 0
    %7957 = vmatprep.subr.bf16.mxu0 0
    %7958 = vmatpush2.bf16.msra.mxu0 0
    %7959 = vmatprep.subr.bf16.mxu0 0
    %7960 = vmatpush2.bf16.msra.mxu0 0
    %7961 = vmatprep.subr.bf16.mxu0 0
    %7962 = vmatpush2.bf16.msra.mxu0 0
    %7963 = vmatprep.subr.bf16.mxu0 0
    %7964 = vmatpush2.bf16.msra.mxu0 0
    %7965 = vmatprep.subr.bf16.mxu0 0
    %7966 = vmatpush2.bf16.msra.mxu0 0
    %7967 = vmatprep.mubr.bf16.mxu0 0
    %7968 = vmatmul.mubr.bf16.gmra.mxu0 %v7933
    %v7969 = vpop.f32.mrf.mxu0
    %v7970 = vadd.f32 %v7899, %v7969
    %v7971 = vpop.f32.mrf.mxu0
    %v7972 = vpop.f32.mrf.mxu0
    %v7973 = vpop.f32.mrf.mxu0
    %7974 = vdwg.mxu0
    %v7975 = vmax.f32 %v7970, 0.0
    %v7976 = vpack.c.bf16 %v7975, %v7975
    %v7977 = vld [vmem:[%s9] sm:$0xf]
    %v7978 = vld [vmem:[%s9 + $0x4] sm:$0xf]
    %v7979 = vld [vmem:[%s10] sm:$0x1]
    %v7981 = vlaneseq
    %v7982 = vshrl.u32 %v7981, 7
    %v7983 = vsub.s32 0, %v7982
    %v7984 = vrot.slane %v7979, %v7983
    %v7988 = vunpack.c.l.b16 %v7977
    %v7989 = vunpack.c.l.b16 %v7978
    %v7990 = vpack.c.b16 %v7989, %v7988
    %v7993 = vsel %vm6592, %v7976, 0
    %7995 = vmatprep.subr.bf16.mxu0 0
    %7996 = vmatpush1.bf16.msra.mxu0 0
    %7997 = vmatprep.subr.bf16.mxu0 0
    %7998 = vmatpush1.bf16.msra.mxu0 0
    %7999 = vmatprep.subr.bf16.mxu0 0
    %8000 = vmatpush1.bf16.msra.mxu0 0
    %8001 = vmatprep.subr.bf16.mxu0 0
    %8002 = vmatpush1.bf16.msra.mxu0 0
    %8003 = vmatprep.subr.bf16.mxu0 0
    %8004 = vmatpush1.bf16.msra.mxu0 0
    %8005 = vmatprep.subr.bf16.mxu0 0
    %8006 = vmatpush1.bf16.msra.mxu0 0
    %8007 = vmatprep.subr.bf16.mxu0 0
    %8008 = vmatpush1.bf16.msra.mxu0 0
    %8009 = vmatprep.subr.bf16.mxu0 0
    %8010 = vmatpush1.bf16.msra.mxu0 %v7990
    %8011 = vmatprep.subr.bf16.mxu0 0
    %8012 = vmatpush2.bf16.msra.mxu0 0
    %8013 = vmatprep.subr.bf16.mxu0 0
    %8014 = vmatpush2.bf16.msra.mxu0 0
    %8015 = vmatprep.subr.bf16.mxu0 0
    %8016 = vmatpush2.bf16.msra.mxu0 0
    %8017 = vmatprep.subr.bf16.mxu0 0
    %8018 = vmatpush2.bf16.msra.mxu0 0
    %8019 = vmatprep.subr.bf16.mxu0 0
    %8020 = vmatpush2.bf16.msra.mxu0 0
    %8021 = vmatprep.subr.bf16.mxu0 0
    %8022 = vmatpush2.bf16.msra.mxu0 0
    %8023 = vmatprep.subr.bf16.mxu0 0
    %8024 = vmatpush2.bf16.msra.mxu0 0
    %8025 = vmatprep.subr.bf16.mxu0 0
    %8026 = vmatpush2.bf16.msra.mxu0 0
    %8027 = vmatprep.mubr.bf16.mxu0 0
    %8028 = vmatmul.mubr.bf16.gmra.mxu0 %v7993
    %v8029 = vpop.f32.mrf.mxu0
    %v8030 = vadd.f32 %v7984, %v8029
    %v8031 = vpop.f32.mrf.mxu0
    %v8032 = vpop.f32.mrf.mxu0
    %v8033 = vpop.f32.mrf.mxu0
    %8034 = vdwg.mxu0
    %vm8035 = vcmask 33792
    %v8036 = vsel %vm8035, %v8030, -inf
    %8037 = vmax.xlane.f32.xlu0 %v8036
    %v8038 = vpop.xlane.xlu0 %8037
    %v8039 = vsub.f32 %v8030, %v8038
    %v8040 = vmul.f32 %v8039, 1.442695
    %v8041 = vpow.pop %v8040
    %v8042 = vsel %vm8035, %v8041, 0.0
    %8043 = vadd.xlane.f32.xlu0 %v8042
    %v8044 = vpop.xlane.xlu0 %8043
    %v8045 = vlog2.pop %v8044
    %v8046 = vmul.f32 %v8045, 0.6931472
    %v8047 = vadd.f32 %v8038, %v8046
    %v8048 = vsub.f32 %v8030, %v8047
    %8049 = vst.msk [vmem:[#allocation2] sm:$0x3] %vm8035, %v8048
    // Predicated region
    $region46: #{tpu_custom_call.1} parent=1 // pred_check
      _
    $region47: #{tpu_custom_call.1} parent=1 // pred_check_branch
      %8051 = sbr.rel (0) target = $region49
    $region48: #{tpu_custom_call.1} parent=1 // pred_region
      %s8053 = ssub.s32 32, 32
      %8054 = vsyncadd [#allocation3], %s8053
      %s8056 = sshll.u32 [#allocation2], 4
      %s8057 = int_to_ptr.vmem [resolvable:$true] %s8056
      %8059 = dma.vmem_to_hbm [thread:$0]  %s8057, 32, %s11, [#allocation3]
    $region49: #{tpu_custom_call.1} parent=1 // pred_fallthru
      _
    // Predicated region
    $region50: #{tpu_custom_call.1} parent=1 // pred_check
      _
    $region51: #{tpu_custom_call.1} parent=1 // pred_check_branch
      %8061 = sbr.rel (0) target = $region53
    $region52: #{tpu_custom_call.1} parent=1 // pred_region
      %8062 = dma.done [#allocation3], 32
    $region53: #{tpu_custom_call.1} parent=1 // pred_fallthru
      _
    %8063 = vsyncpa [#allocation3], 1

</llo_original>
